<compile_context>
chip_gen: v5e
topology: v5e:2x2
jax: 0.10.0
libtpu: 0.0.40
codegen_flags: <defaults>
</compile_context>

<pallas_src>
import math
import jax
import jax.numpy as jnp
from jax import lax
from jax.experimental import pallas as pl
from jax.experimental.pallas import tpu as pltpu

# ---- model hyper-parameters (small, consistent with the module) ----
D_MODEL = 32
NHEAD = 4
NLAYER = 2
D_FFN = 64
NUM_ENTITY = 152      # entity_embed vocab (151 == padding label)
NUM_RELATION = 52     # relation_embed vocab (51 == padding relation)
MAX_NODES = 10        # node_encodings rows

HEAD_DIM = D_MODEL // NHEAD
NEG_INF = -1e30

WEIGHT_ORDER = ("wqk", "bqk", "wv", "bv", "wo", "bo",
                "ln1w", "ln1b", "ln2w", "ln2b", "w1", "b1", "w2", "b2")


def _layernorm(x, w, b, eps=1e-5):
    mu = jnp.mean(x, axis=-1, keepdims=True)
    var = jnp.mean((x - mu) ** 2, axis=-1, keepdims=True)
    return (x - mu) * jax.lax.rsqrt(var + eps) * w + b


def graph_encoder_kernel(labels_ref, subj_ref, obj_ref, rel_ref, bias_ref,
                         gcls_ref, ent_ref, relemb_ref, nenc_ref,
                         wqk_ref, bqk_ref, wv_ref, bv_ref, wo_ref, bo_ref,
                         ln1w_ref, ln1b_ref, ln2w_ref, ln2b_ref,
                         w1_ref, b1_ref, w2_ref, b2_ref,
                         out_ref, pos_out_ref):
    """Embedding build + full NLAYER-deep encoder for one batch tile, fully fused."""
    bt, N, _ = labels_ref.shape
    E = subj_ref.shape[1]
    scale = 1.0 / math.sqrt(HEAD_DIM)

    ent_tab = ent_ref[...]        # (152, D) f32
    rel_tab = relemb_ref[...]     # (52,  D) f32
    nenc_tab = nenc_ref[...]      # (10,  D) f32
    gcls = gcls_ref[...]          # (1,   D) f32

    for b in range(bt):                                  # static batch loop
        # ---- fused embedding gathers: one-hot matmuls on the MXU (exact) ----
        oh_n = (labels_ref[b] ==
                lax.broadcasted_iota(jnp.int32, (N, NUM_ENTITY), 1)).astype(jnp.float32)
        nodes = jnp.dot(oh_n, ent_tab, preferred_element_type=jnp.float32)     # (N, D)

        oh_r = (rel_ref[b] ==
                lax.broadcasted_iota(jnp.int32, (E, NUM_RELATION), 1)).astype(jnp.float32)
        edges = jnp.dot(oh_r, rel_tab, preferred_element_type=jnp.float32)     # (E, D)

        oh_s = (subj_ref[b] ==
                lax.broadcasted_iota(jnp.int32, (E, MAX_NODES), 1)).astype(jnp.float32)
        oh_o = (obj_ref[b] ==
                lax.broadcasted_iota(jnp.int32, (E, MAX_NODES), 1)).astype(jnp.float32)
        edges_enc = jnp.dot(oh_s - oh_o, nenc_tab,
                            preferred_element_type=jnp.float32)                # (E, D)

        # src / pos assembled in-register; pos is also a kernel output
        x = jnp.concatenate([gcls, nodes, edges], axis=0)                      # (S, D)
        pos_b = jnp.concatenate(
            [jnp.zeros((1, D_MODEL), jnp.float32), nenc_tab[:N], edges_enc], axis=0)
        pos_out_ref[b] = pos_b

        bias = bias_ref[b]                                # (1, S) additive key-pad bias

        for l in range(NLAYER):                           # static unroll (NLAYER=2)
            # q = k = src + pos; value = src.  pos re-read from VMEM (cheap vld,
            # keeps vreg pressure down across the 2-layer unroll).
            qk_in = (x + pos_out_ref[b]).astype(jnp.bfloat16)
            qk = jnp.dot(qk_in, wqk_ref[l],
                         preferred_element_type=jnp.float32) + bqk_ref[l]      # (S, 2D)
            v = jnp.dot(x.astype(jnp.bfloat16), wv_ref[l],
                        preferred_element_type=jnp.float32) + bv_ref[l]        # (S, D)

            qb = qk[:, :D_MODEL]
            kbT = qk[:, D_MODEL:].T       # single hoisted transpose per (layer, batch)

            head_outs = []
            for h in range(NHEAD):                        # static head loop
                cs = slice(h * HEAD_DIM, (h + 1) * HEAD_DIM)
                logits = (jnp.dot(qb[:, cs].astype(jnp.bfloat16),
                                  kbT[cs, :].astype(jnp.bfloat16),
                                  preferred_element_type=jnp.float32) * scale
                          + bias)                                             # (S, S)
                m = jnp.max(logits, axis=-1, keepdims=True)
                e = jnp.exp(logits - m)
                p = e * pl.reciprocal(jnp.sum(e, axis=-1, keepdims=True), approx=True)
                head_outs.append(
                    jnp.dot(p.astype(jnp.bfloat16), v[:, cs].astype(jnp.bfloat16),
                            preferred_element_type=jnp.float32))              # (S, hd)

            # heads concatenated in vregs; one full-width output projection
            attn = jnp.dot(jnp.concatenate(head_outs, axis=-1).astype(jnp.bfloat16),
                           wo_ref[l], preferred_element_type=jnp.float32) + bo_ref[l]

            # residual + norm1
            x = _layernorm(x + attn, ln1w_ref[l], ln1b_ref[l])

            # FFN (ReLU) + residual + norm2
            h1 = jnp.maximum(
                jnp.dot(x.astype(jnp.bfloat16), w1_ref[l],
                        preferred_element_type=jnp.float32) + b1_ref[l], 0.0)
            h2 = jnp.dot(h1.astype(jnp.bfloat16), w2_ref[l],
                         preferred_element_type=jnp.float32) + b2_ref[l]
            x = _layernorm(x + h2, ln2w_ref[l], ln2b_ref[l])

        out_ref[b] = x.astype(out_ref.dtype)


def run_graph_encoder(labels, subj, obj, rel, bias, graph_cls, entity_embed,
                      relation_embed, node_encodings, stack, *, b_tile=None):
    """labels/subj/obj/rel: (B,N,1)/(B,E,1) int32, bias: (B,1,S) f32 additive
    key-padding mask, tables: f32, stack: (NLAYER, ...) stacked layer weights.
    Single pallas_call returning (output, pos), both (B, S, D)."""
    B, N, _ = labels.shape
    E = subj.shape[1]
    S = 1 + N + E

    # Review: workload is launch/latency-bound.  A multi-step grid is a serial
    # loop on single-TC v5e/v6e, and at B~2 there is too little per-core work to
    # amortize a 2-step split even on v7x -> default to a single grid step.
    if b_tile is None:
        b_tile = B
    assert B % b_tile == 0
    grid = (B // b_tile,)

    def batch_spec(a):
        return pl.BlockSpec((b_tile,) + a.shape[1:],
                            lambda i, _nd=a.ndim: (i,) + (0,) * (_nd - 1))

    def full_spec(a):
        return pl.BlockSpec(a.shape, lambda i, _nd=a.ndim: (0,) * _nd)

    weights = [stack[n] for n in WEIGHT_ORDER]
    batch_in = [labels, subj, obj, rel, bias]
    shared_in = [graph_cls, entity_embed, relation_embed, node_encodings] + weights

    out_spec = pl.BlockSpec((b_tile, S, D_MODEL), lambda i: (i, 0, 0))
    out_shape = (jax.ShapeDtypeStruct((B, S, D_MODEL), jnp.float32),   # encoder output
                 jax.ShapeDtypeStruct((B, S, D_MODEL), jnp.float32))   # pos

    return pl.pallas_call(
        graph_encoder_kernel,
        out_shape=out_shape,
        grid_spec=pltpu.PrefetchScalarGridSpec(
            num_scalar_prefetch=0,
            grid=grid,
            in_specs=[batch_spec(a) for a in batch_in]
                    + [full_spec(a) for a in shared_in],
            out_specs=(out_spec, out_spec),
        ),
        compiler_params=pltpu.CompilerParams(dimension_semantics=("parallel",)),
    )(*(batch_in + shared_in))


# ---------------- parameter construction (deterministic) ----------------
def xavier(key, shape):
    fan_in, fan_out = shape[0], shape[1]
    a = math.sqrt(6.0 / (fan_in + fan_out))
    return jax.random.uniform(key, shape, jnp.float32, -a, a)


def init_params(key):
    keys = jax.random.split(key, 8 + NLAYER * 8)
    p = {}
    # GraphEncoder-level params (>1-dim params xavier-init, as in _reset_parameters)
    p["graph_cls"] = xavier(keys[0], (1, D_MODEL))
    p["entity_embed"] = xavier(keys[1], (NUM_ENTITY, D_MODEL))
    p["relation_embed"] = xavier(keys[2], (NUM_RELATION, D_MODEL))
    p["node_encodings"] = xavier(keys[3], (MAX_NODES, D_MODEL))

    layers = []
    ki = 8
    for _ in range(NLAYER):
        lk = keys[ki:ki + 8]
        ki += 8
        in_proj = xavier(lk[0], (3 * D_MODEL, D_MODEL))   # torch in_proj_weight
        # torch Linear: y = x @ W.T + b -> store transposed as [in, out]
        wq = in_proj[0 * D_MODEL:1 * D_MODEL].T
        wk = in_proj[1 * D_MODEL:2 * D_MODEL].T
        wv = in_proj[2 * D_MODEL:3 * D_MODEL].T
        lp = {
            # MXU-facing weights in bf16 (f32 accumulation at the dots)
            "wqk": jnp.concatenate([wq, wk], axis=1).astype(jnp.bfloat16),  # (D, 2D)
            "bqk": jnp.zeros((1, 2 * D_MODEL), jnp.float32),
            "wv": wv.astype(jnp.bfloat16),
            "bv": jnp.zeros((1, D_MODEL), jnp.float32),
            "wo": xavier(lk[1], (D_MODEL, D_MODEL)).T.astype(jnp.bfloat16),
            "bo": jnp.zeros((1, D_MODEL), jnp.float32),
            "ln1w": jnp.ones((1, D_MODEL), jnp.float32),
            "ln1b": jnp.zeros((1, D_MODEL), jnp.float32),
            "ln2w": jnp.ones((1, D_MODEL), jnp.float32),
            "ln2b": jnp.zeros((1, D_MODEL), jnp.float32),
            "w1": xavier(lk[2], (D_FFN, D_MODEL)).T.astype(jnp.bfloat16),
            "b1": jnp.zeros((1, D_FFN), jnp.float32),
            "w2": xavier(lk[3], (D_MODEL, D_FFN)).T.astype(jnp.bfloat16),
            "b2": jnp.zeros((1, D_MODEL), jnp.float32),
        }
        layers.append(lp)
    # stack per-layer weights -> (NLAYER, ...) so the kernel indexes layer l statically
    p["layer_stack"] = {n: jnp.stack([lp[n] for lp in layers], axis=0)
                        for n in WEIGHT_ORDER}
    return p


# ------------- GraphEncoder forward (mask/bias in JAX, everything else fused) -------------
def graph_encoder_forward(params, labels, rel_annotations):
    """labels: (B, N) int32; rel_annotations: (B, E, 3) int32.
    Returns (output (B,S,D), mask (B,S) bool, pos (B,S,D)) with S = 1 + N + E."""
    B, N = labels.shape
    E = rel_annotations.shape[1]

    # mask is a required module output, so it stays in XLA (2 compares + concat);
    # the additive key-padding bias is one jnp.where on it.
    rel_lab = rel_annotations[:, :, 2]
    nodes_mask = labels == (NUM_ENTITY - 1)
    edges_mask = rel_lab == (NUM_RELATION - 1)
    graph_mask = jnp.zeros((B, 1), dtype=bool)
    mask = jnp.concatenate([graph_mask, nodes_mask, edges_mask], axis=1)      # (B, S)
    bias = jnp.where(mask, NEG_INF, 0.0).astype(jnp.float32)[:, None, :]      # (B, 1, S)

    # index tensors, sublane-oriented (last dim 1) for in-kernel one-hot builds
    labels_c = labels.astype(jnp.int32)[..., None]                            # (B, N, 1)
    subj_c = rel_annotations[:, :, 0].astype(jnp.int32)[..., None]            # (B, E, 1)
    obj_c = rel_annotations[:, :, 1].astype(jnp.int32)[..., None]             # (B, E, 1)
    rel_c = rel_lab.astype(jnp.int32)[..., None]                              # (B, E, 1)

    # single fused pallas_call: embedding gathers + concat + all NLAYER layers
    output, pos = run_graph_encoder(
        labels_c, subj_c, obj_c, rel_c, bias,
        params["graph_cls"], params["entity_embed"],
        params["relation_embed"], params["node_encodings"],
        params["layer_stack"])

    return output, mask, pos


if __name__ == "__main__":
    # node_bbox=False path (the default); no box_embedd branch.
    # TODO(synk): node_bbox=True path (Linear+BatchNorm1d box embedding) not implemented.
    key = jax.random.PRNGKey(0)
    pkey, dkey1, dkey2, dkey3 = jax.random.split(key, 4)
    params = init_params(pkey)

    B, N, E = 2, MAX_NODES, 8            # sequence length S = 1 + 10 + 8 = 19
    labels = jax.random.randint(dkey1, (B, N), 0, NUM_ENTITY, dtype=jnp.int32)
    labels = labels.at[:, -2:].set(NUM_ENTITY - 1)        # some padded nodes
    subj = jax.random.randint(dkey2, (B, E), 0, N, dtype=jnp.int32)
    obj = (subj + 1) % N
    rel = jax.random.randint(dkey3, (B, E), 0, NUM_RELATION, dtype=jnp.int32)
    rel = rel.at[:, -2:].set(NUM_RELATION - 1)            # some padded edges
    rel_annotations = jnp.stack([subj, obj, rel], axis=-1)  # (B, E, 3)

    output, mask, pos = graph_encoder_forward(params, labels, rel_annotations)
    jax.block_until_ready(output)
    jax.block_until_ready(mask)
    jax.block_until_ready(pos)

    S = 1 + N + E
    assert output.shape == (B, S, D_MODEL)
    assert mask.shape == (B, S)
    assert pos.shape == (B, S, D_MODEL)
    assert bool(jnp.all(jnp.isfinite(output)))
    assert bool(jnp.all(jnp.isfinite(pos)))
    print("KERNEL_OK")
</pallas_src>

<mosaic_0001>
module attributes {stable_mosaic.version = 11 : i64} {
  func.func @graph_encoder_kernel(%arg0: i32, %arg1: memref<2x10x1xi32, #tpu.memory_space<vmem>>, %arg2: memref<2x8x1xi32, #tpu.memory_space<vmem>>, %arg3: memref<2x8x1xi32, #tpu.memory_space<vmem>>, %arg4: memref<2x8x1xi32, #tpu.memory_space<vmem>>, %arg5: memref<2x1x19xf32, #tpu.memory_space<vmem>>, %arg6: memref<1x32xf32, #tpu.memory_space<vmem>>, %arg7: memref<152x32xf32, #tpu.memory_space<vmem>>, %arg8: memref<52x32xf32, #tpu.memory_space<vmem>>, %arg9: memref<10x32xf32, #tpu.memory_space<vmem>>, %arg10: memref<2x32x64xbf16, #tpu.memory_space<vmem>>, %arg11: memref<2x1x64xf32, #tpu.memory_space<vmem>>, %arg12: memref<2x32x32xbf16, #tpu.memory_space<vmem>>, %arg13: memref<2x1x32xf32, #tpu.memory_space<vmem>>, %arg14: memref<2x32x32xbf16, #tpu.memory_space<vmem>>, %arg15: memref<2x1x32xf32, #tpu.memory_space<vmem>>, %arg16: memref<2x1x32xf32, #tpu.memory_space<vmem>>, %arg17: memref<2x1x32xf32, #tpu.memory_space<vmem>>, %arg18: memref<2x1x32xf32, #tpu.memory_space<vmem>>, %arg19: memref<2x1x32xf32, #tpu.memory_space<vmem>>, %arg20: memref<2x32x64xbf16, #tpu.memory_space<vmem>>, %arg21: memref<2x1x64xf32, #tpu.memory_space<vmem>>, %arg22: memref<2x64x32xbf16, #tpu.memory_space<vmem>>, %arg23: memref<2x1x32xf32, #tpu.memory_space<vmem>>, %arg24: memref<2x19x32xf32, #tpu.memory_space<vmem>>, %arg25: memref<2x19x32xf32, #tpu.memory_space<vmem>>) attributes {dimension_semantics = [#tpu.dimension_semantics<parallel>], iteration_bounds = array<i64: 1>, scalar_prefetch = 0 : i64, scratch_operands = 0 : i64, tpu.core_type = #tpu.core_type<tc>, window_params = [{transform_indices = @transform_0, window_bounds = array<i64: 2, 10, 1>}, {transform_indices = @transform_1, window_bounds = array<i64: 2, 8, 1>}, {transform_indices = @transform_2, window_bounds = array<i64: 2, 8, 1>}, {transform_indices = @transform_3, window_bounds = array<i64: 2, 8, 1>}, {transform_indices = @transform_4, window_bounds = array<i64: 2, 1, 19>}, {pipeline_mode = #tpu.pipeline_mode<synchronous>, transform_indices = @transform_5, window_bounds = array<i64: 1, 32>}, {pipeline_mode = #tpu.pipeline_mode<synchronous>, transform_indices = @transform_6, window_bounds = array<i64: 152, 32>}, {pipeline_mode = #tpu.pipeline_mode<synchronous>, transform_indices = @transform_7, window_bounds = array<i64: 52, 32>}, {pipeline_mode = #tpu.pipeline_mode<synchronous>, transform_indices = @transform_8, window_bounds = array<i64: 10, 32>}, {pipeline_mode = #tpu.pipeline_mode<synchronous>, transform_indices = @transform_9, window_bounds = array<i64: 2, 32, 64>}, {pipeline_mode = #tpu.pipeline_mode<synchronous>, transform_indices = @transform_10, window_bounds = array<i64: 2, 1, 64>}, {pipeline_mode = #tpu.pipeline_mode<synchronous>, transform_indices = @transform_11, window_bounds = array<i64: 2, 32, 32>}, {pipeline_mode = #tpu.pipeline_mode<synchronous>, transform_indices = @transform_12, window_bounds = array<i64: 2, 1, 32>}, {pipeline_mode = #tpu.pipeline_mode<synchronous>, transform_indices = @transform_13, window_bounds = array<i64: 2, 32, 32>}, {pipeline_mode = #tpu.pipeline_mode<synchronous>, transform_indices = @transform_14, window_bounds = array<i64: 2, 1, 32>}, {pipeline_mode = #tpu.pipeline_mode<synchronous>, transform_indices = @transform_15, window_bounds = array<i64: 2, 1, 32>}, {pipeline_mode = #tpu.pipeline_mode<synchronous>, transform_indices = @transform_16, window_bounds = array<i64: 2, 1, 32>}, {pipeline_mode = #tpu.pipeline_mode<synchronous>, transform_indices = @transform_17, window_bounds = array<i64: 2, 1, 32>}, {pipeline_mode = #tpu.pipeline_mode<synchronous>, transform_indices = @transform_18, window_bounds = array<i64: 2, 1, 32>}, {pipeline_mode = #tpu.pipeline_mode<synchronous>, transform_indices = @transform_19, window_bounds = array<i64: 2, 32, 64>}, {pipeline_mode = #tpu.pipeline_mode<synchronous>, transform_indices = @transform_20, window_bounds = array<i64: 2, 1, 64>}, {pipeline_mode = #tpu.pipeline_mode<synchronous>, transform_indices = @transform_21, window_bounds = array<i64: 2, 64, 32>}, {pipeline_mode = #tpu.pipeline_mode<synchronous>, transform_indices = @transform_22, window_bounds = array<i64: 2, 1, 32>}, {transform_indices = @transform_23, window_bounds = array<i64: 2, 19, 32>}, {transform_indices = @transform_24, window_bounds = array<i64: 2, 19, 32>}]} {
    %c0 = arith.constant 0 : index
    %c0_0 = arith.constant 0 : index
    %0 = vector.load %arg7[%c0, %c0_0] : memref<152x32xf32, #tpu.memory_space<vmem>>, vector<152x32xf32>
    %c0_1 = arith.constant 0 : index
    %c0_2 = arith.constant 0 : index
    %1 = vector.load %arg8[%c0_1, %c0_2] : memref<52x32xf32, #tpu.memory_space<vmem>>, vector<52x32xf32>
    %c0_3 = arith.constant 0 : index
    %c0_4 = arith.constant 0 : index
    %2 = vector.load %arg9[%c0_3, %c0_4] : memref<10x32xf32, #tpu.memory_space<vmem>>, vector<10x32xf32>
    %c0_5 = arith.constant 0 : index
    %c0_6 = arith.constant 0 : index
    %3 = vector.load %arg6[%c0_5, %c0_6] : memref<1x32xf32, #tpu.memory_space<vmem>>, vector<1x32xf32>
    %c0_7 = arith.constant 0 : index
    %c0_8 = arith.constant 0 : index
    %c0_9 = arith.constant 0 : index
    %4 = vector.load %arg1[%c0_7, %c0_8, %c0_9] : memref<2x10x1xi32, #tpu.memory_space<vmem>>, vector<1x10x1xi32>
    %5 = vector.shape_cast %4 : vector<1x10x1xi32> to vector<10x1xi32>
    %6 = tpu.iota {dimensions = array<i32: 1>} : vector<10x152xi32>
    %7 = vector.broadcast %5 : vector<10x1xi32> to vector<10x152xi32>
    %8 = arith.cmpi eq, %7, %6 : vector<10x152xi32>
    %9 = arith.extui %8 : vector<10x152xi1> to vector<10x152xi32>
    %10 = arith.sitofp %9 : vector<10x152xi32> to vector<10x152xf32>
    %cst = arith.constant dense<0.000000e+00> : vector<10x32xf32>
    %11 = tpu.matmul %10, %0, %cst {dimension_numbers = #tpu.dot_dimension_numbers<[1], [0], [0], [1], [0, 0, 1, 1], [], []>} : vector<10x152xf32>, vector<152x32xf32>, vector<10x32xf32> -> vector<10x32xf32>
    %c0_10 = arith.constant 0 : index
    %c0_11 = arith.constant 0 : index
    %c0_12 = arith.constant 0 : index
    %12 = vector.load %arg4[%c0_10, %c0_11, %c0_12] : memref<2x8x1xi32, #tpu.memory_space<vmem>>, vector<1x8x1xi32>
    %13 = vector.shape_cast %12 : vector<1x8x1xi32> to vector<8x1xi32>
    %14 = tpu.iota {dimensions = array<i32: 1>} : vector<8x52xi32>
    %15 = vector.broadcast %13 : vector<8x1xi32> to vector<8x52xi32>
    %16 = arith.cmpi eq, %15, %14 : vector<8x52xi32>
    %17 = arith.extui %16 : vector<8x52xi1> to vector<8x52xi32>
    %18 = arith.sitofp %17 : vector<8x52xi32> to vector<8x52xf32>
    %cst_13 = arith.constant dense<0.000000e+00> : vector<8x32xf32>
    %19 = tpu.matmul %18, %1, %cst_13 {dimension_numbers = #tpu.dot_dimension_numbers<[1], [0], [0], [1], [0, 0, 1, 1], [], []>} : vector<8x52xf32>, vector<52x32xf32>, vector<8x32xf32> -> vector<8x32xf32>
    %c0_14 = arith.constant 0 : index
    %c0_15 = arith.constant 0 : index
    %c0_16 = arith.constant 0 : index
    %20 = vector.load %arg2[%c0_14, %c0_15, %c0_16] : memref<2x8x1xi32, #tpu.memory_space<vmem>>, vector<1x8x1xi32>
    %21 = vector.shape_cast %20 : vector<1x8x1xi32> to vector<8x1xi32>
    %22 = tpu.iota {dimensions = array<i32: 1>} : vector<8x10xi32>
    %23 = vector.broadcast %21 : vector<8x1xi32> to vector<8x10xi32>
    %24 = arith.cmpi eq, %23, %22 : vector<8x10xi32>
    %25 = arith.extui %24 : vector<8x10xi1> to vector<8x10xi32>
    %26 = arith.sitofp %25 : vector<8x10xi32> to vector<8x10xf32>
    %c0_17 = arith.constant 0 : index
    %c0_18 = arith.constant 0 : index
    %c0_19 = arith.constant 0 : index
    %27 = vector.load %arg3[%c0_17, %c0_18, %c0_19] : memref<2x8x1xi32, #tpu.memory_space<vmem>>, vector<1x8x1xi32>
    %28 = vector.shape_cast %27 : vector<1x8x1xi32> to vector<8x1xi32>
    %29 = tpu.iota {dimensions = array<i32: 1>} : vector<8x10xi32>
    %30 = vector.broadcast %28 : vector<8x1xi32> to vector<8x10xi32>
    %31 = arith.cmpi eq, %30, %29 : vector<8x10xi32>
    %32 = arith.extui %31 : vector<8x10xi1> to vector<8x10xi32>
    %33 = arith.sitofp %32 : vector<8x10xi32> to vector<8x10xf32>
    %34 = arith.subf %26, %33 : vector<8x10xf32>
    %cst_20 = arith.constant dense<0.000000e+00> : vector<8x32xf32>
    %35 = tpu.matmul %34, %2, %cst_20 {dimension_numbers = #tpu.dot_dimension_numbers<[1], [0], [0], [1], [0, 0, 1, 1], [], []>} : vector<8x10xf32>, vector<10x32xf32>, vector<8x32xf32> -> vector<8x32xf32>
    %36 = tpu.concatenate %3, %11, %19 in 0 : vector<1x32xf32>, vector<10x32xf32>, vector<8x32xf32> -> vector<19x32xf32>
    %cst_21 = arith.constant 0.000000e+00 : f32
    %37 = vector.broadcast %cst_21 : f32 to vector<1x32xf32>
    %38 = tpu.concatenate %37, %2, %35 in 0 : vector<1x32xf32>, vector<10x32xf32>, vector<8x32xf32> -> vector<19x32xf32>
    %c0_22 = arith.constant 0 : index
    %c0_23 = arith.constant 0 : index
    %c0_24 = arith.constant 0 : index
    %39 = vector.load %arg25[%c0_22, %c0_23, %c0_24] : memref<2x19x32xf32, #tpu.memory_space<vmem>>, vector<1x19x32xf32>
    %40 = vector.shape_cast %39 : vector<1x19x32xf32> to vector<19x32xf32>
    %41 = vector.shape_cast %38 : vector<19x32xf32> to vector<1x19x32xf32>
    tpu.vector_store %arg25[%c0_22, %c0_23, %c0_24], %41 {strides = array<i32>} : memref<2x19x32xf32, #tpu.memory_space<vmem>>, vector<1x19x32xf32>,
    %c0_25 = arith.constant 0 : index
    %c0_26 = arith.constant 0 : index
    %c0_27 = arith.constant 0 : index
    %42 = vector.load %arg5[%c0_25, %c0_26, %c0_27] : memref<2x1x19xf32, #tpu.memory_space<vmem>>, vector<1x1x19xf32>
    %43 = vector.shape_cast %42 : vector<1x1x19xf32> to vector<1x19xf32>
    %c0_28 = arith.constant 0 : index
    %c0_29 = arith.constant 0 : index
    %c0_30 = arith.constant 0 : index
    %44 = vector.load %arg25[%c0_28, %c0_29, %c0_30] : memref<2x19x32xf32, #tpu.memory_space<vmem>>, vector<1x19x32xf32>
    %45 = vector.shape_cast %44 : vector<1x19x32xf32> to vector<19x32xf32>
    %46 = arith.addf %36, %45 : vector<19x32xf32>
    %47 = arith.truncf %46 : vector<19x32xf32> to vector<19x32xbf16>
    %c0_31 = arith.constant 0 : index
    %c0_32 = arith.constant 0 : index
    %c0_33 = arith.constant 0 : index
    %48 = vector.load %arg10[%c0_31, %c0_32, %c0_33] : memref<2x32x64xbf16, #tpu.memory_space<vmem>>, vector<1x32x64xbf16>
    %49 = vector.shape_cast %48 : vector<1x32x64xbf16> to vector<32x64xbf16>
    %cst_34 = arith.constant dense<0.000000e+00> : vector<19x64xf32>
    %50 = tpu.matmul %47, %49, %cst_34 {dimension_numbers = #tpu.dot_dimension_numbers<[1], [0], [0], [1], [0, 0, 1, 1], [], []>} : vector<19x32xbf16>, vector<32x64xbf16>, vector<19x64xf32> -> vector<19x64xf32>
    %c0_35 = arith.constant 0 : index
    %c0_36 = arith.constant 0 : index
    %c0_37 = arith.constant 0 : index
    %51 = vector.load %arg11[%c0_35, %c0_36, %c0_37] : memref<2x1x64xf32, #tpu.memory_space<vmem>>, vector<1x1x64xf32>
    %52 = vector.shape_cast %51 : vector<1x1x64xf32> to vector<1x64xf32>
    %53 = vector.broadcast %52 : vector<1x64xf32> to vector<19x64xf32>
    %54 = arith.addf %50, %53 : vector<19x64xf32>
    %55 = arith.truncf %36 : vector<19x32xf32> to vector<19x32xbf16>
    %c0_38 = arith.constant 0 : index
    %c0_39 = arith.constant 0 : index
    %c0_40 = arith.constant 0 : index
    %56 = vector.load %arg12[%c0_38, %c0_39, %c0_40] : memref<2x32x32xbf16, #tpu.memory_space<vmem>>, vector<1x32x32xbf16>
    %57 = vector.shape_cast %56 : vector<1x32x32xbf16> to vector<32x32xbf16>
    %cst_41 = arith.constant dense<0.000000e+00> : vector<19x32xf32>
    %58 = tpu.matmul %55, %57, %cst_41 {dimension_numbers = #tpu.dot_dimension_numbers<[1], [0], [0], [1], [0, 0, 1, 1], [], []>} : vector<19x32xbf16>, vector<32x32xbf16>, vector<19x32xf32> -> vector<19x32xf32>
    %c0_42 = arith.constant 0 : index
    %c0_43 = arith.constant 0 : index
    %c0_44 = arith.constant 0 : index
    %59 = vector.load %arg13[%c0_42, %c0_43, %c0_44] : memref<2x1x32xf32, #tpu.memory_space<vmem>>, vector<1x1x32xf32>
    %60 = vector.shape_cast %59 : vector<1x1x32xf32> to vector<1x32xf32>
    %61 = vector.broadcast %60 : vector<1x32xf32> to vector<19x32xf32>
    %62 = arith.addf %58, %61 : vector<19x32xf32>
    %63 = vector.extract_strided_slice %54 {offsets = [0, 0], sizes = [19, 32], strides = [1, 1]} : vector<19x64xf32> to vector<19x32xf32>
    %64 = vector.extract_strided_slice %54 {offsets = [0, 32], sizes = [19, 32], strides = [1, 1]} : vector<19x64xf32> to vector<19x32xf32>
    %65 = tpu.transpose %64, [1, 0] : vector<19x32xf32> -> vector<32x19xf32>
    %66 = vector.extract_strided_slice %63 {offsets = [0, 0], sizes = [19, 8], strides = [1, 1]} : vector<19x32xf32> to vector<19x8xf32>
    %67 = arith.truncf %66 : vector<19x8xf32> to vector<19x8xbf16>
    %68 = vector.extract_strided_slice %65 {offsets = [0, 0], sizes = [8, 19], strides = [1, 1]} : vector<32x19xf32> to vector<8x19xf32>
    %69 = arith.truncf %68 : vector<8x19xf32> to vector<8x19xbf16>
    %cst_45 = arith.constant dense<0.000000e+00> : vector<19x19xf32>
    %70 = tpu.matmul %67, %69, %cst_45 {dimension_numbers = #tpu.dot_dimension_numbers<[1], [0], [0], [1], [0, 0, 1, 1], [], []>} : vector<19x8xbf16>, vector<8x19xbf16>, vector<19x19xf32> -> vector<19x19xf32>
    %cst_46 = arith.constant 0.353553385 : f32
    %71 = vector.broadcast %cst_46 : f32 to vector<19x19xf32>
    %72 = arith.mulf %70, %71 : vector<19x19xf32>
    %73 = vector.broadcast %43 : vector<1x19xf32> to vector<19x19xf32>
    %74 = arith.addf %72, %73 : vector<19x19xf32>
    %cst_47 = arith.constant dense<0xFF800000> : vector<19xf32>
    %75 = vector.multi_reduction <maximumf>, %74, %cst_47 [1] : vector<19x19xf32> to vector<19xf32>
    %76 = vector.shape_cast %75 : vector<19xf32> to vector<19x1xf32>
    %77 = vector.broadcast %76 : vector<19x1xf32> to vector<19x19xf32>
    %78 = arith.subf %74, %77 : vector<19x19xf32>
    %79 = math.exp %78 : vector<19x19xf32>
    %cst_48 = arith.constant dense<0.000000e+00> : vector<19xf32>
    %80 = vector.multi_reduction <add>, %79, %cst_48 [1] : vector<19x19xf32> to vector<19xf32>
    %81 = vector.shape_cast %80 : vector<19xf32> to vector<19x1xf32>
    %82 = tpu.reciprocal %81 {approx = true} : vector<19x1xf32> -> vector<19x1xf32>
    %83 = vector.broadcast %82 : vector<19x1xf32> to vector<19x19xf32>
    %84 = arith.mulf %79, %83 : vector<19x19xf32>
    %85 = arith.truncf %84 : vector<19x19xf32> to vector<19x19xbf16>
    %86 = vector.extract_strided_slice %62 {offsets = [0, 0], sizes = [19, 8], strides = [1, 1]} : vector<19x32xf32> to vector<19x8xf32>
    %87 = arith.truncf %86 : vector<19x8xf32> to vector<19x8xbf16>
    %cst_49 = arith.constant dense<0.000000e+00> : vector<19x8xf32>
    %88 = tpu.matmul %85, %87, %cst_49 {dimension_numbers = #tpu.dot_dimension_numbers<[1], [0], [0], [1], [0, 0, 1, 1], [], []>} : vector<19x19xbf16>, vector<19x8xbf16>, vector<19x8xf32> -> vector<19x8xf32>
    %89 = vector.extract_strided_slice %63 {offsets = [0, 8], sizes = [19, 8], strides = [1, 1]} : vector<19x32xf32> to vector<19x8xf32>
    %90 = arith.truncf %89 : vector<19x8xf32> to vector<19x8xbf16>
    %91 = vector.extract_strided_slice %65 {offsets = [8, 0], sizes = [8, 19], strides = [1, 1]} : vector<32x19xf32> to vector<8x19xf32>
    %92 = arith.truncf %91 : vector<8x19xf32> to vector<8x19xbf16>
    %cst_50 = arith.constant dense<0.000000e+00> : vector<19x19xf32>
    %93 = tpu.matmul %90, %92, %cst_50 {dimension_numbers = #tpu.dot_dimension_numbers<[1], [0], [0], [1], [0, 0, 1, 1], [], []>} : vector<19x8xbf16>, vector<8x19xbf16>, vector<19x19xf32> -> vector<19x19xf32>
    %cst_51 = arith.constant 0.353553385 : f32
    %94 = vector.broadcast %cst_51 : f32 to vector<19x19xf32>
    %95 = arith.mulf %93, %94 : vector<19x19xf32>
    %96 = vector.broadcast %43 : vector<1x19xf32> to vector<19x19xf32>
    %97 = arith.addf %95, %96 : vector<19x19xf32>
    %cst_52 = arith.constant dense<0xFF800000> : vector<19xf32>
    %98 = vector.multi_reduction <maximumf>, %97, %cst_52 [1] : vector<19x19xf32> to vector<19xf32>
    %99 = vector.shape_cast %98 : vector<19xf32> to vector<19x1xf32>
    %100 = vector.broadcast %99 : vector<19x1xf32> to vector<19x19xf32>
    %101 = arith.subf %97, %100 : vector<19x19xf32>
    %102 = math.exp %101 : vector<19x19xf32>
    %cst_53 = arith.constant dense<0.000000e+00> : vector<19xf32>
    %103 = vector.multi_reduction <add>, %102, %cst_53 [1] : vector<19x19xf32> to vector<19xf32>
    %104 = vector.shape_cast %103 : vector<19xf32> to vector<19x1xf32>
    %105 = tpu.reciprocal %104 {approx = true} : vector<19x1xf32> -> vector<19x1xf32>
    %106 = vector.broadcast %105 : vector<19x1xf32> to vector<19x19xf32>
    %107 = arith.mulf %102, %106 : vector<19x19xf32>
    %108 = arith.truncf %107 : vector<19x19xf32> to vector<19x19xbf16>
    %109 = vector.extract_strided_slice %62 {offsets = [0, 8], sizes = [19, 8], strides = [1, 1]} : vector<19x32xf32> to vector<19x8xf32>
    %110 = arith.truncf %109 : vector<19x8xf32> to vector<19x8xbf16>
    %cst_54 = arith.constant dense<0.000000e+00> : vector<19x8xf32>
    %111 = tpu.matmul %108, %110, %cst_54 {dimension_numbers = #tpu.dot_dimension_numbers<[1], [0], [0], [1], [0, 0, 1, 1], [], []>} : vector<19x19xbf16>, vector<19x8xbf16>, vector<19x8xf32> -> vector<19x8xf32>
    %112 = vector.extract_strided_slice %63 {offsets = [0, 16], sizes = [19, 8], strides = [1, 1]} : vector<19x32xf32> to vector<19x8xf32>
    %113 = arith.truncf %112 : vector<19x8xf32> to vector<19x8xbf16>
    %114 = vector.extract_strided_slice %65 {offsets = [16, 0], sizes = [8, 19], strides = [1, 1]} : vector<32x19xf32> to vector<8x19xf32>
    %115 = arith.truncf %114 : vector<8x19xf32> to vector<8x19xbf16>
    %cst_55 = arith.constant dense<0.000000e+00> : vector<19x19xf32>
    %116 = tpu.matmul %113, %115, %cst_55 {dimension_numbers = #tpu.dot_dimension_numbers<[1], [0], [0], [1], [0, 0, 1, 1], [], []>} : vector<19x8xbf16>, vector<8x19xbf16>, vector<19x19xf32> -> vector<19x19xf32>
    %cst_56 = arith.constant 0.353553385 : f32
    %117 = vector.broadcast %cst_56 : f32 to vector<19x19xf32>
    %118 = arith.mulf %116, %117 : vector<19x19xf32>
    %119 = vector.broadcast %43 : vector<1x19xf32> to vector<19x19xf32>
    %120 = arith.addf %118, %119 : vector<19x19xf32>
    %cst_57 = arith.constant dense<0xFF800000> : vector<19xf32>
    %121 = vector.multi_reduction <maximumf>, %120, %cst_57 [1] : vector<19x19xf32> to vector<19xf32>
    %122 = vector.shape_cast %121 : vector<19xf32> to vector<19x1xf32>
    %123 = vector.broadcast %122 : vector<19x1xf32> to vector<19x19xf32>
    %124 = arith.subf %120, %123 : vector<19x19xf32>
    %125 = math.exp %124 : vector<19x19xf32>
    %cst_58 = arith.constant dense<0.000000e+00> : vector<19xf32>
    %126 = vector.multi_reduction <add>, %125, %cst_58 [1] : vector<19x19xf32> to vector<19xf32>
    %127 = vector.shape_cast %126 : vector<19xf32> to vector<19x1xf32>
    %128 = tpu.reciprocal %127 {approx = true} : vector<19x1xf32> -> vector<19x1xf32>
    %129 = vector.broadcast %128 : vector<19x1xf32> to vector<19x19xf32>
    %130 = arith.mulf %125, %129 : vector<19x19xf32>
    %131 = arith.truncf %130 : vector<19x19xf32> to vector<19x19xbf16>
    %132 = vector.extract_strided_slice %62 {offsets = [0, 16], sizes = [19, 8], strides = [1, 1]} : vector<19x32xf32> to vector<19x8xf32>
    %133 = arith.truncf %132 : vector<19x8xf32> to vector<19x8xbf16>
    %cst_59 = arith.constant dense<0.000000e+00> : vector<19x8xf32>
    %134 = tpu.matmul %131, %133, %cst_59 {dimension_numbers = #tpu.dot_dimension_numbers<[1], [0], [0], [1], [0, 0, 1, 1], [], []>} : vector<19x19xbf16>, vector<19x8xbf16>, vector<19x8xf32> -> vector<19x8xf32>
    %135 = vector.extract_strided_slice %63 {offsets = [0, 24], sizes = [19, 8], strides = [1, 1]} : vector<19x32xf32> to vector<19x8xf32>
    %136 = arith.truncf %135 : vector<19x8xf32> to vector<19x8xbf16>
    %137 = vector.extract_strided_slice %65 {offsets = [24, 0], sizes = [8, 19], strides = [1, 1]} : vector<32x19xf32> to vector<8x19xf32>
    %138 = arith.truncf %137 : vector<8x19xf32> to vector<8x19xbf16>
    %cst_60 = arith.constant dense<0.000000e+00> : vector<19x19xf32>
    %139 = tpu.matmul %136, %138, %cst_60 {dimension_numbers = #tpu.dot_dimension_numbers<[1], [0], [0], [1], [0, 0, 1, 1], [], []>} : vector<19x8xbf16>, vector<8x19xbf16>, vector<19x19xf32> -> vector<19x19xf32>
    %cst_61 = arith.constant 0.353553385 : f32
    %140 = vector.broadcast %cst_61 : f32 to vector<19x19xf32>
    %141 = arith.mulf %139, %140 : vector<19x19xf32>
    %142 = vector.broadcast %43 : vector<1x19xf32> to vector<19x19xf32>
    %143 = arith.addf %141, %142 : vector<19x19xf32>
    %cst_62 = arith.constant dense<0xFF800000> : vector<19xf32>
    %144 = vector.multi_reduction <maximumf>, %143, %cst_62 [1] : vector<19x19xf32> to vector<19xf32>
    %145 = vector.shape_cast %144 : vector<19xf32> to vector<19x1xf32>
    %146 = vector.broadcast %145 : vector<19x1xf32> to vector<19x19xf32>
    %147 = arith.subf %143, %146 : vector<19x19xf32>
    %148 = math.exp %147 : vector<19x19xf32>
    %cst_63 = arith.constant dense<0.000000e+00> : vector<19xf32>
    %149 = vector.multi_reduction <add>, %148, %cst_63 [1] : vector<19x19xf32> to vector<19xf32>
    %150 = vector.shape_cast %149 : vector<19xf32> to vector<19x1xf32>
    %151 = tpu.reciprocal %150 {approx = true} : vector<19x1xf32> -> vector<19x1xf32>
    %152 = vector.broadcast %151 : vector<19x1xf32> to vector<19x19xf32>
    %153 = arith.mulf %148, %152 : vector<19x19xf32>
    %154 = arith.truncf %153 : vector<19x19xf32> to vector<19x19xbf16>
    %155 = vector.extract_strided_slice %62 {offsets = [0, 24], sizes = [19, 8], strides = [1, 1]} : vector<19x32xf32> to vector<19x8xf32>
    %156 = arith.truncf %155 : vector<19x8xf32> to vector<19x8xbf16>
    %cst_64 = arith.constant dense<0.000000e+00> : vector<19x8xf32>
    %157 = tpu.matmul %154, %156, %cst_64 {dimension_numbers = #tpu.dot_dimension_numbers<[1], [0], [0], [1], [0, 0, 1, 1], [], []>} : vector<19x19xbf16>, vector<19x8xbf16>, vector<19x8xf32> -> vector<19x8xf32>
    %158 = tpu.concatenate %88, %111, %134, %157 in 1 : vector<19x8xf32>, vector<19x8xf32>, vector<19x8xf32>, vector<19x8xf32> -> vector<19x32xf32>
    %159 = arith.truncf %158 : vector<19x32xf32> to vector<19x32xbf16>
    %c0_65 = arith.constant 0 : index
    %c0_66 = arith.constant 0 : index
    %c0_67 = arith.constant 0 : index
    %160 = vector.load %arg14[%c0_65, %c0_66, %c0_67] : memref<2x32x32xbf16, #tpu.memory_space<vmem>>, vector<1x32x32xbf16>
    %161 = vector.shape_cast %160 : vector<1x32x32xbf16> to vector<32x32xbf16>
    %cst_68 = arith.constant dense<0.000000e+00> : vector<19x32xf32>
    %162 = tpu.matmul %159, %161, %cst_68 {dimension_numbers = #tpu.dot_dimension_numbers<[1], [0], [0], [1], [0, 0, 1, 1], [], []>} : vector<19x32xbf16>, vector<32x32xbf16>, vector<19x32xf32> -> vector<19x32xf32>
    %c0_69 = arith.constant 0 : index
    %c0_70 = arith.constant 0 : index
    %c0_71 = arith.constant 0 : index
    %163 = vector.load %arg15[%c0_69, %c0_70, %c0_71] : memref<2x1x32xf32, #tpu.memory_space<vmem>>, vector<1x1x32xf32>
    %164 = vector.shape_cast %163 : vector<1x1x32xf32> to vector<1x32xf32>
    %165 = vector.broadcast %164 : vector<1x32xf32> to vector<19x32xf32>
    %166 = arith.addf %162, %165 : vector<19x32xf32>
    %167 = arith.addf %36, %166 : vector<19x32xf32>
    %c0_72 = arith.constant 0 : index
    %c0_73 = arith.constant 0 : index
    %c0_74 = arith.constant 0 : index
    %168 = vector.load %arg16[%c0_72, %c0_73, %c0_74] : memref<2x1x32xf32, #tpu.memory_space<vmem>>, vector<1x1x32xf32>
    %169 = vector.shape_cast %168 : vector<1x1x32xf32> to vector<1x32xf32>
    %c0_75 = arith.constant 0 : index
    %c0_76 = arith.constant 0 : index
    %c0_77 = arith.constant 0 : index
    %170 = vector.load %arg17[%c0_75, %c0_76, %c0_77] : memref<2x1x32xf32, #tpu.memory_space<vmem>>, vector<1x1x32xf32>
    %171 = vector.shape_cast %170 : vector<1x1x32xf32> to vector<1x32xf32>
    %cst_78 = arith.constant dense<0.000000e+00> : vector<19xf32>
    %172 = vector.multi_reduction <add>, %167, %cst_78 [1] : vector<19x32xf32> to vector<19xf32>
    %173 = vector.shape_cast %172 : vector<19xf32> to vector<19x1xf32>
    %cst_79 = arith.constant 3.200000e+01 : f32
    %174 = vector.broadcast %cst_79 : f32 to vector<19x1xf32>
    %175 = arith.divf %173, %174 : vector<19x1xf32>
    %176 = vector.broadcast %175 : vector<19x1xf32> to vector<19x32xf32>
    %177 = arith.subf %167, %176 : vector<19x32xf32>
    %178 = arith.mulf %177, %177 : vector<19x32xf32>
    %cst_80 = arith.constant dense<0.000000e+00> : vector<19xf32>
    %179 = vector.multi_reduction <add>, %178, %cst_80 [1] : vector<19x32xf32> to vector<19xf32>
    %180 = vector.shape_cast %179 : vector<19xf32> to vector<19x1xf32>
    %cst_81 = arith.constant 3.200000e+01 : f32
    %181 = vector.broadcast %cst_81 : f32 to vector<19x1xf32>
    %182 = arith.divf %180, %181 : vector<19x1xf32>
    %183 = vector.broadcast %175 : vector<19x1xf32> to vector<19x32xf32>
    %184 = arith.subf %167, %183 : vector<19x32xf32>
    %cst_82 = arith.constant 9.99999974E-6 : f32
    %185 = vector.broadcast %cst_82 : f32 to vector<19x1xf32>
    %186 = arith.addf %182, %185 : vector<19x1xf32>
    %187 = math.rsqrt %186 : vector<19x1xf32>
    %188 = vector.broadcast %187 : vector<19x1xf32> to vector<19x32xf32>
    %189 = arith.mulf %184, %188 : vector<19x32xf32>
    %190 = vector.broadcast %169 : vector<1x32xf32> to vector<19x32xf32>
    %191 = arith.mulf %189, %190 : vector<19x32xf32>
    %192 = vector.broadcast %171 : vector<1x32xf32> to vector<19x32xf32>
    %193 = arith.addf %191, %192 : vector<19x32xf32>
    %194 = arith.truncf %193 : vector<19x32xf32> to vector<19x32xbf16>
    %c0_83 = arith.constant 0 : index
    %c0_84 = arith.constant 0 : index
    %c0_85 = arith.constant 0 : index
    %195 = vector.load %arg20[%c0_83, %c0_84, %c0_85] : memref<2x32x64xbf16, #tpu.memory_space<vmem>>, vector<1x32x64xbf16>
    %196 = vector.shape_cast %195 : vector<1x32x64xbf16> to vector<32x64xbf16>
    %cst_86 = arith.constant dense<0.000000e+00> : vector<19x64xf32>
    %197 = tpu.matmul %194, %196, %cst_86 {dimension_numbers = #tpu.dot_dimension_numbers<[1], [0], [0], [1], [0, 0, 1, 1], [], []>} : vector<19x32xbf16>, vector<32x64xbf16>, vector<19x64xf32> -> vector<19x64xf32>
    %c0_87 = arith.constant 0 : index
    %c0_88 = arith.constant 0 : index
    %c0_89 = arith.constant 0 : index
    %198 = vector.load %arg21[%c0_87, %c0_88, %c0_89] : memref<2x1x64xf32, #tpu.memory_space<vmem>>, vector<1x1x64xf32>
    %199 = vector.shape_cast %198 : vector<1x1x64xf32> to vector<1x64xf32>
    %200 = vector.broadcast %199 : vector<1x64xf32> to vector<19x64xf32>
    %201 = arith.addf %197, %200 : vector<19x64xf32>
    %cst_90 = arith.constant 0.000000e+00 : f32
    %202 = vector.broadcast %cst_90 : f32 to vector<19x64xf32>
    %203 = arith.maximumf %201, %202 : vector<19x64xf32>
    %204 = arith.truncf %203 : vector<19x64xf32> to vector<19x64xbf16>
    %c0_91 = arith.constant 0 : index
    %c0_92 = arith.constant 0 : index
    %c0_93 = arith.constant 0 : index
    %205 = vector.load %arg22[%c0_91, %c0_92, %c0_93] : memref<2x64x32xbf16, #tpu.memory_space<vmem>>, vector<1x64x32xbf16>
    %206 = vector.shape_cast %205 : vector<1x64x32xbf16> to vector<64x32xbf16>
    %cst_94 = arith.constant dense<0.000000e+00> : vector<19x32xf32>
    %207 = tpu.matmul %204, %206, %cst_94 {dimension_numbers = #tpu.dot_dimension_numbers<[1], [0], [0], [1], [0, 0, 1, 1], [], []>} : vector<19x64xbf16>, vector<64x32xbf16>, vector<19x32xf32> -> vector<19x32xf32>
    %c0_95 = arith.constant 0 : index
    %c0_96 = arith.constant 0 : index
    %c0_97 = arith.constant 0 : index
    %208 = vector.load %arg23[%c0_95, %c0_96, %c0_97] : memref<2x1x32xf32, #tpu.memory_space<vmem>>, vector<1x1x32xf32>
    %209 = vector.shape_cast %208 : vector<1x1x32xf32> to vector<1x32xf32>
    %210 = vector.broadcast %209 : vector<1x32xf32> to vector<19x32xf32>
    %211 = arith.addf %207, %210 : vector<19x32xf32>
    %212 = arith.addf %193, %211 : vector<19x32xf32>
    %c0_98 = arith.constant 0 : index
    %c0_99 = arith.constant 0 : index
    %c0_100 = arith.constant 0 : index
    %213 = vector.load %arg18[%c0_98, %c0_99, %c0_100] : memref<2x1x32xf32, #tpu.memory_space<vmem>>, vector<1x1x32xf32>
    %214 = vector.shape_cast %213 : vector<1x1x32xf32> to vector<1x32xf32>
    %c0_101 = arith.constant 0 : index
    %c0_102 = arith.constant 0 : index
    %c0_103 = arith.constant 0 : index
    %215 = vector.load %arg19[%c0_101, %c0_102, %c0_103] : memref<2x1x32xf32, #tpu.memory_space<vmem>>, vector<1x1x32xf32>
    %216 = vector.shape_cast %215 : vector<1x1x32xf32> to vector<1x32xf32>
    %cst_104 = arith.constant dense<0.000000e+00> : vector<19xf32>
    %217 = vector.multi_reduction <add>, %212, %cst_104 [1] : vector<19x32xf32> to vector<19xf32>
    %218 = vector.shape_cast %217 : vector<19xf32> to vector<19x1xf32>
    %cst_105 = arith.constant 3.200000e+01 : f32
    %219 = vector.broadcast %cst_105 : f32 to vector<19x1xf32>
    %220 = arith.divf %218, %219 : vector<19x1xf32>
    %221 = vector.broadcast %220 : vector<19x1xf32> to vector<19x32xf32>
    %222 = arith.subf %212, %221 : vector<19x32xf32>
    %223 = arith.mulf %222, %222 : vector<19x32xf32>
    %cst_106 = arith.constant dense<0.000000e+00> : vector<19xf32>
    %224 = vector.multi_reduction <add>, %223, %cst_106 [1] : vector<19x32xf32> to vector<19xf32>
    %225 = vector.shape_cast %224 : vector<19xf32> to vector<19x1xf32>
    %cst_107 = arith.constant 3.200000e+01 : f32
    %226 = vector.broadcast %cst_107 : f32 to vector<19x1xf32>
    %227 = arith.divf %225, %226 : vector<19x1xf32>
    %228 = vector.broadcast %220 : vector<19x1xf32> to vector<19x32xf32>
    %229 = arith.subf %212, %228 : vector<19x32xf32>
    %cst_108 = arith.constant 9.99999974E-6 : f32
    %230 = vector.broadcast %cst_108 : f32 to vector<19x1xf32>
    %231 = arith.addf %227, %230 : vector<19x1xf32>
    %232 = math.rsqrt %231 : vector<19x1xf32>
    %233 = vector.broadcast %232 : vector<19x1xf32> to vector<19x32xf32>
    %234 = arith.mulf %229, %233 : vector<19x32xf32>
    %235 = vector.broadcast %214 : vector<1x32xf32> to vector<19x32xf32>
    %236 = arith.mulf %234, %235 : vector<19x32xf32>
    %237 = vector.broadcast %216 : vector<1x32xf32> to vector<19x32xf32>
    %238 = arith.addf %236, %237 : vector<19x32xf32>
    %c0_109 = arith.constant 0 : index
    %c0_110 = arith.constant 0 : index
    %c0_111 = arith.constant 0 : index
    %239 = vector.load %arg25[%c0_109, %c0_110, %c0_111] : memref<2x19x32xf32, #tpu.memory_space<vmem>>, vector<1x19x32xf32>
    %240 = vector.shape_cast %239 : vector<1x19x32xf32> to vector<19x32xf32>
    %241 = arith.addf %238, %240 : vector<19x32xf32>
    %242 = arith.truncf %241 : vector<19x32xf32> to vector<19x32xbf16>
    %c1 = arith.constant 1 : index
    %c0_112 = arith.constant 0 : index
    %c0_113 = arith.constant 0 : index
    %243 = vector.load %arg10[%c1, %c0_112, %c0_113] : memref<2x32x64xbf16, #tpu.memory_space<vmem>>, vector<1x32x64xbf16>
    %244 = vector.shape_cast %243 : vector<1x32x64xbf16> to vector<32x64xbf16>
    %cst_114 = arith.constant dense<0.000000e+00> : vector<19x64xf32>
    %245 = tpu.matmul %242, %244, %cst_114 {dimension_numbers = #tpu.dot_dimension_numbers<[1], [0], [0], [1], [0, 0, 1, 1], [], []>} : vector<19x32xbf16>, vector<32x64xbf16>, vector<19x64xf32> -> vector<19x64xf32>
    %c1_115 = arith.constant 1 : index
    %c0_116 = arith.constant 0 : index
    %c0_117 = arith.constant 0 : index
    %246 = vector.load %arg11[%c1_115, %c0_116, %c0_117] : memref<2x1x64xf32, #tpu.memory_space<vmem>>, vector<1x1x64xf32>
    %247 = vector.shape_cast %246 : vector<1x1x64xf32> to vector<1x64xf32>
    %248 = vector.broadcast %247 : vector<1x64xf32> to vector<19x64xf32>
    %249 = arith.addf %245, %248 : vector<19x64xf32>
    %250 = arith.truncf %238 : vector<19x32xf32> to vector<19x32xbf16>
    %c1_118 = arith.constant 1 : index
    %c0_119 = arith.constant 0 : index
    %c0_120 = arith.constant 0 : index
    %251 = vector.load %arg12[%c1_118, %c0_119, %c0_120] : memref<2x32x32xbf16, #tpu.memory_space<vmem>>, vector<1x32x32xbf16>
    %252 = vector.shape_cast %251 : vector<1x32x32xbf16> to vector<32x32xbf16>
    %cst_121 = arith.constant dense<0.000000e+00> : vector<19x32xf32>
    %253 = tpu.matmul %250, %252, %cst_121 {dimension_numbers = #tpu.dot_dimension_numbers<[1], [0], [0], [1], [0, 0, 1, 1], [], []>} : vector<19x32xbf16>, vector<32x32xbf16>, vector<19x32xf32> -> vector<19x32xf32>
    %c1_122 = arith.constant 1 : index
    %c0_123 = arith.constant 0 : index
    %c0_124 = arith.constant 0 : index
    %254 = vector.load %arg13[%c1_122, %c0_123, %c0_124] : memref<2x1x32xf32, #tpu.memory_space<vmem>>, vector<1x1x32xf32>
    %255 = vector.shape_cast %254 : vector<1x1x32xf32> to vector<1x32xf32>
    %256 = vector.broadcast %255 : vector<1x32xf32> to vector<19x32xf32>
    %257 = arith.addf %253, %256 : vector<19x32xf32>
    %258 = vector.extract_strided_slice %249 {offsets = [0, 0], sizes = [19, 32], strides = [1, 1]} : vector<19x64xf32> to vector<19x32xf32>
    %259 = vector.extract_strided_slice %249 {offsets = [0, 32], sizes = [19, 32], strides = [1, 1]} : vector<19x64xf32> to vector<19x32xf32>
    %260 = tpu.transpose %259, [1, 0] : vector<19x32xf32> -> vector<32x19xf32>
    %261 = vector.extract_strided_slice %258 {offsets = [0, 0], sizes = [19, 8], strides = [1, 1]} : vector<19x32xf32> to vector<19x8xf32>
    %262 = arith.truncf %261 : vector<19x8xf32> to vector<19x8xbf16>
    %263 = vector.extract_strided_slice %260 {offsets = [0, 0], sizes = [8, 19], strides = [1, 1]} : vector<32x19xf32> to vector<8x19xf32>
    %264 = arith.truncf %263 : vector<8x19xf32> to vector<8x19xbf16>
    %cst_125 = arith.constant dense<0.000000e+00> : vector<19x19xf32>
    %265 = tpu.matmul %262, %264, %cst_125 {dimension_numbers = #tpu.dot_dimension_numbers<[1], [0], [0], [1], [0, 0, 1, 1], [], []>} : vector<19x8xbf16>, vector<8x19xbf16>, vector<19x19xf32> -> vector<19x19xf32>
    %cst_126 = arith.constant 0.353553385 : f32
    %266 = vector.broadcast %cst_126 : f32 to vector<19x19xf32>
    %267 = arith.mulf %265, %266 : vector<19x19xf32>
    %268 = vector.broadcast %43 : vector<1x19xf32> to vector<19x19xf32>
    %269 = arith.addf %267, %268 : vector<19x19xf32>
    %cst_127 = arith.constant dense<0xFF800000> : vector<19xf32>
    %270 = vector.multi_reduction <maximumf>, %269, %cst_127 [1] : vector<19x19xf32> to vector<19xf32>
    %271 = vector.shape_cast %270 : vector<19xf32> to vector<19x1xf32>
    %272 = vector.broadcast %271 : vector<19x1xf32> to vector<19x19xf32>
    %273 = arith.subf %269, %272 : vector<19x19xf32>
    %274 = math.exp %273 : vector<19x19xf32>
    %cst_128 = arith.constant dense<0.000000e+00> : vector<19xf32>
    %275 = vector.multi_reduction <add>, %274, %cst_128 [1] : vector<19x19xf32> to vector<19xf32>
    %276 = vector.shape_cast %275 : vector<19xf32> to vector<19x1xf32>
    %277 = tpu.reciprocal %276 {approx = true} : vector<19x1xf32> -> vector<19x1xf32>
    %278 = vector.broadcast %277 : vector<19x1xf32> to vector<19x19xf32>
    %279 = arith.mulf %274, %278 : vector<19x19xf32>
    %280 = arith.truncf %279 : vector<19x19xf32> to vector<19x19xbf16>
    %281 = vector.extract_strided_slice %257 {offsets = [0, 0], sizes = [19, 8], strides = [1, 1]} : vector<19x32xf32> to vector<19x8xf32>
    %282 = arith.truncf %281 : vector<19x8xf32> to vector<19x8xbf16>
    %cst_129 = arith.constant dense<0.000000e+00> : vector<19x8xf32>
    %283 = tpu.matmul %280, %282, %cst_129 {dimension_numbers = #tpu.dot_dimension_numbers<[1], [0], [0], [1], [0, 0, 1, 1], [], []>} : vector<19x19xbf16>, vector<19x8xbf16>, vector<19x8xf32> -> vector<19x8xf32>
    %284 = vector.extract_strided_slice %258 {offsets = [0, 8], sizes = [19, 8], strides = [1, 1]} : vector<19x32xf32> to vector<19x8xf32>
    %285 = arith.truncf %284 : vector<19x8xf32> to vector<19x8xbf16>
    %286 = vector.extract_strided_slice %260 {offsets = [8, 0], sizes = [8, 19], strides = [1, 1]} : vector<32x19xf32> to vector<8x19xf32>
    %287 = arith.truncf %286 : vector<8x19xf32> to vector<8x19xbf16>
    %cst_130 = arith.constant dense<0.000000e+00> : vector<19x19xf32>
    %288 = tpu.matmul %285, %287, %cst_130 {dimension_numbers = #tpu.dot_dimension_numbers<[1], [0], [0], [1], [0, 0, 1, 1], [], []>} : vector<19x8xbf16>, vector<8x19xbf16>, vector<19x19xf32> -> vector<19x19xf32>
    %cst_131 = arith.constant 0.353553385 : f32
    %289 = vector.broadcast %cst_131 : f32 to vector<19x19xf32>
    %290 = arith.mulf %288, %289 : vector<19x19xf32>
    %291 = vector.broadcast %43 : vector<1x19xf32> to vector<19x19xf32>
    %292 = arith.addf %290, %291 : vector<19x19xf32>
    %cst_132 = arith.constant dense<0xFF800000> : vector<19xf32>
    %293 = vector.multi_reduction <maximumf>, %292, %cst_132 [1] : vector<19x19xf32> to vector<19xf32>
    %294 = vector.shape_cast %293 : vector<19xf32> to vector<19x1xf32>
    %295 = vector.broadcast %294 : vector<19x1xf32> to vector<19x19xf32>
    %296 = arith.subf %292, %295 : vector<19x19xf32>
    %297 = math.exp %296 : vector<19x19xf32>
    %cst_133 = arith.constant dense<0.000000e+00> : vector<19xf32>
    %298 = vector.multi_reduction <add>, %297, %cst_133 [1] : vector<19x19xf32> to vector<19xf32>
    %299 = vector.shape_cast %298 : vector<19xf32> to vector<19x1xf32>
    %300 = tpu.reciprocal %299 {approx = true} : vector<19x1xf32> -> vector<19x1xf32>
    %301 = vector.broadcast %300 : vector<19x1xf32> to vector<19x19xf32>
    %302 = arith.mulf %297, %301 : vector<19x19xf32>
    %303 = arith.truncf %302 : vector<19x19xf32> to vector<19x19xbf16>
    %304 = vector.extract_strided_slice %257 {offsets = [0, 8], sizes = [19, 8], strides = [1, 1]} : vector<19x32xf32> to vector<19x8xf32>
    %305 = arith.truncf %304 : vector<19x8xf32> to vector<19x8xbf16>
    %cst_134 = arith.constant dense<0.000000e+00> : vector<19x8xf32>
    %306 = tpu.matmul %303, %305, %cst_134 {dimension_numbers = #tpu.dot_dimension_numbers<[1], [0], [0], [1], [0, 0, 1, 1], [], []>} : vector<19x19xbf16>, vector<19x8xbf16>, vector<19x8xf32> -> vector<19x8xf32>
    %307 = vector.extract_strided_slice %258 {offsets = [0, 16], sizes = [19, 8], strides = [1, 1]} : vector<19x32xf32> to vector<19x8xf32>
    %308 = arith.truncf %307 : vector<19x8xf32> to vector<19x8xbf16>
    %309 = vector.extract_strided_slice %260 {offsets = [16, 0], sizes = [8, 19], strides = [1, 1]} : vector<32x19xf32> to vector<8x19xf32>
    %310 = arith.truncf %309 : vector<8x19xf32> to vector<8x19xbf16>
    %cst_135 = arith.constant dense<0.000000e+00> : vector<19x19xf32>
    %311 = tpu.matmul %308, %310, %cst_135 {dimension_numbers = #tpu.dot_dimension_numbers<[1], [0], [0], [1], [0, 0, 1, 1], [], []>} : vector<19x8xbf16>, vector<8x19xbf16>, vector<19x19xf32> -> vector<19x19xf32>
    %cst_136 = arith.constant 0.353553385 : f32
    %312 = vector.broadcast %cst_136 : f32 to vector<19x19xf32>
    %313 = arith.mulf %311, %312 : vector<19x19xf32>
    %314 = vector.broadcast %43 : vector<1x19xf32> to vector<19x19xf32>
    %315 = arith.addf %313, %314 : vector<19x19xf32>
    %cst_137 = arith.constant dense<0xFF800000> : vector<19xf32>
    %316 = vector.multi_reduction <maximumf>, %315, %cst_137 [1] : vector<19x19xf32> to vector<19xf32>
    %317 = vector.shape_cast %316 : vector<19xf32> to vector<19x1xf32>
    %318 = vector.broadcast %317 : vector<19x1xf32> to vector<19x19xf32>
    %319 = arith.subf %315, %318 : vector<19x19xf32>
    %320 = math.exp %319 : vector<19x19xf32>
    %cst_138 = arith.constant dense<0.000000e+00> : vector<19xf32>
    %321 = vector.multi_reduction <add>, %320, %cst_138 [1] : vector<19x19xf32> to vector<19xf32>
    %322 = vector.shape_cast %321 : vector<19xf32> to vector<19x1xf32>
    %323 = tpu.reciprocal %322 {approx = true} : vector<19x1xf32> -> vector<19x1xf32>
    %324 = vector.broadcast %323 : vector<19x1xf32> to vector<19x19xf32>
    %325 = arith.mulf %320, %324 : vector<19x19xf32>
    %326 = arith.truncf %325 : vector<19x19xf32> to vector<19x19xbf16>
    %327 = vector.extract_strided_slice %257 {offsets = [0, 16], sizes = [19, 8], strides = [1, 1]} : vector<19x32xf32> to vector<19x8xf32>
    %328 = arith.truncf %327 : vector<19x8xf32> to vector<19x8xbf16>
    %cst_139 = arith.constant dense<0.000000e+00> : vector<19x8xf32>
    %329 = tpu.matmul %326, %328, %cst_139 {dimension_numbers = #tpu.dot_dimension_numbers<[1], [0], [0], [1], [0, 0, 1, 1], [], []>} : vector<19x19xbf16>, vector<19x8xbf16>, vector<19x8xf32> -> vector<19x8xf32>
    %330 = vector.extract_strided_slice %258 {offsets = [0, 24], sizes = [19, 8], strides = [1, 1]} : vector<19x32xf32> to vector<19x8xf32>
    %331 = arith.truncf %330 : vector<19x8xf32> to vector<19x8xbf16>
    %332 = vector.extract_strided_slice %260 {offsets = [24, 0], sizes = [8, 19], strides = [1, 1]} : vector<32x19xf32> to vector<8x19xf32>
    %333 = arith.truncf %332 : vector<8x19xf32> to vector<8x19xbf16>
    %cst_140 = arith.constant dense<0.000000e+00> : vector<19x19xf32>
    %334 = tpu.matmul %331, %333, %cst_140 {dimension_numbers = #tpu.dot_dimension_numbers<[1], [0], [0], [1], [0, 0, 1, 1], [], []>} : vector<19x8xbf16>, vector<8x19xbf16>, vector<19x19xf32> -> vector<19x19xf32>
    %cst_141 = arith.constant 0.353553385 : f32
    %335 = vector.broadcast %cst_141 : f32 to vector<19x19xf32>
    %336 = arith.mulf %334, %335 : vector<19x19xf32>
    %337 = vector.broadcast %43 : vector<1x19xf32> to vector<19x19xf32>
    %338 = arith.addf %336, %337 : vector<19x19xf32>
    %cst_142 = arith.constant dense<0xFF800000> : vector<19xf32>
    %339 = vector.multi_reduction <maximumf>, %338, %cst_142 [1] : vector<19x19xf32> to vector<19xf32>
    %340 = vector.shape_cast %339 : vector<19xf32> to vector<19x1xf32>
    %341 = vector.broadcast %340 : vector<19x1xf32> to vector<19x19xf32>
    %342 = arith.subf %338, %341 : vector<19x19xf32>
    %343 = math.exp %342 : vector<19x19xf32>
    %cst_143 = arith.constant dense<0.000000e+00> : vector<19xf32>
    %344 = vector.multi_reduction <add>, %343, %cst_143 [1] : vector<19x19xf32> to vector<19xf32>
    %345 = vector.shape_cast %344 : vector<19xf32> to vector<19x1xf32>
    %346 = tpu.reciprocal %345 {approx = true} : vector<19x1xf32> -> vector<19x1xf32>
    %347 = vector.broadcast %346 : vector<19x1xf32> to vector<19x19xf32>
    %348 = arith.mulf %343, %347 : vector<19x19xf32>
    %349 = arith.truncf %348 : vector<19x19xf32> to vector<19x19xbf16>
    %350 = vector.extract_strided_slice %257 {offsets = [0, 24], sizes = [19, 8], strides = [1, 1]} : vector<19x32xf32> to vector<19x8xf32>
    %351 = arith.truncf %350 : vector<19x8xf32> to vector<19x8xbf16>
    %cst_144 = arith.constant dense<0.000000e+00> : vector<19x8xf32>
    %352 = tpu.matmul %349, %351, %cst_144 {dimension_numbers = #tpu.dot_dimension_numbers<[1], [0], [0], [1], [0, 0, 1, 1], [], []>} : vector<19x19xbf16>, vector<19x8xbf16>, vector<19x8xf32> -> vector<19x8xf32>
    %353 = tpu.concatenate %283, %306, %329, %352 in 1 : vector<19x8xf32>, vector<19x8xf32>, vector<19x8xf32>, vector<19x8xf32> -> vector<19x32xf32>
    %354 = arith.truncf %353 : vector<19x32xf32> to vector<19x32xbf16>
    %c1_145 = arith.constant 1 : index
    %c0_146 = arith.constant 0 : index
    %c0_147 = arith.constant 0 : index
    %355 = vector.load %arg14[%c1_145, %c0_146, %c0_147] : memref<2x32x32xbf16, #tpu.memory_space<vmem>>, vector<1x32x32xbf16>
    %356 = vector.shape_cast %355 : vector<1x32x32xbf16> to vector<32x32xbf16>
    %cst_148 = arith.constant dense<0.000000e+00> : vector<19x32xf32>
    %357 = tpu.matmul %354, %356, %cst_148 {dimension_numbers = #tpu.dot_dimension_numbers<[1], [0], [0], [1], [0, 0, 1, 1], [], []>} : vector<19x32xbf16>, vector<32x32xbf16>, vector<19x32xf32> -> vector<19x32xf32>
    %c1_149 = arith.constant 1 : index
    %c0_150 = arith.constant 0 : index
    %c0_151 = arith.constant 0 : index
    %358 = vector.load %arg15[%c1_149, %c0_150, %c0_151] : memref<2x1x32xf32, #tpu.memory_space<vmem>>, vector<1x1x32xf32>
    %359 = vector.shape_cast %358 : vector<1x1x32xf32> to vector<1x32xf32>
    %360 = vector.broadcast %359 : vector<1x32xf32> to vector<19x32xf32>
    %361 = arith.addf %357, %360 : vector<19x32xf32>
    %362 = arith.addf %238, %361 : vector<19x32xf32>
    %c1_152 = arith.constant 1 : index
    %c0_153 = arith.constant 0 : index
    %c0_154 = arith.constant 0 : index
    %363 = vector.load %arg16[%c1_152, %c0_153, %c0_154] : memref<2x1x32xf32, #tpu.memory_space<vmem>>, vector<1x1x32xf32>
    %364 = vector.shape_cast %363 : vector<1x1x32xf32> to vector<1x32xf32>
    %c1_155 = arith.constant 1 : index
    %c0_156 = arith.constant 0 : index
    %c0_157 = arith.constant 0 : index
    %365 = vector.load %arg17[%c1_155, %c0_156, %c0_157] : memref<2x1x32xf32, #tpu.memory_space<vmem>>, vector<1x1x32xf32>
    %366 = vector.shape_cast %365 : vector<1x1x32xf32> to vector<1x32xf32>
    %cst_158 = arith.constant dense<0.000000e+00> : vector<19xf32>
    %367 = vector.multi_reduction <add>, %362, %cst_158 [1] : vector<19x32xf32> to vector<19xf32>
    %368 = vector.shape_cast %367 : vector<19xf32> to vector<19x1xf32>
    %cst_159 = arith.constant 3.200000e+01 : f32
    %369 = vector.broadcast %cst_159 : f32 to vector<19x1xf32>
    %370 = arith.divf %368, %369 : vector<19x1xf32>
    %371 = vector.broadcast %370 : vector<19x1xf32> to vector<19x32xf32>
    %372 = arith.subf %362, %371 : vector<19x32xf32>
    %373 = arith.mulf %372, %372 : vector<19x32xf32>
    %cst_160 = arith.constant dense<0.000000e+00> : vector<19xf32>
    %374 = vector.multi_reduction <add>, %373, %cst_160 [1] : vector<19x32xf32> to vector<19xf32>
    %375 = vector.shape_cast %374 : vector<19xf32> to vector<19x1xf32>
    %cst_161 = arith.constant 3.200000e+01 : f32
    %376 = vector.broadcast %cst_161 : f32 to vector<19x1xf32>
    %377 = arith.divf %375, %376 : vector<19x1xf32>
    %378 = vector.broadcast %370 : vector<19x1xf32> to vector<19x32xf32>
    %379 = arith.subf %362, %378 : vector<19x32xf32>
    %cst_162 = arith.constant 9.99999974E-6 : f32
    %380 = vector.broadcast %cst_162 : f32 to vector<19x1xf32>
    %381 = arith.addf %377, %380 : vector<19x1xf32>
    %382 = math.rsqrt %381 : vector<19x1xf32>
    %383 = vector.broadcast %382 : vector<19x1xf32> to vector<19x32xf32>
    %384 = arith.mulf %379, %383 : vector<19x32xf32>
    %385 = vector.broadcast %364 : vector<1x32xf32> to vector<19x32xf32>
    %386 = arith.mulf %384, %385 : vector<19x32xf32>
    %387 = vector.broadcast %366 : vector<1x32xf32> to vector<19x32xf32>
    %388 = arith.addf %386, %387 : vector<19x32xf32>
    %389 = arith.truncf %388 : vector<19x32xf32> to vector<19x32xbf16>
    %c1_163 = arith.constant 1 : index
    %c0_164 = arith.constant 0 : index
    %c0_165 = arith.constant 0 : index
    %390 = vector.load %arg20[%c1_163, %c0_164, %c0_165] : memref<2x32x64xbf16, #tpu.memory_space<vmem>>, vector<1x32x64xbf16>
    %391 = vector.shape_cast %390 : vector<1x32x64xbf16> to vector<32x64xbf16>
    %cst_166 = arith.constant dense<0.000000e+00> : vector<19x64xf32>
    %392 = tpu.matmul %389, %391, %cst_166 {dimension_numbers = #tpu.dot_dimension_numbers<[1], [0], [0], [1], [0, 0, 1, 1], [], []>} : vector<19x32xbf16>, vector<32x64xbf16>, vector<19x64xf32> -> vector<19x64xf32>
    %c1_167 = arith.constant 1 : index
    %c0_168 = arith.constant 0 : index
    %c0_169 = arith.constant 0 : index
    %393 = vector.load %arg21[%c1_167, %c0_168, %c0_169] : memref<2x1x64xf32, #tpu.memory_space<vmem>>, vector<1x1x64xf32>
    %394 = vector.shape_cast %393 : vector<1x1x64xf32> to vector<1x64xf32>
    %395 = vector.broadcast %394 : vector<1x64xf32> to vector<19x64xf32>
    %396 = arith.addf %392, %395 : vector<19x64xf32>
    %cst_170 = arith.constant 0.000000e+00 : f32
    %397 = vector.broadcast %cst_170 : f32 to vector<19x64xf32>
    %398 = arith.maximumf %396, %397 : vector<19x64xf32>
    %399 = arith.truncf %398 : vector<19x64xf32> to vector<19x64xbf16>
    %c1_171 = arith.constant 1 : index
    %c0_172 = arith.constant 0 : index
    %c0_173 = arith.constant 0 : index
    %400 = vector.load %arg22[%c1_171, %c0_172, %c0_173] : memref<2x64x32xbf16, #tpu.memory_space<vmem>>, vector<1x64x32xbf16>
    %401 = vector.shape_cast %400 : vector<1x64x32xbf16> to vector<64x32xbf16>
    %cst_174 = arith.constant dense<0.000000e+00> : vector<19x32xf32>
    %402 = tpu.matmul %399, %401, %cst_174 {dimension_numbers = #tpu.dot_dimension_numbers<[1], [0], [0], [1], [0, 0, 1, 1], [], []>} : vector<19x64xbf16>, vector<64x32xbf16>, vector<19x32xf32> -> vector<19x32xf32>
    %c1_175 = arith.constant 1 : index
    %c0_176 = arith.constant 0 : index
    %c0_177 = arith.constant 0 : index
    %403 = vector.load %arg23[%c1_175, %c0_176, %c0_177] : memref<2x1x32xf32, #tpu.memory_space<vmem>>, vector<1x1x32xf32>
    %404 = vector.shape_cast %403 : vector<1x1x32xf32> to vector<1x32xf32>
    %405 = vector.broadcast %404 : vector<1x32xf32> to vector<19x32xf32>
    %406 = arith.addf %402, %405 : vector<19x32xf32>
    %407 = arith.addf %388, %406 : vector<19x32xf32>
    %c1_178 = arith.constant 1 : index
    %c0_179 = arith.constant 0 : index
    %c0_180 = arith.constant 0 : index
    %408 = vector.load %arg18[%c1_178, %c0_179, %c0_180] : memref<2x1x32xf32, #tpu.memory_space<vmem>>, vector<1x1x32xf32>
    %409 = vector.shape_cast %408 : vector<1x1x32xf32> to vector<1x32xf32>
    %c1_181 = arith.constant 1 : index
    %c0_182 = arith.constant 0 : index
    %c0_183 = arith.constant 0 : index
    %410 = vector.load %arg19[%c1_181, %c0_182, %c0_183] : memref<2x1x32xf32, #tpu.memory_space<vmem>>, vector<1x1x32xf32>
    %411 = vector.shape_cast %410 : vector<1x1x32xf32> to vector<1x32xf32>
    %cst_184 = arith.constant dense<0.000000e+00> : vector<19xf32>
    %412 = vector.multi_reduction <add>, %407, %cst_184 [1] : vector<19x32xf32> to vector<19xf32>
    %413 = vector.shape_cast %412 : vector<19xf32> to vector<19x1xf32>
    %cst_185 = arith.constant 3.200000e+01 : f32
    %414 = vector.broadcast %cst_185 : f32 to vector<19x1xf32>
    %415 = arith.divf %413, %414 : vector<19x1xf32>
    %416 = vector.broadcast %415 : vector<19x1xf32> to vector<19x32xf32>
    %417 = arith.subf %407, %416 : vector<19x32xf32>
    %418 = arith.mulf %417, %417 : vector<19x32xf32>
    %cst_186 = arith.constant dense<0.000000e+00> : vector<19xf32>
    %419 = vector.multi_reduction <add>, %418, %cst_186 [1] : vector<19x32xf32> to vector<19xf32>
    %420 = vector.shape_cast %419 : vector<19xf32> to vector<19x1xf32>
    %cst_187 = arith.constant 3.200000e+01 : f32
    %421 = vector.broadcast %cst_187 : f32 to vector<19x1xf32>
    %422 = arith.divf %420, %421 : vector<19x1xf32>
    %423 = vector.broadcast %415 : vector<19x1xf32> to vector<19x32xf32>
    %424 = arith.subf %407, %423 : vector<19x32xf32>
    %cst_188 = arith.constant 9.99999974E-6 : f32
    %425 = vector.broadcast %cst_188 : f32 to vector<19x1xf32>
    %426 = arith.addf %422, %425 : vector<19x1xf32>
    %427 = math.rsqrt %426 : vector<19x1xf32>
    %428 = vector.broadcast %427 : vector<19x1xf32> to vector<19x32xf32>
    %429 = arith.mulf %424, %428 : vector<19x32xf32>
    %430 = vector.broadcast %409 : vector<1x32xf32> to vector<19x32xf32>
    %431 = arith.mulf %429, %430 : vector<19x32xf32>
    %432 = vector.broadcast %411 : vector<1x32xf32> to vector<19x32xf32>
    %433 = arith.addf %431, %432 : vector<19x32xf32>
    %c0_189 = arith.constant 0 : index
    %c0_190 = arith.constant 0 : index
    %c0_191 = arith.constant 0 : index
    %434 = vector.load %arg24[%c0_189, %c0_190, %c0_191] : memref<2x19x32xf32, #tpu.memory_space<vmem>>, vector<1x19x32xf32>
    %435 = vector.shape_cast %434 : vector<1x19x32xf32> to vector<19x32xf32>
    %436 = vector.shape_cast %433 : vector<19x32xf32> to vector<1x19x32xf32>
    tpu.vector_store %arg24[%c0_189, %c0_190, %c0_191], %436 {strides = array<i32>} : memref<2x19x32xf32, #tpu.memory_space<vmem>>, vector<1x19x32xf32>,
    %c1_192 = arith.constant 1 : index
    %c0_193 = arith.constant 0 : index
    %c0_194 = arith.constant 0 : index
    %437 = vector.load %arg1[%c1_192, %c0_193, %c0_194] : memref<2x10x1xi32, #tpu.memory_space<vmem>>, vector<1x10x1xi32>
    %438 = vector.shape_cast %437 : vector<1x10x1xi32> to vector<10x1xi32>
    %439 = tpu.iota {dimensions = array<i32: 1>} : vector<10x152xi32>
    %440 = vector.broadcast %438 : vector<10x1xi32> to vector<10x152xi32>
    %441 = arith.cmpi eq, %440, %439 : vector<10x152xi32>
    %442 = arith.extui %441 : vector<10x152xi1> to vector<10x152xi32>
    %443 = arith.sitofp %442 : vector<10x152xi32> to vector<10x152xf32>
    %cst_195 = arith.constant dense<0.000000e+00> : vector<10x32xf32>
    %444 = tpu.matmul %443, %0, %cst_195 {dimension_numbers = #tpu.dot_dimension_numbers<[1], [0], [0], [1], [0, 0, 1, 1], [], []>} : vector<10x152xf32>, vector<152x32xf32>, vector<10x32xf32> -> vector<10x32xf32>
    %c1_196 = arith.constant 1 : index
    %c0_197 = arith.constant 0 : index
    %c0_198 = arith.constant 0 : index
    %445 = vector.load %arg4[%c1_196, %c0_197, %c0_198] : memref<2x8x1xi32, #tpu.memory_space<vmem>>, vector<1x8x1xi32>
    %446 = vector.shape_cast %445 : vector<1x8x1xi32> to vector<8x1xi32>
    %447 = tpu.iota {dimensions = array<i32: 1>} : vector<8x52xi32>
    %448 = vector.broadcast %446 : vector<8x1xi32> to vector<8x52xi32>
    %449 = arith.cmpi eq, %448, %447 : vector<8x52xi32>
    %450 = arith.extui %449 : vector<8x52xi1> to vector<8x52xi32>
    %451 = arith.sitofp %450 : vector<8x52xi32> to vector<8x52xf32>
    %cst_199 = arith.constant dense<0.000000e+00> : vector<8x32xf32>
    %452 = tpu.matmul %451, %1, %cst_199 {dimension_numbers = #tpu.dot_dimension_numbers<[1], [0], [0], [1], [0, 0, 1, 1], [], []>} : vector<8x52xf32>, vector<52x32xf32>, vector<8x32xf32> -> vector<8x32xf32>
    %c1_200 = arith.constant 1 : index
    %c0_201 = arith.constant 0 : index
    %c0_202 = arith.constant 0 : index
    %453 = vector.load %arg2[%c1_200, %c0_201, %c0_202] : memref<2x8x1xi32, #tpu.memory_space<vmem>>, vector<1x8x1xi32>
    %454 = vector.shape_cast %453 : vector<1x8x1xi32> to vector<8x1xi32>
    %455 = tpu.iota {dimensions = array<i32: 1>} : vector<8x10xi32>
    %456 = vector.broadcast %454 : vector<8x1xi32> to vector<8x10xi32>
    %457 = arith.cmpi eq, %456, %455 : vector<8x10xi32>
    %458 = arith.extui %457 : vector<8x10xi1> to vector<8x10xi32>
    %459 = arith.sitofp %458 : vector<8x10xi32> to vector<8x10xf32>
    %c1_203 = arith.constant 1 : index
    %c0_204 = arith.constant 0 : index
    %c0_205 = arith.constant 0 : index
    %460 = vector.load %arg3[%c1_203, %c0_204, %c0_205] : memref<2x8x1xi32, #tpu.memory_space<vmem>>, vector<1x8x1xi32>
    %461 = vector.shape_cast %460 : vector<1x8x1xi32> to vector<8x1xi32>
    %462 = tpu.iota {dimensions = array<i32: 1>} : vector<8x10xi32>
    %463 = vector.broadcast %461 : vector<8x1xi32> to vector<8x10xi32>
    %464 = arith.cmpi eq, %463, %462 : vector<8x10xi32>
    %465 = arith.extui %464 : vector<8x10xi1> to vector<8x10xi32>
    %466 = arith.sitofp %465 : vector<8x10xi32> to vector<8x10xf32>
    %467 = arith.subf %459, %466 : vector<8x10xf32>
    %cst_206 = arith.constant dense<0.000000e+00> : vector<8x32xf32>
    %468 = tpu.matmul %467, %2, %cst_206 {dimension_numbers = #tpu.dot_dimension_numbers<[1], [0], [0], [1], [0, 0, 1, 1], [], []>} : vector<8x10xf32>, vector<10x32xf32>, vector<8x32xf32> -> vector<8x32xf32>
    %469 = tpu.concatenate %3, %444, %452 in 0 : vector<1x32xf32>, vector<10x32xf32>, vector<8x32xf32> -> vector<19x32xf32>
    %cst_207 = arith.constant 0.000000e+00 : f32
    %470 = vector.broadcast %cst_207 : f32 to vector<1x32xf32>
    %471 = tpu.concatenate %470, %2, %468 in 0 : vector<1x32xf32>, vector<10x32xf32>, vector<8x32xf32> -> vector<19x32xf32>
    %c1_208 = arith.constant 1 : index
    %c0_209 = arith.constant 0 : index
    %c0_210 = arith.constant 0 : index
    %472 = vector.load %arg25[%c1_208, %c0_209, %c0_210] : memref<2x19x32xf32, #tpu.memory_space<vmem>>, vector<1x19x32xf32>
    %473 = vector.shape_cast %472 : vector<1x19x32xf32> to vector<19x32xf32>
    %474 = vector.shape_cast %471 : vector<19x32xf32> to vector<1x19x32xf32>
    tpu.vector_store %arg25[%c1_208, %c0_209, %c0_210], %474 {strides = array<i32>} : memref<2x19x32xf32, #tpu.memory_space<vmem>>, vector<1x19x32xf32>,
    %c1_211 = arith.constant 1 : index
    %c0_212 = arith.constant 0 : index
    %c0_213 = arith.constant 0 : index
    %475 = vector.load %arg5[%c1_211, %c0_212, %c0_213] : memref<2x1x19xf32, #tpu.memory_space<vmem>>, vector<1x1x19xf32>
    %476 = vector.shape_cast %475 : vector<1x1x19xf32> to vector<1x19xf32>
    %c1_214 = arith.constant 1 : index
    %c0_215 = arith.constant 0 : index
    %c0_216 = arith.constant 0 : index
    %477 = vector.load %arg25[%c1_214, %c0_215, %c0_216] : memref<2x19x32xf32, #tpu.memory_space<vmem>>, vector<1x19x32xf32>
    %478 = vector.shape_cast %477 : vector<1x19x32xf32> to vector<19x32xf32>
    %479 = arith.addf %469, %478 : vector<19x32xf32>
    %480 = arith.truncf %479 : vector<19x32xf32> to vector<19x32xbf16>
    %c0_217 = arith.constant 0 : index
    %c0_218 = arith.constant 0 : index
    %c0_219 = arith.constant 0 : index
    %481 = vector.load %arg10[%c0_217, %c0_218, %c0_219] : memref<2x32x64xbf16, #tpu.memory_space<vmem>>, vector<1x32x64xbf16>
    %482 = vector.shape_cast %481 : vector<1x32x64xbf16> to vector<32x64xbf16>
    %cst_220 = arith.constant dense<0.000000e+00> : vector<19x64xf32>
    %483 = tpu.matmul %480, %482, %cst_220 {dimension_numbers = #tpu.dot_dimension_numbers<[1], [0], [0], [1], [0, 0, 1, 1], [], []>} : vector<19x32xbf16>, vector<32x64xbf16>, vector<19x64xf32> -> vector<19x64xf32>
    %c0_221 = arith.constant 0 : index
    %c0_222 = arith.constant 0 : index
    %c0_223 = arith.constant 0 : index
    %484 = vector.load %arg11[%c0_221, %c0_222, %c0_223] : memref<2x1x64xf32, #tpu.memory_space<vmem>>, vector<1x1x64xf32>
    %485 = vector.shape_cast %484 : vector<1x1x64xf32> to vector<1x64xf32>
    %486 = vector.broadcast %485 : vector<1x64xf32> to vector<19x64xf32>
    %487 = arith.addf %483, %486 : vector<19x64xf32>
    %488 = arith.truncf %469 : vector<19x32xf32> to vector<19x32xbf16>
    %c0_224 = arith.constant 0 : index
    %c0_225 = arith.constant 0 : index
    %c0_226 = arith.constant 0 : index
    %489 = vector.load %arg12[%c0_224, %c0_225, %c0_226] : memref<2x32x32xbf16, #tpu.memory_space<vmem>>, vector<1x32x32xbf16>
    %490 = vector.shape_cast %489 : vector<1x32x32xbf16> to vector<32x32xbf16>
    %cst_227 = arith.constant dense<0.000000e+00> : vector<19x32xf32>
    %491 = tpu.matmul %488, %490, %cst_227 {dimension_numbers = #tpu.dot_dimension_numbers<[1], [0], [0], [1], [0, 0, 1, 1], [], []>} : vector<19x32xbf16>, vector<32x32xbf16>, vector<19x32xf32> -> vector<19x32xf32>
    %c0_228 = arith.constant 0 : index
    %c0_229 = arith.constant 0 : index
    %c0_230 = arith.constant 0 : index
    %492 = vector.load %arg13[%c0_228, %c0_229, %c0_230] : memref<2x1x32xf32, #tpu.memory_space<vmem>>, vector<1x1x32xf32>
    %493 = vector.shape_cast %492 : vector<1x1x32xf32> to vector<1x32xf32>
    %494 = vector.broadcast %493 : vector<1x32xf32> to vector<19x32xf32>
    %495 = arith.addf %491, %494 : vector<19x32xf32>
    %496 = vector.extract_strided_slice %487 {offsets = [0, 0], sizes = [19, 32], strides = [1, 1]} : vector<19x64xf32> to vector<19x32xf32>
    %497 = vector.extract_strided_slice %487 {offsets = [0, 32], sizes = [19, 32], strides = [1, 1]} : vector<19x64xf32> to vector<19x32xf32>
    %498 = tpu.transpose %497, [1, 0] : vector<19x32xf32> -> vector<32x19xf32>
    %499 = vector.extract_strided_slice %496 {offsets = [0, 0], sizes = [19, 8], strides = [1, 1]} : vector<19x32xf32> to vector<19x8xf32>
    %500 = arith.truncf %499 : vector<19x8xf32> to vector<19x8xbf16>
    %501 = vector.extract_strided_slice %498 {offsets = [0, 0], sizes = [8, 19], strides = [1, 1]} : vector<32x19xf32> to vector<8x19xf32>
    %502 = arith.truncf %501 : vector<8x19xf32> to vector<8x19xbf16>
    %cst_231 = arith.constant dense<0.000000e+00> : vector<19x19xf32>
    %503 = tpu.matmul %500, %502, %cst_231 {dimension_numbers = #tpu.dot_dimension_numbers<[1], [0], [0], [1], [0, 0, 1, 1], [], []>} : vector<19x8xbf16>, vector<8x19xbf16>, vector<19x19xf32> -> vector<19x19xf32>
    %cst_232 = arith.constant 0.353553385 : f32
    %504 = vector.broadcast %cst_232 : f32 to vector<19x19xf32>
    %505 = arith.mulf %503, %504 : vector<19x19xf32>
    %506 = vector.broadcast %476 : vector<1x19xf32> to vector<19x19xf32>
    %507 = arith.addf %505, %506 : vector<19x19xf32>
    %cst_233 = arith.constant dense<0xFF800000> : vector<19xf32>
    %508 = vector.multi_reduction <maximumf>, %507, %cst_233 [1] : vector<19x19xf32> to vector<19xf32>
    %509 = vector.shape_cast %508 : vector<19xf32> to vector<19x1xf32>
    %510 = vector.broadcast %509 : vector<19x1xf32> to vector<19x19xf32>
    %511 = arith.subf %507, %510 : vector<19x19xf32>
    %512 = math.exp %511 : vector<19x19xf32>
    %cst_234 = arith.constant dense<0.000000e+00> : vector<19xf32>
    %513 = vector.multi_reduction <add>, %512, %cst_234 [1] : vector<19x19xf32> to vector<19xf32>
    %514 = vector.shape_cast %513 : vector<19xf32> to vector<19x1xf32>
    %515 = tpu.reciprocal %514 {approx = true} : vector<19x1xf32> -> vector<19x1xf32>
    %516 = vector.broadcast %515 : vector<19x1xf32> to vector<19x19xf32>
    %517 = arith.mulf %512, %516 : vector<19x19xf32>
    %518 = arith.truncf %517 : vector<19x19xf32> to vector<19x19xbf16>
    %519 = vector.extract_strided_slice %495 {offsets = [0, 0], sizes = [19, 8], strides = [1, 1]} : vector<19x32xf32> to vector<19x8xf32>
    %520 = arith.truncf %519 : vector<19x8xf32> to vector<19x8xbf16>
    %cst_235 = arith.constant dense<0.000000e+00> : vector<19x8xf32>
    %521 = tpu.matmul %518, %520, %cst_235 {dimension_numbers = #tpu.dot_dimension_numbers<[1], [0], [0], [1], [0, 0, 1, 1], [], []>} : vector<19x19xbf16>, vector<19x8xbf16>, vector<19x8xf32> -> vector<19x8xf32>
    %522 = vector.extract_strided_slice %496 {offsets = [0, 8], sizes = [19, 8], strides = [1, 1]} : vector<19x32xf32> to vector<19x8xf32>
    %523 = arith.truncf %522 : vector<19x8xf32> to vector<19x8xbf16>
    %524 = vector.extract_strided_slice %498 {offsets = [8, 0], sizes = [8, 19], strides = [1, 1]} : vector<32x19xf32> to vector<8x19xf32>
    %525 = arith.truncf %524 : vector<8x19xf32> to vector<8x19xbf16>
    %cst_236 = arith.constant dense<0.000000e+00> : vector<19x19xf32>
    %526 = tpu.matmul %523, %525, %cst_236 {dimension_numbers = #tpu.dot_dimension_numbers<[1], [0], [0], [1], [0, 0, 1, 1], [], []>} : vector<19x8xbf16>, vector<8x19xbf16>, vector<19x19xf32> -> vector<19x19xf32>
    %cst_237 = arith.constant 0.353553385 : f32
    %527 = vector.broadcast %cst_237 : f32 to vector<19x19xf32>
    %528 = arith.mulf %526, %527 : vector<19x19xf32>
    %529 = vector.broadcast %476 : vector<1x19xf32> to vector<19x19xf32>
    %530 = arith.addf %528, %529 : vector<19x19xf32>
    %cst_238 = arith.constant dense<0xFF800000> : vector<19xf32>
    %531 = vector.multi_reduction <maximumf>, %530, %cst_238 [1] : vector<19x19xf32> to vector<19xf32>
    %532 = vector.shape_cast %531 : vector<19xf32> to vector<19x1xf32>
    %533 = vector.broadcast %532 : vector<19x1xf32> to vector<19x19xf32>
    %534 = arith.subf %530, %533 : vector<19x19xf32>
    %535 = math.exp %534 : vector<19x19xf32>
    %cst_239 = arith.constant dense<0.000000e+00> : vector<19xf32>
    %536 = vector.multi_reduction <add>, %535, %cst_239 [1] : vector<19x19xf32> to vector<19xf32>
    %537 = vector.shape_cast %536 : vector<19xf32> to vector<19x1xf32>
    %538 = tpu.reciprocal %537 {approx = true} : vector<19x1xf32> -> vector<19x1xf32>
    %539 = vector.broadcast %538 : vector<19x1xf32> to vector<19x19xf32>
    %540 = arith.mulf %535, %539 : vector<19x19xf32>
    %541 = arith.truncf %540 : vector<19x19xf32> to vector<19x19xbf16>
    %542 = vector.extract_strided_slice %495 {offsets = [0, 8], sizes = [19, 8], strides = [1, 1]} : vector<19x32xf32> to vector<19x8xf32>
    %543 = arith.truncf %542 : vector<19x8xf32> to vector<19x8xbf16>
    %cst_240 = arith.constant dense<0.000000e+00> : vector<19x8xf32>
    %544 = tpu.matmul %541, %543, %cst_240 {dimension_numbers = #tpu.dot_dimension_numbers<[1], [0], [0], [1], [0, 0, 1, 1], [], []>} : vector<19x19xbf16>, vector<19x8xbf16>, vector<19x8xf32> -> vector<19x8xf32>
    %545 = vector.extract_strided_slice %496 {offsets = [0, 16], sizes = [19, 8], strides = [1, 1]} : vector<19x32xf32> to vector<19x8xf32>
    %546 = arith.truncf %545 : vector<19x8xf32> to vector<19x8xbf16>
    %547 = vector.extract_strided_slice %498 {offsets = [16, 0], sizes = [8, 19], strides = [1, 1]} : vector<32x19xf32> to vector<8x19xf32>
    %548 = arith.truncf %547 : vector<8x19xf32> to vector<8x19xbf16>
    %cst_241 = arith.constant dense<0.000000e+00> : vector<19x19xf32>
    %549 = tpu.matmul %546, %548, %cst_241 {dimension_numbers = #tpu.dot_dimension_numbers<[1], [0], [0], [1], [0, 0, 1, 1], [], []>} : vector<19x8xbf16>, vector<8x19xbf16>, vector<19x19xf32> -> vector<19x19xf32>
    %cst_242 = arith.constant 0.353553385 : f32
    %550 = vector.broadcast %cst_242 : f32 to vector<19x19xf32>
    %551 = arith.mulf %549, %550 : vector<19x19xf32>
    %552 = vector.broadcast %476 : vector<1x19xf32> to vector<19x19xf32>
    %553 = arith.addf %551, %552 : vector<19x19xf32>
    %cst_243 = arith.constant dense<0xFF800000> : vector<19xf32>
    %554 = vector.multi_reduction <maximumf>, %553, %cst_243 [1] : vector<19x19xf32> to vector<19xf32>
    %555 = vector.shape_cast %554 : vector<19xf32> to vector<19x1xf32>
    %556 = vector.broadcast %555 : vector<19x1xf32> to vector<19x19xf32>
    %557 = arith.subf %553, %556 : vector<19x19xf32>
    %558 = math.exp %557 : vector<19x19xf32>
    %cst_244 = arith.constant dense<0.000000e+00> : vector<19xf32>
    %559 = vector.multi_reduction <add>, %558, %cst_244 [1] : vector<19x19xf32> to vector<19xf32>
    %560 = vector.shape_cast %559 : vector<19xf32> to vector<19x1xf32>
    %561 = tpu.reciprocal %560 {approx = true} : vector<19x1xf32> -> vector<19x1xf32>
    %562 = vector.broadcast %561 : vector<19x1xf32> to vector<19x19xf32>
    %563 = arith.mulf %558, %562 : vector<19x19xf32>
    %564 = arith.truncf %563 : vector<19x19xf32> to vector<19x19xbf16>
    %565 = vector.extract_strided_slice %495 {offsets = [0, 16], sizes = [19, 8], strides = [1, 1]} : vector<19x32xf32> to vector<19x8xf32>
    %566 = arith.truncf %565 : vector<19x8xf32> to vector<19x8xbf16>
    %cst_245 = arith.constant dense<0.000000e+00> : vector<19x8xf32>
    %567 = tpu.matmul %564, %566, %cst_245 {dimension_numbers = #tpu.dot_dimension_numbers<[1], [0], [0], [1], [0, 0, 1, 1], [], []>} : vector<19x19xbf16>, vector<19x8xbf16>, vector<19x8xf32> -> vector<19x8xf32>
    %568 = vector.extract_strided_slice %496 {offsets = [0, 24], sizes = [19, 8], strides = [1, 1]} : vector<19x32xf32> to vector<19x8xf32>
    %569 = arith.truncf %568 : vector<19x8xf32> to vector<19x8xbf16>
    %570 = vector.extract_strided_slice %498 {offsets = [24, 0], sizes = [8, 19], strides = [1, 1]} : vector<32x19xf32> to vector<8x19xf32>
    %571 = arith.truncf %570 : vector<8x19xf32> to vector<8x19xbf16>
    %cst_246 = arith.constant dense<0.000000e+00> : vector<19x19xf32>
    %572 = tpu.matmul %569, %571, %cst_246 {dimension_numbers = #tpu.dot_dimension_numbers<[1], [0], [0], [1], [0, 0, 1, 1], [], []>} : vector<19x8xbf16>, vector<8x19xbf16>, vector<19x19xf32> -> vector<19x19xf32>
    %cst_247 = arith.constant 0.353553385 : f32
    %573 = vector.broadcast %cst_247 : f32 to vector<19x19xf32>
    %574 = arith.mulf %572, %573 : vector<19x19xf32>
    %575 = vector.broadcast %476 : vector<1x19xf32> to vector<19x19xf32>
    %576 = arith.addf %574, %575 : vector<19x19xf32>
    %cst_248 = arith.constant dense<0xFF800000> : vector<19xf32>
    %577 = vector.multi_reduction <maximumf>, %576, %cst_248 [1] : vector<19x19xf32> to vector<19xf32>
    %578 = vector.shape_cast %577 : vector<19xf32> to vector<19x1xf32>
    %579 = vector.broadcast %578 : vector<19x1xf32> to vector<19x19xf32>
    %580 = arith.subf %576, %579 : vector<19x19xf32>
    %581 = math.exp %580 : vector<19x19xf32>
    %cst_249 = arith.constant dense<0.000000e+00> : vector<19xf32>
    %582 = vector.multi_reduction <add>, %581, %cst_249 [1] : vector<19x19xf32> to vector<19xf32>
    %583 = vector.shape_cast %582 : vector<19xf32> to vector<19x1xf32>
    %584 = tpu.reciprocal %583 {approx = true} : vector<19x1xf32> -> vector<19x1xf32>
    %585 = vector.broadcast %584 : vector<19x1xf32> to vector<19x19xf32>
    %586 = arith.mulf %581, %585 : vector<19x19xf32>
    %587 = arith.truncf %586 : vector<19x19xf32> to vector<19x19xbf16>
    %588 = vector.extract_strided_slice %495 {offsets = [0, 24], sizes = [19, 8], strides = [1, 1]} : vector<19x32xf32> to vector<19x8xf32>
    %589 = arith.truncf %588 : vector<19x8xf32> to vector<19x8xbf16>
    %cst_250 = arith.constant dense<0.000000e+00> : vector<19x8xf32>
    %590 = tpu.matmul %587, %589, %cst_250 {dimension_numbers = #tpu.dot_dimension_numbers<[1], [0], [0], [1], [0, 0, 1, 1], [], []>} : vector<19x19xbf16>, vector<19x8xbf16>, vector<19x8xf32> -> vector<19x8xf32>
    %591 = tpu.concatenate %521, %544, %567, %590 in 1 : vector<19x8xf32>, vector<19x8xf32>, vector<19x8xf32>, vector<19x8xf32> -> vector<19x32xf32>
    %592 = arith.truncf %591 : vector<19x32xf32> to vector<19x32xbf16>
    %c0_251 = arith.constant 0 : index
    %c0_252 = arith.constant 0 : index
    %c0_253 = arith.constant 0 : index
    %593 = vector.load %arg14[%c0_251, %c0_252, %c0_253] : memref<2x32x32xbf16, #tpu.memory_space<vmem>>, vector<1x32x32xbf16>
    %594 = vector.shape_cast %593 : vector<1x32x32xbf16> to vector<32x32xbf16>
    %cst_254 = arith.constant dense<0.000000e+00> : vector<19x32xf32>
    %595 = tpu.matmul %592, %594, %cst_254 {dimension_numbers = #tpu.dot_dimension_numbers<[1], [0], [0], [1], [0, 0, 1, 1], [], []>} : vector<19x32xbf16>, vector<32x32xbf16>, vector<19x32xf32> -> vector<19x32xf32>
    %c0_255 = arith.constant 0 : index
    %c0_256 = arith.constant 0 : index
    %c0_257 = arith.constant 0 : index
    %596 = vector.load %arg15[%c0_255, %c0_256, %c0_257] : memref<2x1x32xf32, #tpu.memory_space<vmem>>, vector<1x1x32xf32>
    %597 = vector.shape_cast %596 : vector<1x1x32xf32> to vector<1x32xf32>
    %598 = vector.broadcast %597 : vector<1x32xf32> to vector<19x32xf32>
    %599 = arith.addf %595, %598 : vector<19x32xf32>
    %600 = arith.addf %469, %599 : vector<19x32xf32>
    %c0_258 = arith.constant 0 : index
    %c0_259 = arith.constant 0 : index
    %c0_260 = arith.constant 0 : index
    %601 = vector.load %arg16[%c0_258, %c0_259, %c0_260] : memref<2x1x32xf32, #tpu.memory_space<vmem>>, vector<1x1x32xf32>
    %602 = vector.shape_cast %601 : vector<1x1x32xf32> to vector<1x32xf32>
    %c0_261 = arith.constant 0 : index
    %c0_262 = arith.constant 0 : index
    %c0_263 = arith.constant 0 : index
    %603 = vector.load %arg17[%c0_261, %c0_262, %c0_263] : memref<2x1x32xf32, #tpu.memory_space<vmem>>, vector<1x1x32xf32>
    %604 = vector.shape_cast %603 : vector<1x1x32xf32> to vector<1x32xf32>
    %cst_264 = arith.constant dense<0.000000e+00> : vector<19xf32>
    %605 = vector.multi_reduction <add>, %600, %cst_264 [1] : vector<19x32xf32> to vector<19xf32>
    %606 = vector.shape_cast %605 : vector<19xf32> to vector<19x1xf32>
    %cst_265 = arith.constant 3.200000e+01 : f32
    %607 = vector.broadcast %cst_265 : f32 to vector<19x1xf32>
    %608 = arith.divf %606, %607 : vector<19x1xf32>
    %609 = vector.broadcast %608 : vector<19x1xf32> to vector<19x32xf32>
    %610 = arith.subf %600, %609 : vector<19x32xf32>
    %611 = arith.mulf %610, %610 : vector<19x32xf32>
    %cst_266 = arith.constant dense<0.000000e+00> : vector<19xf32>
    %612 = vector.multi_reduction <add>, %611, %cst_266 [1] : vector<19x32xf32> to vector<19xf32>
    %613 = vector.shape_cast %612 : vector<19xf32> to vector<19x1xf32>
    %cst_267 = arith.constant 3.200000e+01 : f32
    %614 = vector.broadcast %cst_267 : f32 to vector<19x1xf32>
    %615 = arith.divf %613, %614 : vector<19x1xf32>
    %616 = vector.broadcast %608 : vector<19x1xf32> to vector<19x32xf32>
    %617 = arith.subf %600, %616 : vector<19x32xf32>
    %cst_268 = arith.constant 9.99999974E-6 : f32
    %618 = vector.broadcast %cst_268 : f32 to vector<19x1xf32>
    %619 = arith.addf %615, %618 : vector<19x1xf32>
    %620 = math.rsqrt %619 : vector<19x1xf32>
    %621 = vector.broadcast %620 : vector<19x1xf32> to vector<19x32xf32>
    %622 = arith.mulf %617, %621 : vector<19x32xf32>
    %623 = vector.broadcast %602 : vector<1x32xf32> to vector<19x32xf32>
    %624 = arith.mulf %622, %623 : vector<19x32xf32>
    %625 = vector.broadcast %604 : vector<1x32xf32> to vector<19x32xf32>
    %626 = arith.addf %624, %625 : vector<19x32xf32>
    %627 = arith.truncf %626 : vector<19x32xf32> to vector<19x32xbf16>
    %c0_269 = arith.constant 0 : index
    %c0_270 = arith.constant 0 : index
    %c0_271 = arith.constant 0 : index
    %628 = vector.load %arg20[%c0_269, %c0_270, %c0_271] : memref<2x32x64xbf16, #tpu.memory_space<vmem>>, vector<1x32x64xbf16>
    %629 = vector.shape_cast %628 : vector<1x32x64xbf16> to vector<32x64xbf16>
    %cst_272 = arith.constant dense<0.000000e+00> : vector<19x64xf32>
    %630 = tpu.matmul %627, %629, %cst_272 {dimension_numbers = #tpu.dot_dimension_numbers<[1], [0], [0], [1], [0, 0, 1, 1], [], []>} : vector<19x32xbf16>, vector<32x64xbf16>, vector<19x64xf32> -> vector<19x64xf32>
    %c0_273 = arith.constant 0 : index
    %c0_274 = arith.constant 0 : index
    %c0_275 = arith.constant 0 : index
    %631 = vector.load %arg21[%c0_273, %c0_274, %c0_275] : memref<2x1x64xf32, #tpu.memory_space<vmem>>, vector<1x1x64xf32>
    %632 = vector.shape_cast %631 : vector<1x1x64xf32> to vector<1x64xf32>
    %633 = vector.broadcast %632 : vector<1x64xf32> to vector<19x64xf32>
    %634 = arith.addf %630, %633 : vector<19x64xf32>
    %cst_276 = arith.constant 0.000000e+00 : f32
    %635 = vector.broadcast %cst_276 : f32 to vector<19x64xf32>
    %636 = arith.maximumf %634, %635 : vector<19x64xf32>
    %637 = arith.truncf %636 : vector<19x64xf32> to vector<19x64xbf16>
    %c0_277 = arith.constant 0 : index
    %c0_278 = arith.constant 0 : index
    %c0_279 = arith.constant 0 : index
    %638 = vector.load %arg22[%c0_277, %c0_278, %c0_279] : memref<2x64x32xbf16, #tpu.memory_space<vmem>>, vector<1x64x32xbf16>
    %639 = vector.shape_cast %638 : vector<1x64x32xbf16> to vector<64x32xbf16>
    %cst_280 = arith.constant dense<0.000000e+00> : vector<19x32xf32>
    %640 = tpu.matmul %637, %639, %cst_280 {dimension_numbers = #tpu.dot_dimension_numbers<[1], [0], [0], [1], [0, 0, 1, 1], [], []>} : vector<19x64xbf16>, vector<64x32xbf16>, vector<19x32xf32> -> vector<19x32xf32>
    %c0_281 = arith.constant 0 : index
    %c0_282 = arith.constant 0 : index
    %c0_283 = arith.constant 0 : index
    %641 = vector.load %arg23[%c0_281, %c0_282, %c0_283] : memref<2x1x32xf32, #tpu.memory_space<vmem>>, vector<1x1x32xf32>
    %642 = vector.shape_cast %641 : vector<1x1x32xf32> to vector<1x32xf32>
    %643 = vector.broadcast %642 : vector<1x32xf32> to vector<19x32xf32>
    %644 = arith.addf %640, %643 : vector<19x32xf32>
    %645 = arith.addf %626, %644 : vector<19x32xf32>
    %c0_284 = arith.constant 0 : index
    %c0_285 = arith.constant 0 : index
    %c0_286 = arith.constant 0 : index
    %646 = vector.load %arg18[%c0_284, %c0_285, %c0_286] : memref<2x1x32xf32, #tpu.memory_space<vmem>>, vector<1x1x32xf32>
    %647 = vector.shape_cast %646 : vector<1x1x32xf32> to vector<1x32xf32>
    %c0_287 = arith.constant 0 : index
    %c0_288 = arith.constant 0 : index
    %c0_289 = arith.constant 0 : index
    %648 = vector.load %arg19[%c0_287, %c0_288, %c0_289] : memref<2x1x32xf32, #tpu.memory_space<vmem>>, vector<1x1x32xf32>
    %649 = vector.shape_cast %648 : vector<1x1x32xf32> to vector<1x32xf32>
    %cst_290 = arith.constant dense<0.000000e+00> : vector<19xf32>
    %650 = vector.multi_reduction <add>, %645, %cst_290 [1] : vector<19x32xf32> to vector<19xf32>
    %651 = vector.shape_cast %650 : vector<19xf32> to vector<19x1xf32>
    %cst_291 = arith.constant 3.200000e+01 : f32
    %652 = vector.broadcast %cst_291 : f32 to vector<19x1xf32>
    %653 = arith.divf %651, %652 : vector<19x1xf32>
    %654 = vector.broadcast %653 : vector<19x1xf32> to vector<19x32xf32>
    %655 = arith.subf %645, %654 : vector<19x32xf32>
    %656 = arith.mulf %655, %655 : vector<19x32xf32>
    %cst_292 = arith.constant dense<0.000000e+00> : vector<19xf32>
    %657 = vector.multi_reduction <add>, %656, %cst_292 [1] : vector<19x32xf32> to vector<19xf32>
    %658 = vector.shape_cast %657 : vector<19xf32> to vector<19x1xf32>
    %cst_293 = arith.constant 3.200000e+01 : f32
    %659 = vector.broadcast %cst_293 : f32 to vector<19x1xf32>
    %660 = arith.divf %658, %659 : vector<19x1xf32>
    %661 = vector.broadcast %653 : vector<19x1xf32> to vector<19x32xf32>
    %662 = arith.subf %645, %661 : vector<19x32xf32>
    %cst_294 = arith.constant 9.99999974E-6 : f32
    %663 = vector.broadcast %cst_294 : f32 to vector<19x1xf32>
    %664 = arith.addf %660, %663 : vector<19x1xf32>
    %665 = math.rsqrt %664 : vector<19x1xf32>
    %666 = vector.broadcast %665 : vector<19x1xf32> to vector<19x32xf32>
    %667 = arith.mulf %662, %666 : vector<19x32xf32>
    %668 = vector.broadcast %647 : vector<1x32xf32> to vector<19x32xf32>
    %669 = arith.mulf %667, %668 : vector<19x32xf32>
    %670 = vector.broadcast %649 : vector<1x32xf32> to vector<19x32xf32>
    %671 = arith.addf %669, %670 : vector<19x32xf32>
    %c1_295 = arith.constant 1 : index
    %c0_296 = arith.constant 0 : index
    %c0_297 = arith.constant 0 : index
    %672 = vector.load %arg25[%c1_295, %c0_296, %c0_297] : memref<2x19x32xf32, #tpu.memory_space<vmem>>, vector<1x19x32xf32>
    %673 = vector.shape_cast %672 : vector<1x19x32xf32> to vector<19x32xf32>
    %674 = arith.addf %671, %673 : vector<19x32xf32>
    %675 = arith.truncf %674 : vector<19x32xf32> to vector<19x32xbf16>
    %c1_298 = arith.constant 1 : index
    %c0_299 = arith.constant 0 : index
    %c0_300 = arith.constant 0 : index
    %676 = vector.load %arg10[%c1_298, %c0_299, %c0_300] : memref<2x32x64xbf16, #tpu.memory_space<vmem>>, vector<1x32x64xbf16>
    %677 = vector.shape_cast %676 : vector<1x32x64xbf16> to vector<32x64xbf16>
    %cst_301 = arith.constant dense<0.000000e+00> : vector<19x64xf32>
    %678 = tpu.matmul %675, %677, %cst_301 {dimension_numbers = #tpu.dot_dimension_numbers<[1], [0], [0], [1], [0, 0, 1, 1], [], []>} : vector<19x32xbf16>, vector<32x64xbf16>, vector<19x64xf32> -> vector<19x64xf32>
    %c1_302 = arith.constant 1 : index
    %c0_303 = arith.constant 0 : index
    %c0_304 = arith.constant 0 : index
    %679 = vector.load %arg11[%c1_302, %c0_303, %c0_304] : memref<2x1x64xf32, #tpu.memory_space<vmem>>, vector<1x1x64xf32>
    %680 = vector.shape_cast %679 : vector<1x1x64xf32> to vector<1x64xf32>
    %681 = vector.broadcast %680 : vector<1x64xf32> to vector<19x64xf32>
    %682 = arith.addf %678, %681 : vector<19x64xf32>
    %683 = arith.truncf %671 : vector<19x32xf32> to vector<19x32xbf16>
    %c1_305 = arith.constant 1 : index
    %c0_306 = arith.constant 0 : index
    %c0_307 = arith.constant 0 : index
    %684 = vector.load %arg12[%c1_305, %c0_306, %c0_307] : memref<2x32x32xbf16, #tpu.memory_space<vmem>>, vector<1x32x32xbf16>
    %685 = vector.shape_cast %684 : vector<1x32x32xbf16> to vector<32x32xbf16>
    %cst_308 = arith.constant dense<0.000000e+00> : vector<19x32xf32>
    %686 = tpu.matmul %683, %685, %cst_308 {dimension_numbers = #tpu.dot_dimension_numbers<[1], [0], [0], [1], [0, 0, 1, 1], [], []>} : vector<19x32xbf16>, vector<32x32xbf16>, vector<19x32xf32> -> vector<19x32xf32>
    %c1_309 = arith.constant 1 : index
    %c0_310 = arith.constant 0 : index
    %c0_311 = arith.constant 0 : index
    %687 = vector.load %arg13[%c1_309, %c0_310, %c0_311] : memref<2x1x32xf32, #tpu.memory_space<vmem>>, vector<1x1x32xf32>
    %688 = vector.shape_cast %687 : vector<1x1x32xf32> to vector<1x32xf32>
    %689 = vector.broadcast %688 : vector<1x32xf32> to vector<19x32xf32>
    %690 = arith.addf %686, %689 : vector<19x32xf32>
    %691 = vector.extract_strided_slice %682 {offsets = [0, 0], sizes = [19, 32], strides = [1, 1]} : vector<19x64xf32> to vector<19x32xf32>
    %692 = vector.extract_strided_slice %682 {offsets = [0, 32], sizes = [19, 32], strides = [1, 1]} : vector<19x64xf32> to vector<19x32xf32>
    %693 = tpu.transpose %692, [1, 0] : vector<19x32xf32> -> vector<32x19xf32>
    %694 = vector.extract_strided_slice %691 {offsets = [0, 0], sizes = [19, 8], strides = [1, 1]} : vector<19x32xf32> to vector<19x8xf32>
    %695 = arith.truncf %694 : vector<19x8xf32> to vector<19x8xbf16>
    %696 = vector.extract_strided_slice %693 {offsets = [0, 0], sizes = [8, 19], strides = [1, 1]} : vector<32x19xf32> to vector<8x19xf32>
    %697 = arith.truncf %696 : vector<8x19xf32> to vector<8x19xbf16>
    %cst_312 = arith.constant dense<0.000000e+00> : vector<19x19xf32>
    %698 = tpu.matmul %695, %697, %cst_312 {dimension_numbers = #tpu.dot_dimension_numbers<[1], [0], [0], [1], [0, 0, 1, 1], [], []>} : vector<19x8xbf16>, vector<8x19xbf16>, vector<19x19xf32> -> vector<19x19xf32>
    %cst_313 = arith.constant 0.353553385 : f32
    %699 = vector.broadcast %cst_313 : f32 to vector<19x19xf32>
    %700 = arith.mulf %698, %699 : vector<19x19xf32>
    %701 = vector.broadcast %476 : vector<1x19xf32> to vector<19x19xf32>
    %702 = arith.addf %700, %701 : vector<19x19xf32>
    %cst_314 = arith.constant dense<0xFF800000> : vector<19xf32>
    %703 = vector.multi_reduction <maximumf>, %702, %cst_314 [1] : vector<19x19xf32> to vector<19xf32>
    %704 = vector.shape_cast %703 : vector<19xf32> to vector<19x1xf32>
    %705 = vector.broadcast %704 : vector<19x1xf32> to vector<19x19xf32>
    %706 = arith.subf %702, %705 : vector<19x19xf32>
    %707 = math.exp %706 : vector<19x19xf32>
    %cst_315 = arith.constant dense<0.000000e+00> : vector<19xf32>
    %708 = vector.multi_reduction <add>, %707, %cst_315 [1] : vector<19x19xf32> to vector<19xf32>
    %709 = vector.shape_cast %708 : vector<19xf32> to vector<19x1xf32>
    %710 = tpu.reciprocal %709 {approx = true} : vector<19x1xf32> -> vector<19x1xf32>
    %711 = vector.broadcast %710 : vector<19x1xf32> to vector<19x19xf32>
    %712 = arith.mulf %707, %711 : vector<19x19xf32>
    %713 = arith.truncf %712 : vector<19x19xf32> to vector<19x19xbf16>
    %714 = vector.extract_strided_slice %690 {offsets = [0, 0], sizes = [19, 8], strides = [1, 1]} : vector<19x32xf32> to vector<19x8xf32>
    %715 = arith.truncf %714 : vector<19x8xf32> to vector<19x8xbf16>
    %cst_316 = arith.constant dense<0.000000e+00> : vector<19x8xf32>
    %716 = tpu.matmul %713, %715, %cst_316 {dimension_numbers = #tpu.dot_dimension_numbers<[1], [0], [0], [1], [0, 0, 1, 1], [], []>} : vector<19x19xbf16>, vector<19x8xbf16>, vector<19x8xf32> -> vector<19x8xf32>
    %717 = vector.extract_strided_slice %691 {offsets = [0, 8], sizes = [19, 8], strides = [1, 1]} : vector<19x32xf32> to vector<19x8xf32>
    %718 = arith.truncf %717 : vector<19x8xf32> to vector<19x8xbf16>
    %719 = vector.extract_strided_slice %693 {offsets = [8, 0], sizes = [8, 19], strides = [1, 1]} : vector<32x19xf32> to vector<8x19xf32>
    %720 = arith.truncf %719 : vector<8x19xf32> to vector<8x19xbf16>
    %cst_317 = arith.constant dense<0.000000e+00> : vector<19x19xf32>
    %721 = tpu.matmul %718, %720, %cst_317 {dimension_numbers = #tpu.dot_dimension_numbers<[1], [0], [0], [1], [0, 0, 1, 1], [], []>} : vector<19x8xbf16>, vector<8x19xbf16>, vector<19x19xf32> -> vector<19x19xf32>
    %cst_318 = arith.constant 0.353553385 : f32
    %722 = vector.broadcast %cst_318 : f32 to vector<19x19xf32>
    %723 = arith.mulf %721, %722 : vector<19x19xf32>
    %724 = vector.broadcast %476 : vector<1x19xf32> to vector<19x19xf32>
    %725 = arith.addf %723, %724 : vector<19x19xf32>
    %cst_319 = arith.constant dense<0xFF800000> : vector<19xf32>
    %726 = vector.multi_reduction <maximumf>, %725, %cst_319 [1] : vector<19x19xf32> to vector<19xf32>
    %727 = vector.shape_cast %726 : vector<19xf32> to vector<19x1xf32>
    %728 = vector.broadcast %727 : vector<19x1xf32> to vector<19x19xf32>
    %729 = arith.subf %725, %728 : vector<19x19xf32>
    %730 = math.exp %729 : vector<19x19xf32>
    %cst_320 = arith.constant dense<0.000000e+00> : vector<19xf32>
    %731 = vector.multi_reduction <add>, %730, %cst_320 [1] : vector<19x19xf32> to vector<19xf32>
    %732 = vector.shape_cast %731 : vector<19xf32> to vector<19x1xf32>
    %733 = tpu.reciprocal %732 {approx = true} : vector<19x1xf32> -> vector<19x1xf32>
    %734 = vector.broadcast %733 : vector<19x1xf32> to vector<19x19xf32>
    %735 = arith.mulf %730, %734 : vector<19x19xf32>
    %736 = arith.truncf %735 : vector<19x19xf32> to vector<19x19xbf16>
    %737 = vector.extract_strided_slice %690 {offsets = [0, 8], sizes = [19, 8], strides = [1, 1]} : vector<19x32xf32> to vector<19x8xf32>
    %738 = arith.truncf %737 : vector<19x8xf32> to vector<19x8xbf16>
    %cst_321 = arith.constant dense<0.000000e+00> : vector<19x8xf32>
    %739 = tpu.matmul %736, %738, %cst_321 {dimension_numbers = #tpu.dot_dimension_numbers<[1], [0], [0], [1], [0, 0, 1, 1], [], []>} : vector<19x19xbf16>, vector<19x8xbf16>, vector<19x8xf32> -> vector<19x8xf32>
    %740 = vector.extract_strided_slice %691 {offsets = [0, 16], sizes = [19, 8], strides = [1, 1]} : vector<19x32xf32> to vector<19x8xf32>
    %741 = arith.truncf %740 : vector<19x8xf32> to vector<19x8xbf16>
    %742 = vector.extract_strided_slice %693 {offsets = [16, 0], sizes = [8, 19], strides = [1, 1]} : vector<32x19xf32> to vector<8x19xf32>
    %743 = arith.truncf %742 : vector<8x19xf32> to vector<8x19xbf16>
    %cst_322 = arith.constant dense<0.000000e+00> : vector<19x19xf32>
    %744 = tpu.matmul %741, %743, %cst_322 {dimension_numbers = #tpu.dot_dimension_numbers<[1], [0], [0], [1], [0, 0, 1, 1], [], []>} : vector<19x8xbf16>, vector<8x19xbf16>, vector<19x19xf32> -> vector<19x19xf32>
    %cst_323 = arith.constant 0.353553385 : f32
    %745 = vector.broadcast %cst_323 : f32 to vector<19x19xf32>
    %746 = arith.mulf %744, %745 : vector<19x19xf32>
    %747 = vector.broadcast %476 : vector<1x19xf32> to vector<19x19xf32>
    %748 = arith.addf %746, %747 : vector<19x19xf32>
    %cst_324 = arith.constant dense<0xFF800000> : vector<19xf32>
    %749 = vector.multi_reduction <maximumf>, %748, %cst_324 [1] : vector<19x19xf32> to vector<19xf32>
    %750 = vector.shape_cast %749 : vector<19xf32> to vector<19x1xf32>
    %751 = vector.broadcast %750 : vector<19x1xf32> to vector<19x19xf32>
    %752 = arith.subf %748, %751 : vector<19x19xf32>
    %753 = math.exp %752 : vector<19x19xf32>
    %cst_325 = arith.constant dense<0.000000e+00> : vector<19xf32>
    %754 = vector.multi_reduction <add>, %753, %cst_325 [1] : vector<19x19xf32> to vector<19xf32>
    %755 = vector.shape_cast %754 : vector<19xf32> to vector<19x1xf32>
    %756 = tpu.reciprocal %755 {approx = true} : vector<19x1xf32> -> vector<19x1xf32>
    %757 = vector.broadcast %756 : vector<19x1xf32> to vector<19x19xf32>
    %758 = arith.mulf %753, %757 : vector<19x19xf32>
    %759 = arith.truncf %758 : vector<19x19xf32> to vector<19x19xbf16>
    %760 = vector.extract_strided_slice %690 {offsets = [0, 16], sizes = [19, 8], strides = [1, 1]} : vector<19x32xf32> to vector<19x8xf32>
    %761 = arith.truncf %760 : vector<19x8xf32> to vector<19x8xbf16>
    %cst_326 = arith.constant dense<0.000000e+00> : vector<19x8xf32>
    %762 = tpu.matmul %759, %761, %cst_326 {dimension_numbers = #tpu.dot_dimension_numbers<[1], [0], [0], [1], [0, 0, 1, 1], [], []>} : vector<19x19xbf16>, vector<19x8xbf16>, vector<19x8xf32> -> vector<19x8xf32>
    %763 = vector.extract_strided_slice %691 {offsets = [0, 24], sizes = [19, 8], strides = [1, 1]} : vector<19x32xf32> to vector<19x8xf32>
    %764 = arith.truncf %763 : vector<19x8xf32> to vector<19x8xbf16>
    %765 = vector.extract_strided_slice %693 {offsets = [24, 0], sizes = [8, 19], strides = [1, 1]} : vector<32x19xf32> to vector<8x19xf32>
    %766 = arith.truncf %765 : vector<8x19xf32> to vector<8x19xbf16>
    %cst_327 = arith.constant dense<0.000000e+00> : vector<19x19xf32>
    %767 = tpu.matmul %764, %766, %cst_327 {dimension_numbers = #tpu.dot_dimension_numbers<[1], [0], [0], [1], [0, 0, 1, 1], [], []>} : vector<19x8xbf16>, vector<8x19xbf16>, vector<19x19xf32> -> vector<19x19xf32>
    %cst_328 = arith.constant 0.353553385 : f32
    %768 = vector.broadcast %cst_328 : f32 to vector<19x19xf32>
    %769 = arith.mulf %767, %768 : vector<19x19xf32>
    %770 = vector.broadcast %476 : vector<1x19xf32> to vector<19x19xf32>
    %771 = arith.addf %769, %770 : vector<19x19xf32>
    %cst_329 = arith.constant dense<0xFF800000> : vector<19xf32>
    %772 = vector.multi_reduction <maximumf>, %771, %cst_329 [1] : vector<19x19xf32> to vector<19xf32>
    %773 = vector.shape_cast %772 : vector<19xf32> to vector<19x1xf32>
    %774 = vector.broadcast %773 : vector<19x1xf32> to vector<19x19xf32>
    %775 = arith.subf %771, %774 : vector<19x19xf32>
    %776 = math.exp %775 : vector<19x19xf32>
    %cst_330 = arith.constant dense<0.000000e+00> : vector<19xf32>
    %777 = vector.multi_reduction <add>, %776, %cst_330 [1] : vector<19x19xf32> to vector<19xf32>
    %778 = vector.shape_cast %777 : vector<19xf32> to vector<19x1xf32>
    %779 = tpu.reciprocal %778 {approx = true} : vector<19x1xf32> -> vector<19x1xf32>
    %780 = vector.broadcast %779 : vector<19x1xf32> to vector<19x19xf32>
    %781 = arith.mulf %776, %780 : vector<19x19xf32>
    %782 = arith.truncf %781 : vector<19x19xf32> to vector<19x19xbf16>
    %783 = vector.extract_strided_slice %690 {offsets = [0, 24], sizes = [19, 8], strides = [1, 1]} : vector<19x32xf32> to vector<19x8xf32>
    %784 = arith.truncf %783 : vector<19x8xf32> to vector<19x8xbf16>
    %cst_331 = arith.constant dense<0.000000e+00> : vector<19x8xf32>
    %785 = tpu.matmul %782, %784, %cst_331 {dimension_numbers = #tpu.dot_dimension_numbers<[1], [0], [0], [1], [0, 0, 1, 1], [], []>} : vector<19x19xbf16>, vector<19x8xbf16>, vector<19x8xf32> -> vector<19x8xf32>
    %786 = tpu.concatenate %716, %739, %762, %785 in 1 : vector<19x8xf32>, vector<19x8xf32>, vector<19x8xf32>, vector<19x8xf32> -> vector<19x32xf32>
    %787 = arith.truncf %786 : vector<19x32xf32> to vector<19x32xbf16>
    %c1_332 = arith.constant 1 : index
    %c0_333 = arith.constant 0 : index
    %c0_334 = arith.constant 0 : index
    %788 = vector.load %arg14[%c1_332, %c0_333, %c0_334] : memref<2x32x32xbf16, #tpu.memory_space<vmem>>, vector<1x32x32xbf16>
    %789 = vector.shape_cast %788 : vector<1x32x32xbf16> to vector<32x32xbf16>
    %cst_335 = arith.constant dense<0.000000e+00> : vector<19x32xf32>
    %790 = tpu.matmul %787, %789, %cst_335 {dimension_numbers = #tpu.dot_dimension_numbers<[1], [0], [0], [1], [0, 0, 1, 1], [], []>} : vector<19x32xbf16>, vector<32x32xbf16>, vector<19x32xf32> -> vector<19x32xf32>
    %c1_336 = arith.constant 1 : index
    %c0_337 = arith.constant 0 : index
    %c0_338 = arith.constant 0 : index
    %791 = vector.load %arg15[%c1_336, %c0_337, %c0_338] : memref<2x1x32xf32, #tpu.memory_space<vmem>>, vector<1x1x32xf32>
    %792 = vector.shape_cast %791 : vector<1x1x32xf32> to vector<1x32xf32>
    %793 = vector.broadcast %792 : vector<1x32xf32> to vector<19x32xf32>
    %794 = arith.addf %790, %793 : vector<19x32xf32>
    %795 = arith.addf %671, %794 : vector<19x32xf32>
    %c1_339 = arith.constant 1 : index
    %c0_340 = arith.constant 0 : index
    %c0_341 = arith.constant 0 : index
    %796 = vector.load %arg16[%c1_339, %c0_340, %c0_341] : memref<2x1x32xf32, #tpu.memory_space<vmem>>, vector<1x1x32xf32>
    %797 = vector.shape_cast %796 : vector<1x1x32xf32> to vector<1x32xf32>
    %c1_342 = arith.constant 1 : index
    %c0_343 = arith.constant 0 : index
    %c0_344 = arith.constant 0 : index
    %798 = vector.load %arg17[%c1_342, %c0_343, %c0_344] : memref<2x1x32xf32, #tpu.memory_space<vmem>>, vector<1x1x32xf32>
    %799 = vector.shape_cast %798 : vector<1x1x32xf32> to vector<1x32xf32>
    %cst_345 = arith.constant dense<0.000000e+00> : vector<19xf32>
    %800 = vector.multi_reduction <add>, %795, %cst_345 [1] : vector<19x32xf32> to vector<19xf32>
    %801 = vector.shape_cast %800 : vector<19xf32> to vector<19x1xf32>
    %cst_346 = arith.constant 3.200000e+01 : f32
    %802 = vector.broadcast %cst_346 : f32 to vector<19x1xf32>
    %803 = arith.divf %801, %802 : vector<19x1xf32>
    %804 = vector.broadcast %803 : vector<19x1xf32> to vector<19x32xf32>
    %805 = arith.subf %795, %804 : vector<19x32xf32>
    %806 = arith.mulf %805, %805 : vector<19x32xf32>
    %cst_347 = arith.constant dense<0.000000e+00> : vector<19xf32>
    %807 = vector.multi_reduction <add>, %806, %cst_347 [1] : vector<19x32xf32> to vector<19xf32>
    %808 = vector.shape_cast %807 : vector<19xf32> to vector<19x1xf32>
    %cst_348 = arith.constant 3.200000e+01 : f32
    %809 = vector.broadcast %cst_348 : f32 to vector<19x1xf32>
    %810 = arith.divf %808, %809 : vector<19x1xf32>
    %811 = vector.broadcast %803 : vector<19x1xf32> to vector<19x32xf32>
    %812 = arith.subf %795, %811 : vector<19x32xf32>
    %cst_349 = arith.constant 9.99999974E-6 : f32
    %813 = vector.broadcast %cst_349 : f32 to vector<19x1xf32>
    %814 = arith.addf %810, %813 : vector<19x1xf32>
    %815 = math.rsqrt %814 : vector<19x1xf32>
    %816 = vector.broadcast %815 : vector<19x1xf32> to vector<19x32xf32>
    %817 = arith.mulf %812, %816 : vector<19x32xf32>
    %818 = vector.broadcast %797 : vector<1x32xf32> to vector<19x32xf32>
    %819 = arith.mulf %817, %818 : vector<19x32xf32>
    %820 = vector.broadcast %799 : vector<1x32xf32> to vector<19x32xf32>
    %821 = arith.addf %819, %820 : vector<19x32xf32>
    %822 = arith.truncf %821 : vector<19x32xf32> to vector<19x32xbf16>
    %c1_350 = arith.constant 1 : index
    %c0_351 = arith.constant 0 : index
    %c0_352 = arith.constant 0 : index
    %823 = vector.load %arg20[%c1_350, %c0_351, %c0_352] : memref<2x32x64xbf16, #tpu.memory_space<vmem>>, vector<1x32x64xbf16>
    %824 = vector.shape_cast %823 : vector<1x32x64xbf16> to vector<32x64xbf16>
    %cst_353 = arith.constant dense<0.000000e+00> : vector<19x64xf32>
    %825 = tpu.matmul %822, %824, %cst_353 {dimension_numbers = #tpu.dot_dimension_numbers<[1], [0], [0], [1], [0, 0, 1, 1], [], []>} : vector<19x32xbf16>, vector<32x64xbf16>, vector<19x64xf32> -> vector<19x64xf32>
    %c1_354 = arith.constant 1 : index
    %c0_355 = arith.constant 0 : index
    %c0_356 = arith.constant 0 : index
    %826 = vector.load %arg21[%c1_354, %c0_355, %c0_356] : memref<2x1x64xf32, #tpu.memory_space<vmem>>, vector<1x1x64xf32>
    %827 = vector.shape_cast %826 : vector<1x1x64xf32> to vector<1x64xf32>
    %828 = vector.broadcast %827 : vector<1x64xf32> to vector<19x64xf32>
    %829 = arith.addf %825, %828 : vector<19x64xf32>
    %cst_357 = arith.constant 0.000000e+00 : f32
    %830 = vector.broadcast %cst_357 : f32 to vector<19x64xf32>
    %831 = arith.maximumf %829, %830 : vector<19x64xf32>
    %832 = arith.truncf %831 : vector<19x64xf32> to vector<19x64xbf16>
    %c1_358 = arith.constant 1 : index
    %c0_359 = arith.constant 0 : index
    %c0_360 = arith.constant 0 : index
    %833 = vector.load %arg22[%c1_358, %c0_359, %c0_360] : memref<2x64x32xbf16, #tpu.memory_space<vmem>>, vector<1x64x32xbf16>
    %834 = vector.shape_cast %833 : vector<1x64x32xbf16> to vector<64x32xbf16>
    %cst_361 = arith.constant dense<0.000000e+00> : vector<19x32xf32>
    %835 = tpu.matmul %832, %834, %cst_361 {dimension_numbers = #tpu.dot_dimension_numbers<[1], [0], [0], [1], [0, 0, 1, 1], [], []>} : vector<19x64xbf16>, vector<64x32xbf16>, vector<19x32xf32> -> vector<19x32xf32>
    %c1_362 = arith.constant 1 : index
    %c0_363 = arith.constant 0 : index
    %c0_364 = arith.constant 0 : index
    %836 = vector.load %arg23[%c1_362, %c0_363, %c0_364] : memref<2x1x32xf32, #tpu.memory_space<vmem>>, vector<1x1x32xf32>
    %837 = vector.shape_cast %836 : vector<1x1x32xf32> to vector<1x32xf32>
    %838 = vector.broadcast %837 : vector<1x32xf32> to vector<19x32xf32>
    %839 = arith.addf %835, %838 : vector<19x32xf32>
    %840 = arith.addf %821, %839 : vector<19x32xf32>
    %c1_365 = arith.constant 1 : index
    %c0_366 = arith.constant 0 : index
    %c0_367 = arith.constant 0 : index
    %841 = vector.load %arg18[%c1_365, %c0_366, %c0_367] : memref<2x1x32xf32, #tpu.memory_space<vmem>>, vector<1x1x32xf32>
    %842 = vector.shape_cast %841 : vector<1x1x32xf32> to vector<1x32xf32>
    %c1_368 = arith.constant 1 : index
    %c0_369 = arith.constant 0 : index
    %c0_370 = arith.constant 0 : index
    %843 = vector.load %arg19[%c1_368, %c0_369, %c0_370] : memref<2x1x32xf32, #tpu.memory_space<vmem>>, vector<1x1x32xf32>
    %844 = vector.shape_cast %843 : vector<1x1x32xf32> to vector<1x32xf32>
    %cst_371 = arith.constant dense<0.000000e+00> : vector<19xf32>
    %845 = vector.multi_reduction <add>, %840, %cst_371 [1] : vector<19x32xf32> to vector<19xf32>
    %846 = vector.shape_cast %845 : vector<19xf32> to vector<19x1xf32>
    %cst_372 = arith.constant 3.200000e+01 : f32
    %847 = vector.broadcast %cst_372 : f32 to vector<19x1xf32>
    %848 = arith.divf %846, %847 : vector<19x1xf32>
    %849 = vector.broadcast %848 : vector<19x1xf32> to vector<19x32xf32>
    %850 = arith.subf %840, %849 : vector<19x32xf32>
    %851 = arith.mulf %850, %850 : vector<19x32xf32>
    %cst_373 = arith.constant dense<0.000000e+00> : vector<19xf32>
    %852 = vector.multi_reduction <add>, %851, %cst_373 [1] : vector<19x32xf32> to vector<19xf32>
    %853 = vector.shape_cast %852 : vector<19xf32> to vector<19x1xf32>
    %cst_374 = arith.constant 3.200000e+01 : f32
    %854 = vector.broadcast %cst_374 : f32 to vector<19x1xf32>
    %855 = arith.divf %853, %854 : vector<19x1xf32>
    %856 = vector.broadcast %848 : vector<19x1xf32> to vector<19x32xf32>
    %857 = arith.subf %840, %856 : vector<19x32xf32>
    %cst_375 = arith.constant 9.99999974E-6 : f32
    %858 = vector.broadcast %cst_375 : f32 to vector<19x1xf32>
    %859 = arith.addf %855, %858 : vector<19x1xf32>
    %860 = math.rsqrt %859 : vector<19x1xf32>
    %861 = vector.broadcast %860 : vector<19x1xf32> to vector<19x32xf32>
    %862 = arith.mulf %857, %861 : vector<19x32xf32>
    %863 = vector.broadcast %842 : vector<1x32xf32> to vector<19x32xf32>
    %864 = arith.mulf %862, %863 : vector<19x32xf32>
    %865 = vector.broadcast %844 : vector<1x32xf32> to vector<19x32xf32>
    %866 = arith.addf %864, %865 : vector<19x32xf32>
    %c1_376 = arith.constant 1 : index
    %c0_377 = arith.constant 0 : index
    %c0_378 = arith.constant 0 : index
    %867 = vector.load %arg24[%c1_376, %c0_377, %c0_378] : memref<2x19x32xf32, #tpu.memory_space<vmem>>, vector<1x19x32xf32>
    %868 = vector.shape_cast %867 : vector<1x19x32xf32> to vector<19x32xf32>
    %869 = vector.shape_cast %866 : vector<19x32xf32> to vector<1x19x32xf32>
    tpu.vector_store %arg24[%c1_376, %c0_377, %c0_378], %869 {strides = array<i32>} : memref<2x19x32xf32, #tpu.memory_space<vmem>>, vector<1x19x32xf32>,
    return
  }
  func.func @transform_0(%arg0: i32) -> (i32, i32, i32) {
    %c0_i32 = arith.constant 0 : i32
    %c0_i32_0 = arith.constant 0 : i32
    %c0_i32_1 = arith.constant 0 : i32
    return %arg0, %c0_i32, %c0_i32_0 : i32, i32, i32
  }
  func.func @transform_1(%arg0: i32) -> (i32, i32, i32) {
    %c0_i32 = arith.constant 0 : i32
    %c0_i32_0 = arith.constant 0 : i32
    %c0_i32_1 = arith.constant 0 : i32
    return %arg0, %c0_i32, %c0_i32_0 : i32, i32, i32
  }
  func.func @transform_2(%arg0: i32) -> (i32, i32, i32) {
    %c0_i32 = arith.constant 0 : i32
    %c0_i32_0 = arith.constant 0 : i32
    %c0_i32_1 = arith.constant 0 : i32
    return %arg0, %c0_i32, %c0_i32_0 : i32, i32, i32
  }
  func.func @transform_3(%arg0: i32) -> (i32, i32, i32) {
    %c0_i32 = arith.constant 0 : i32
    %c0_i32_0 = arith.constant 0 : i32
    %c0_i32_1 = arith.constant 0 : i32
    return %arg0, %c0_i32, %c0_i32_0 : i32, i32, i32
  }
  func.func @transform_4(%arg0: i32) -> (i32, i32, i32) {
    %c0_i32 = arith.constant 0 : i32
    %c0_i32_0 = arith.constant 0 : i32
    %c0_i32_1 = arith.constant 0 : i32
    return %arg0, %c0_i32, %c0_i32_0 : i32, i32, i32
  }
  func.func @transform_5(%arg0: i32) -> (i32, i32) {
    %c0_i32 = arith.constant 0 : i32
    %c0_i32_0 = arith.constant 0 : i32
    %c0_i32_1 = arith.constant 0 : i32
    return %c0_i32, %c0_i32_0 : i32, i32
  }
  func.func @transform_6(%arg0: i32) -> (i32, i32) {
    %c0_i32 = arith.constant 0 : i32
    %c0_i32_0 = arith.constant 0 : i32
    %c0_i32_1 = arith.constant 0 : i32
    return %c0_i32, %c0_i32_0 : i32, i32
  }
  func.func @transform_7(%arg0: i32) -> (i32, i32) {
    %c0_i32 = arith.constant 0 : i32
    %c0_i32_0 = arith.constant 0 : i32
    %c0_i32_1 = arith.constant 0 : i32
    return %c0_i32, %c0_i32_0 : i32, i32
  }
  func.func @transform_8(%arg0: i32) -> (i32, i32) {
    %c0_i32 = arith.constant 0 : i32
    %c0_i32_0 = arith.constant 0 : i32
    %c0_i32_1 = arith.constant 0 : i32
    return %c0_i32, %c0_i32_0 : i32, i32
  }
  func.func @transform_9(%arg0: i32) -> (i32, i32, i32) {
    %c0_i32 = arith.constant 0 : i32
    %c0_i32_0 = arith.constant 0 : i32
    %c0_i32_1 = arith.constant 0 : i32
    %c0_i32_2 = arith.constant 0 : i32
    return %c0_i32, %c0_i32_0, %c0_i32_1 : i32, i32, i32
  }
  func.func @transform_10(%arg0: i32) -> (i32, i32, i32) {
    %c0_i32 = arith.constant 0 : i32
    %c0_i32_0 = arith.constant 0 : i32
    %c0_i32_1 = arith.constant 0 : i32
    %c0_i32_2 = arith.constant 0 : i32
    return %c0_i32, %c0_i32_0, %c0_i32_1 : i32, i32, i32
  }
  func.func @transform_11(%arg0: i32) -> (i32, i32, i32) {
    %c0_i32 = arith.constant 0 : i32
    %c0_i32_0 = arith.constant 0 : i32
    %c0_i32_1 = arith.constant 0 : i32
    %c0_i32_2 = arith.constant 0 : i32
    return %c0_i32, %c0_i32_0, %c0_i32_1 : i32, i32, i32
  }
  func.func @transform_12(%arg0: i32) -> (i32, i32, i32) {
    %c0_i32 = arith.constant 0 : i32
    %c0_i32_0 = arith.constant 0 : i32
    %c0_i32_1 = arith.constant 0 : i32
    %c0_i32_2 = arith.constant 0 : i32
    return %c0_i32, %c0_i32_0, %c0_i32_1 : i32, i32, i32
  }
  func.func @transform_13(%arg0: i32) -> (i32, i32, i32) {
    %c0_i32 = arith.constant 0 : i32
    %c0_i32_0 = arith.constant 0 : i32
    %c0_i32_1 = arith.constant 0 : i32
    %c0_i32_2 = arith.constant 0 : i32
    return %c0_i32, %c0_i32_0, %c0_i32_1 : i32, i32, i32
  }
  func.func @transform_14(%arg0: i32) -> (i32, i32, i32) {
    %c0_i32 = arith.constant 0 : i32
    %c0_i32_0 = arith.constant 0 : i32
    %c0_i32_1 = arith.constant 0 : i32
    %c0_i32_2 = arith.constant 0 : i32
    return %c0_i32, %c0_i32_0, %c0_i32_1 : i32, i32, i32
  }
  func.func @transform_15(%arg0: i32) -> (i32, i32, i32) {
    %c0_i32 = arith.constant 0 : i32
    %c0_i32_0 = arith.constant 0 : i32
    %c0_i32_1 = arith.constant 0 : i32
    %c0_i32_2 = arith.constant 0 : i32
    return %c0_i32, %c0_i32_0, %c0_i32_1 : i32, i32, i32
  }
  func.func @transform_16(%arg0: i32) -> (i32, i32, i32) {
    %c0_i32 = arith.constant 0 : i32
    %c0_i32_0 = arith.constant 0 : i32
    %c0_i32_1 = arith.constant 0 : i32
    %c0_i32_2 = arith.constant 0 : i32
    return %c0_i32, %c0_i32_0, %c0_i32_1 : i32, i32, i32
  }
  func.func @transform_17(%arg0: i32) -> (i32, i32, i32) {
    %c0_i32 = arith.constant 0 : i32
    %c0_i32_0 = arith.constant 0 : i32
    %c0_i32_1 = arith.constant 0 : i32
    %c0_i32_2 = arith.constant 0 : i32
    return %c0_i32, %c0_i32_0, %c0_i32_1 : i32, i32, i32
  }
  func.func @transform_18(%arg0: i32) -> (i32, i32, i32) {
    %c0_i32 = arith.constant 0 : i32
    %c0_i32_0 = arith.constant 0 : i32
    %c0_i32_1 = arith.constant 0 : i32
    %c0_i32_2 = arith.constant 0 : i32
    return %c0_i32, %c0_i32_0, %c0_i32_1 : i32, i32, i32
  }
  func.func @transform_19(%arg0: i32) -> (i32, i32, i32) {
    %c0_i32 = arith.constant 0 : i32
    %c0_i32_0 = arith.constant 0 : i32
    %c0_i32_1 = arith.constant 0 : i32
    %c0_i32_2 = arith.constant 0 : i32
    return %c0_i32, %c0_i32_0, %c0_i32_1 : i32, i32, i32
  }
  func.func @transform_20(%arg0: i32) -> (i32, i32, i32) {
    %c0_i32 = arith.constant 0 : i32
    %c0_i32_0 = arith.constant 0 : i32
    %c0_i32_1 = arith.constant 0 : i32
    %c0_i32_2 = arith.constant 0 : i32
    return %c0_i32, %c0_i32_0, %c0_i32_1 : i32, i32, i32
  }
  func.func @transform_21(%arg0: i32) -> (i32, i32, i32) {
    %c0_i32 = arith.constant 0 : i32
    %c0_i32_0 = arith.constant 0 : i32
    %c0_i32_1 = arith.constant 0 : i32
    %c0_i32_2 = arith.constant 0 : i32
    return %c0_i32, %c0_i32_0, %c0_i32_1 : i32, i32, i32
  }
  func.func @transform_22(%arg0: i32) -> (i32, i32, i32) {
    %c0_i32 = arith.constant 0 : i32
    %c0_i32_0 = arith.constant 0 : i32
    %c0_i32_1 = arith.constant 0 : i32
    %c0_i32_2 = arith.constant 0 : i32
    return %c0_i32, %c0_i32_0, %c0_i32_1 : i32, i32, i32
  }
  func.func @transform_23(%arg0: i32) -> (i32, i32, i32) {
    %c0_i32 = arith.constant 0 : i32
    %c0_i32_0 = arith.constant 0 : i32
    %c0_i32_1 = arith.constant 0 : i32
    return %arg0, %c0_i32, %c0_i32_0 : i32, i32, i32
  }
  func.func @transform_24(%arg0: i32) -> (i32, i32, i32) {
    %c0_i32 = arith.constant 0 : i32
    %c0_i32_0 = arith.constant 0 : i32
    %c0_i32_1 = arith.constant 0 : i32
    return %arg0, %c0_i32, %c0_i32_0 : i32, i32, i32
  }
}

</mosaic_0001>

<llo_original>
// kernel: tpu_custom_call.1
$region0: #{tpu_custom_call.1}
  #allocation0 [shape = 'u32[]', space=smem, size = 0x4, offset = 0x4, fixed_abs, tag = 'smem constant byte address 0x4 - core index']
  #allocation1 [shape = 'u32[72,128]{1,0:T(1,128)}', space=vmem, size = 0x9000, scoped, tag = 'internal scratch']
  %s0 = inlined_call_operand.vmem [shape: s32[2,10,1], index: 0, kind: input, shape index: {}]
  %s1 = inlined_call_operand.vmem [shape: s32[2,8,1], index: 1, kind: input, shape index: {}]
  %s2 = inlined_call_operand.vmem [shape: s32[2,8,1], index: 2, kind: input, shape index: {}]
  %s3 = inlined_call_operand.vmem [shape: s32[2,8,1], index: 3, kind: input, shape index: {}]
  %s4 = inlined_call_operand.vmem [shape: f32[2,1,19], index: 4, kind: input, shape index: {}]
  %s5 = inlined_call_operand.vmem [shape: f32[1,32], index: 5, kind: input, shape index: {}]
  %s6 = inlined_call_operand.vmem [shape: f32[152,32], index: 6, kind: input, shape index: {}]
  %s7 = inlined_call_operand.vmem [shape: f32[52,32], index: 7, kind: input, shape index: {}]
  %s8 = inlined_call_operand.vmem [shape: f32[10,32], index: 8, kind: input, shape index: {}]
  %s9 = inlined_call_operand.vmem [shape: bf16[2,32,64], index: 9, kind: input, shape index: {}]
  %s10 = inlined_call_operand.vmem [shape: f32[2,1,64], index: 10, kind: input, shape index: {}]
  %s11 = inlined_call_operand.vmem [shape: bf16[2,32,32], index: 11, kind: input, shape index: {}]
  %s12 = inlined_call_operand.vmem [shape: f32[2,1,32], index: 12, kind: input, shape index: {}]
  %s13 = inlined_call_operand.vmem [shape: bf16[2,32,32], index: 13, kind: input, shape index: {}]
  %s14 = inlined_call_operand.vmem [shape: f32[2,1,32], index: 14, kind: input, shape index: {}]
  %s15 = inlined_call_operand.vmem [shape: f32[2,1,32], index: 15, kind: input, shape index: {}]
  %s16 = inlined_call_operand.vmem [shape: f32[2,1,32], index: 16, kind: input, shape index: {}]
  %s17 = inlined_call_operand.vmem [shape: f32[2,1,32], index: 17, kind: input, shape index: {}]
  %s18 = inlined_call_operand.vmem [shape: f32[2,1,32], index: 18, kind: input, shape index: {}]
  %s19 = inlined_call_operand.vmem [shape: bf16[2,32,64], index: 19, kind: input, shape index: {}]
  %s20 = inlined_call_operand.vmem [shape: f32[2,1,64], index: 20, kind: input, shape index: {}]
  %s21 = inlined_call_operand.vmem [shape: bf16[2,64,32], index: 21, kind: input, shape index: {}]
  %s22 = inlined_call_operand.vmem [shape: f32[2,1,32], index: 22, kind: input, shape index: {}]
  %s23 = inlined_call_operand.vmem [shape: f32[2,19,32], index: 23, kind: output, shape index: {0}]
  %s24 = inlined_call_operand.vmem [shape: f32[2,19,32], index: 24, kind: output, shape index: {1}]
  %25 = xla_tuple %s23, %s24
  %s26 = sld [smem:[#allocation0]]
  $region110: #{tpu_custom_call.1} parent=0
    _
  %s28 = ssub.s32 1, %s26
  %s29 = scalar_select 0, %s28, %s26
  // Predicated region
  $region2: #{tpu_custom_call.1} parent=0 // pred_check
    _
  $region3: #{tpu_custom_call.1} parent=0 // pred_check_branch
    %31 = sbr.rel (0) target = $region5
  $region4: #{tpu_custom_call.1} parent=0 // pred_region
    _
  $region5: #{tpu_custom_call.1} parent=0 // pred_fallthru
    _
  // Predicated region
  $region6: #{tpu_custom_call.1} parent=0 // pred_check
    _
  $region7: #{tpu_custom_call.1} parent=0 // pred_check_branch
    %33 = sbr.rel (0) target = $region9
  $region8: #{tpu_custom_call.1} parent=0 // pred_region
    _
  $region9: #{tpu_custom_call.1} parent=0 // pred_fallthru
    _
  // Predicated region
  $region10: #{tpu_custom_call.1} parent=0 // pred_check
    _
  $region11: #{tpu_custom_call.1} parent=0 // pred_check_branch
    %35 = sbr.rel (0) target = $region13
  $region12: #{tpu_custom_call.1} parent=0 // pred_region
    _
  $region13: #{tpu_custom_call.1} parent=0 // pred_fallthru
    _
  // Predicated region
  $region14: #{tpu_custom_call.1} parent=0 // pred_check
    _
  $region15: #{tpu_custom_call.1} parent=0 // pred_check_branch
    %37 = sbr.rel (0) target = $region17
  $region16: #{tpu_custom_call.1} parent=0 // pred_region
    _
  $region17: #{tpu_custom_call.1} parent=0 // pred_fallthru
    _
  // Predicated region
  $region18: #{tpu_custom_call.1} parent=0 // pred_check
    _
  $region19: #{tpu_custom_call.1} parent=0 // pred_check_branch
    %39 = sbr.rel (0) target = $region21
  $region20: #{tpu_custom_call.1} parent=0 // pred_region
    _
  $region21: #{tpu_custom_call.1} parent=0 // pred_fallthru
    _
  // Predicated region
  $region22: #{tpu_custom_call.1} parent=0 // pred_check
    _
  $region23: #{tpu_custom_call.1} parent=0 // pred_check_branch
    %41 = sbr.rel (0) target = $region25
  $region24: #{tpu_custom_call.1} parent=0 // pred_region
    _
  $region25: #{tpu_custom_call.1} parent=0 // pred_fallthru
    _
  // Predicated region
  $region26: #{tpu_custom_call.1} parent=0 // pred_check
    _
  $region27: #{tpu_custom_call.1} parent=0 // pred_check_branch
    %43 = sbr.rel (0) target = $region29
  $region28: #{tpu_custom_call.1} parent=0 // pred_region
    _
  $region29: #{tpu_custom_call.1} parent=0 // pred_fallthru
    _
  // Predicated region
  $region30: #{tpu_custom_call.1} parent=0 // pred_check
    _
  $region31: #{tpu_custom_call.1} parent=0 // pred_check_branch
    %45 = sbr.rel (0) target = $region33
  $region32: #{tpu_custom_call.1} parent=0 // pred_region
    _
  $region33: #{tpu_custom_call.1} parent=0 // pred_fallthru
    _
  // Predicated region
  $region34: #{tpu_custom_call.1} parent=0 // pred_check
    _
  $region35: #{tpu_custom_call.1} parent=0 // pred_check_branch
    %47 = sbr.rel (0) target = $region37
  $region36: #{tpu_custom_call.1} parent=0 // pred_region
    _
  $region37: #{tpu_custom_call.1} parent=0 // pred_fallthru
    _
  // Predicated region
  $region38: #{tpu_custom_call.1} parent=0 // pred_check
    _
  $region39: #{tpu_custom_call.1} parent=0 // pred_check_branch
    %49 = sbr.rel (0) target = $region41
  $region40: #{tpu_custom_call.1} parent=0 // pred_region
    _
  $region41: #{tpu_custom_call.1} parent=0 // pred_fallthru
    _
  // Predicated region
  $region42: #{tpu_custom_call.1} parent=0 // pred_check
    _
  $region43: #{tpu_custom_call.1} parent=0 // pred_check_branch
    %51 = sbr.rel (0) target = $region45
  $region44: #{tpu_custom_call.1} parent=0 // pred_region
    _
  $region45: #{tpu_custom_call.1} parent=0 // pred_fallthru
    _
  // Predicated region
  $region46: #{tpu_custom_call.1} parent=0 // pred_check
    _
  $region47: #{tpu_custom_call.1} parent=0 // pred_check_branch
    %53 = sbr.rel (0) target = $region49
  $region48: #{tpu_custom_call.1} parent=0 // pred_region
    _
  $region49: #{tpu_custom_call.1} parent=0 // pred_fallthru
    _
  // Predicated region
  $region50: #{tpu_custom_call.1} parent=0 // pred_check
    _
  $region51: #{tpu_custom_call.1} parent=0 // pred_check_branch
    %55 = sbr.rel (0) target = $region53
  $region52: #{tpu_custom_call.1} parent=0 // pred_region
    _
  $region53: #{tpu_custom_call.1} parent=0 // pred_fallthru
    _
  // Predicated region
  $region54: #{tpu_custom_call.1} parent=0 // pred_check
    _
  $region55: #{tpu_custom_call.1} parent=0 // pred_check_branch
    %57 = sbr.rel (0) target = $region57
  $region56: #{tpu_custom_call.1} parent=0 // pred_region
    _
  $region57: #{tpu_custom_call.1} parent=0 // pred_fallthru
    _
  // Predicated region
  $region58: #{tpu_custom_call.1} parent=0 // pred_check
    _
  $region59: #{tpu_custom_call.1} parent=0 // pred_check_branch
    %59 = sbr.rel (0) target = $region61
  $region60: #{tpu_custom_call.1} parent=0 // pred_region
    _
  $region61: #{tpu_custom_call.1} parent=0 // pred_fallthru
    _
  // Predicated region
  $region62: #{tpu_custom_call.1} parent=0 // pred_check
    _
  $region63: #{tpu_custom_call.1} parent=0 // pred_check_branch
    %61 = sbr.rel (0) target = $region65
  $region64: #{tpu_custom_call.1} parent=0 // pred_region
    _
  $region65: #{tpu_custom_call.1} parent=0 // pred_fallthru
    _
  // Predicated region
  $region66: #{tpu_custom_call.1} parent=0 // pred_check
    _
  $region67: #{tpu_custom_call.1} parent=0 // pred_check_branch
    %63 = sbr.rel (0) target = $region69
  $region68: #{tpu_custom_call.1} parent=0 // pred_region
    _
  $region69: #{tpu_custom_call.1} parent=0 // pred_fallthru
    _
  // Predicated region
  $region70: #{tpu_custom_call.1} parent=0 // pred_check
    _
  $region71: #{tpu_custom_call.1} parent=0 // pred_check_branch
    %65 = sbr.rel (0) target = $region73
  $region72: #{tpu_custom_call.1} parent=0 // pred_region
    _
  $region73: #{tpu_custom_call.1} parent=0 // pred_fallthru
    _
  // Predicated region
  $region74: #{tpu_custom_call.1} parent=0 // pred_check
    _
  $region75: #{tpu_custom_call.1} parent=0 // pred_check_branch
    %67 = sbr.rel (0) target = $region77
  $region76: #{tpu_custom_call.1} parent=0 // pred_region
    _
  $region77: #{tpu_custom_call.1} parent=0 // pred_fallthru
    _
  // Predicated region
  $region78: #{tpu_custom_call.1} parent=0 // pred_check
    _
  $region79: #{tpu_custom_call.1} parent=0 // pred_check_branch
    %69 = sbr.rel (0) target = $region81
  $region80: #{tpu_custom_call.1} parent=0 // pred_region
    _
  $region81: #{tpu_custom_call.1} parent=0 // pred_fallthru
    _
  // Predicated region
  $region82: #{tpu_custom_call.1} parent=0 // pred_check
    _
  $region83: #{tpu_custom_call.1} parent=0 // pred_check_branch
    %71 = sbr.rel (0) target = $region85
  $region84: #{tpu_custom_call.1} parent=0 // pred_region
    _
  $region85: #{tpu_custom_call.1} parent=0 // pred_fallthru
    _
  // Predicated region
  $region86: #{tpu_custom_call.1} parent=0 // pred_check
    _
  $region87: #{tpu_custom_call.1} parent=0 // pred_check_branch
    %73 = sbr.rel (0) target = $region89
  $region88: #{tpu_custom_call.1} parent=0 // pred_region
    _
  $region89: #{tpu_custom_call.1} parent=0 // pred_fallthru
    _
  // Predicated region
  $region90: #{tpu_custom_call.1} parent=0 // pred_check
    _
  $region91: #{tpu_custom_call.1} parent=0 // pred_check_branch
    %75 = sbr.rel (0) target = $region93
  $region92: #{tpu_custom_call.1} parent=0 // pred_region
    _
  $region93: #{tpu_custom_call.1} parent=0 // pred_fallthru
    _
  %v77 = vld [vmem:[%s6] sm:$0xff]
  %v78 = vld [vmem:[%s6 + $0x8] sm:$0xff]
  %v79 = vld [vmem:[%s6 + $0x10] sm:$0xff]
  %v80 = vld [vmem:[%s6 + $0x18] sm:$0xff]
  %v81 = vld [vmem:[%s6 + $0x20] sm:$0xff]
  %v82 = vld [vmem:[%s6 + $0x28] sm:$0xff]
  %v83 = vld [vmem:[%s6 + $0x30] sm:$0xff]
  %v84 = vld [vmem:[%s6 + $0x38] sm:$0xff]
  %v85 = vld [vmem:[%s6 + $0x40] sm:$0xff]
  %v86 = vld [vmem:[%s6 + $0x48] sm:$0xff]
  %v87 = vld [vmem:[%s6 + $0x50] sm:$0xff]
  %v88 = vld [vmem:[%s6 + $0x58] sm:$0xff]
  %v89 = vld [vmem:[%s6 + $0x60] sm:$0xff]
  %v90 = vld [vmem:[%s6 + $0x68] sm:$0xff]
  %v91 = vld [vmem:[%s6 + $0x70] sm:$0xff]
  %v92 = vld [vmem:[%s6 + $0x78] sm:$0xff]
  %v93 = vld [vmem:[%s6 + $0x80] sm:$0xff]
  %v94 = vld [vmem:[%s6 + $0x88] sm:$0xff]
  %v95 = vld [vmem:[%s6 + $0x90] sm:$0xff]
  %v96 = vld [vmem:[%s7] sm:$0xff]
  %v97 = vld [vmem:[%s7 + $0x8] sm:$0xff]
  %v98 = vld [vmem:[%s7 + $0x10] sm:$0xff]
  %v99 = vld [vmem:[%s7 + $0x18] sm:$0xff]
  %v100 = vld [vmem:[%s7 + $0x20] sm:$0xff]
  %v101 = vld [vmem:[%s7 + $0x28] sm:$0xff]
  %v102 = vld [vmem:[%s7 + $0x30] sm:$0xf]
  %v103 = vld [vmem:[%s8] sm:$0xff]
  %v104 = vld [vmem:[%s8 + $0x8] sm:$0x3]
  %v105 = vld [vmem:[%s5] sm:$0x1]
  %v106 = vld [vmem:[%s0] sm:$0xff]
  %v107 = vld [vmem:[%s0 + $0x8] sm:$0x3]
  %v108 = vlaneseq
  %v109 = vand.u32 %v108, 127
  %v110 = vadd.s32 %v109, 128
  %111 = vset.pattern.permute.xlu0 0
  %112 = vperm.xlu0 %111, %v106
  %v113 = vpop.permute.xlu0 %112
  %114 = vset.pattern.permute.xlu0 0
  %115 = vperm.xlu0 %114, %v107
  %v116 = vpop.permute.xlu0 %115
  %vm117 = vcmp.eq.s32.totalorder %v113, %v109
  %vm118 = vcmp.eq.s32.totalorder %v113, %v110
  %vm119 = vcmp.eq.s32.totalorder %v116, %v109
  %vm120 = vcmp.eq.s32.totalorder %v116, %v110
  %v121 = vsel %vm117, 1, 0
  %v122 = vsel %vm118, 1, 0
  %v123 = vsel %vm119, 1, 0
  %v124 = vsel %vm120, 1, 0
  %v125 = vcvt.s32.f32 %v121
  %v126 = vcvt.s32.f32 %v122
  %v127 = vcvt.s32.f32 %v123
  %v128 = vcvt.s32.f32 %v124
  %vm129 = vcmask 195584
  %v131 = vsel %vm129, %v126, 0
  %v134 = vsel %vm129, %v128, 0
  %136 = vmatpush.msra.mxu0 %v92
  %137 = vmatpush.msra.mxu0 %v91
  %138 = vmatpush.msra.mxu0 %v90
  %139 = vmatpush.msra.mxu0 %v89
  %140 = vmatpush.msra.mxu0 %v88
  %141 = vmatpush.msra.mxu0 %v87
  %142 = vmatpush.msra.mxu0 %v86
  %143 = vmatpush.msra.mxu0 %v85
  %144 = vmatpush.msra.mxu0 %v84
  %145 = vmatpush.msra.mxu0 %v83
  %146 = vmatpush.msra.mxu0 %v82
  %147 = vmatpush.msra.mxu0 %v81
  %148 = vmatpush.msra.mxu0 %v80
  %149 = vmatpush.msra.mxu0 %v79
  %150 = vmatpush.msra.mxu0 %v78
  %151 = vmatpush.msra.mxu0 %v77
  %152 = vmatmul.f32.gmra.mxu0 %v125
  %v153 = vpop.f32.mrf.mxu0
  %v154 = vadd.f32 0.0, %v153
  %155 = vmatmul.f32.gmra.mxu0 %v127
  %v156 = vpop.f32.mrf.mxu0
  %v157 = vadd.f32 0.0, %v156
  %158 = vdwg.mxu0
  %159 = vmatpush.msra.mxu0 0.0
  %160 = vmatpush.msra.mxu0 0.0
  %161 = vmatpush.msra.mxu0 0.0
  %162 = vmatpush.msra.mxu0 0.0
  %163 = vmatpush.msra.mxu0 0.0
  %164 = vmatpush.msra.mxu0 0.0
  %165 = vmatpush.msra.mxu0 0.0
  %166 = vmatpush.msra.mxu0 0.0
  %167 = vmatpush.msra.mxu0 0.0
  %168 = vmatpush.msra.mxu0 0.0
  %169 = vmatpush.msra.mxu0 0.0
  %170 = vmatpush.msra.mxu0 0.0
  %171 = vmatpush.msra.mxu0 0.0
  %172 = vmatpush.msra.mxu0 %v95
  %173 = vmatpush.msra.mxu0 %v94
  %174 = vmatpush.msra.mxu0 %v93
  %175 = vmatmul.f32.gmra.mxu0 %v131
  %v176 = vpop.f32.mrf.mxu0
  %v177 = vadd.f32 %v154, %v176
  %178 = vmatmul.f32.gmra.mxu0 %v134
  %v179 = vpop.f32.mrf.mxu0
  %v180 = vadd.f32 %v157, %v179
  %181 = vdwg.mxu0
  %v182 = vld [vmem:[%s3] sm:$0xff]
  %183 = vset.pattern.permute.xlu0 0
  %184 = vperm.xlu0 %183, %v182
  %v185 = vpop.permute.xlu0 %184
  %vm186 = vcmp.eq.s32.totalorder %v185, %v109
  %v187 = vsel %vm186, 1, 0
  %v188 = vcvt.s32.f32 %v187
  %vm189 = vcmask 424960
  %v191 = vsel %vm189, %v188, 0
  %vm193 = vcmask 1043456
  %v195 = vsel %vm193, %v102, 0
  %197 = vmatpush.msra.mxu0 0.0
  %198 = vmatpush.msra.mxu0 0.0
  %199 = vmatpush.msra.mxu0 0.0
  %200 = vmatpush.msra.mxu0 0.0
  %201 = vmatpush.msra.mxu0 0.0
  %202 = vmatpush.msra.mxu0 0.0
  %203 = vmatpush.msra.mxu0 0.0
  %204 = vmatpush.msra.mxu0 0.0
  %205 = vmatpush.msra.mxu0 0.0
  %206 = vmatpush.msra.mxu0 %v195
  %207 = vmatpush.msra.mxu0 %v101
  %208 = vmatpush.msra.mxu0 %v100
  %209 = vmatpush.msra.mxu0 %v99
  %210 = vmatpush.msra.mxu0 %v98
  %211 = vmatpush.msra.mxu0 %v97
  %212 = vmatpush.msra.mxu0 %v96
  %213 = vmatmul.f32.gmra.mxu0 %v191
  %v214 = vpop.f32.mrf.mxu0
  %v215 = vadd.f32 0.0, %v214
  %216 = vdwg.mxu0
  %v217 = vld [vmem:[%s1] sm:$0xff]
  %218 = vset.pattern.permute.xlu0 0
  %219 = vperm.xlu0 %218, %v217
  %v220 = vpop.permute.xlu0 %219
  %vm221 = vcmp.eq.s32.totalorder %v220, %v109
  %v222 = vsel %vm221, 1, 0
  %v223 = vcvt.s32.f32 %v222
  %v224 = vld [vmem:[%s2] sm:$0xff]
  %225 = vset.pattern.permute.xlu0 0
  %226 = vperm.xlu0 %225, %v224
  %v227 = vpop.permute.xlu0 %226
  %vm228 = vcmp.eq.s32.totalorder %v227, %v109
  %v229 = vsel %vm228, 1, 0
  %v230 = vcvt.s32.f32 %v229
  %v231 = vsub.f32 %v223, %v230
  %vm232 = vcmask 80896
  %v234 = vsel %vm232, %v231, 0
  %vm236 = vcmask 1041408
  %v238 = vsel %vm236, %v104, 0
  %240 = vmatpush.msra.mxu0 0.0
  %241 = vmatpush.msra.mxu0 0.0
  %242 = vmatpush.msra.mxu0 0.0
  %243 = vmatpush.msra.mxu0 0.0
  %244 = vmatpush.msra.mxu0 0.0
  %245 = vmatpush.msra.mxu0 0.0
  %246 = vmatpush.msra.mxu0 0.0
  %247 = vmatpush.msra.mxu0 0.0
  %248 = vmatpush.msra.mxu0 0.0
  %249 = vmatpush.msra.mxu0 0.0
  %250 = vmatpush.msra.mxu0 0.0
  %251 = vmatpush.msra.mxu0 0.0
  %252 = vmatpush.msra.mxu0 0.0
  %253 = vmatpush.msra.mxu0 0.0
  %254 = vmatpush.msra.mxu0 %v238
  %255 = vmatpush.msra.mxu0 %v103
  %256 = vmatmul.f32.gmra.mxu0 %v234
  %v257 = vpop.f32.mrf.mxu0
  %v258 = vadd.f32 0.0, %v257
  %259 = vdwg.mxu0
  %vm262 = vcmask 1040384
  %v263 = vrot.slane %v177, 7
  %v264 = vrot.slane %v180, 7
  %v265 = vsel %vm262, %v263, %v264
  %v269 = vrot.slane %v215, 5
  %v271 = vsel %vm262, %v105, %v263
  %vm272 = vcmask 1042432
  %v273 = vsel %vm272, %v265, %v269
  %v275 = vrot.slane %v103, 7
  %v276 = vrot.slane %v104, 7
  %v277 = vsel %vm262, %v275, %v276
  %v281 = vrot.slane %v258, 5
  %v283 = vsel %vm262, 0.0, %v275
  %v284 = vsel %vm272, %v277, %v281
  %vm285 = vcmask 261120
  %286 = vst.msk [vmem:[%s24] sm:$0xff] %vm285, %v283
  %287 = vst.msk [vmem:[%s24 + $0x8] sm:$0xff] %vm285, %v284
  %vm288 = vcmask 256000
  %289 = vst.msk [vmem:[%s24 + $0x10] sm:$0x7] %vm288, %v281
  %v290 = vld [vmem:[%s4] sm:$0x1]
  %v291 = vld [vmem:[%s24] sm:$0xff]
  %v292 = vld [vmem:[%s24 + $0x8] sm:$0xff]
  %v293 = vld [vmem:[%s24 + $0x10] sm:$0x7]
  %v294 = vadd.f32 %v271, %v291
  %v295 = vadd.f32 %v273, %v292
  %v296 = vadd.f32 %v269, %v293
  %v297 = vpack.c.bf16 %v295, %v294
  %v298 = vpack.c.bf16 %v296, %v296
  %v299 = vld [vmem:[%s9] sm:$0xf]
  %v300 = vld [vmem:[%s9 + $0x4] sm:$0xf]
  %v301 = vld [vmem:[%s9 + $0x8] sm:$0xf]
  %v302 = vld [vmem:[%s9 + $0xc] sm:$0xf]
  %v303 = vld [vmem:[%s10] sm:$0x1]
  %v305 = vperm.slane %v303, 0
  %v311 = vunpack.c.l.b16 %v299
  %v312 = vunpack.c.l.b16 %v300
  %v313 = vunpack.c.l.b16 %v301
  %v314 = vunpack.c.l.b16 %v302
  %v315 = vpack.c.b16 %v312, %v311
  %v316 = vpack.c.b16 %v314, %v313
  %v320 = vsel %vm285, %v297, 0
  %v323 = vsel %vm285, %v298, 0
  %325 = vmatpush.bf16.msra.mxu0 0
  %326 = vmatpush.bf16.msra.mxu0 0
  %327 = vmatpush.bf16.msra.mxu0 0
  %328 = vmatpush.bf16.msra.mxu0 0
  %329 = vmatpush.bf16.msra.mxu0 0
  %330 = vmatpush.bf16.msra.mxu0 0
  %331 = vmatpush.bf16.msra.mxu0 %v316
  %332 = vmatpush.bf16.msra.mxu0 %v315
  %333 = vmatmul.bf16.gmra.mxu0 %v320
  %v334 = vpop.f32.mrf.mxu0
  %v335 = vadd.f32 %v305, %v334
  %v336 = vpop.f32.mrf.mxu0
  %v337 = vadd.f32 %v305, %v336
  %338 = vmatmul.bf16.gmra.mxu0 %v323
  %v339 = vpop.f32.mrf.mxu0
  %v340 = vadd.f32 %v305, %v339
  %v341 = vpop.f32.mrf.mxu0
  %342 = vdwg.mxu0
  %v343 = vpack.c.bf16 %v273, %v271
  %v344 = vpack.c.bf16 %v269, %v269
  %v345 = vld [vmem:[%s11] sm:$0xf]
  %v346 = vld [vmem:[%s11 + $0x4] sm:$0xf]
  %v347 = vld [vmem:[%s11 + $0x8] sm:$0xf]
  %v348 = vld [vmem:[%s11 + $0xc] sm:$0xf]
  %v349 = vld [vmem:[%s12] sm:$0x1]
  %v351 = vperm.slane %v349, 0
  %v357 = vunpack.c.l.b16 %v345
  %v358 = vunpack.c.l.b16 %v346
  %v359 = vunpack.c.l.b16 %v347
  %v360 = vunpack.c.l.b16 %v348
  %v361 = vpack.c.b16 %v358, %v357
  %v362 = vpack.c.b16 %v360, %v359
  %v366 = vsel %vm285, %v343, 0
  %v369 = vsel %vm285, %v344, 0
  %371 = vmatpush.bf16.msra.mxu0 0
  %372 = vmatpush.bf16.msra.mxu0 0
  %373 = vmatpush.bf16.msra.mxu0 0
  %374 = vmatpush.bf16.msra.mxu0 0
  %375 = vmatpush.bf16.msra.mxu0 0
  %376 = vmatpush.bf16.msra.mxu0 0
  %377 = vmatpush.bf16.msra.mxu0 %v362
  %378 = vmatpush.bf16.msra.mxu0 %v361
  %379 = vmatmul.bf16.gmra.mxu0 %v366
  %v380 = vpop.f32.mrf.mxu0
  %v381 = vadd.f32 %v351, %v380
  %v382 = vpop.f32.mrf.mxu0
  %v383 = vadd.f32 %v351, %v382
  %384 = vmatmul.bf16.gmra.mxu0 %v369
  %v385 = vpop.f32.mrf.mxu0
  %v386 = vadd.f32 %v351, %v385
  %v387 = vpop.f32.mrf.mxu0
  %388 = vdwg.mxu0
  %392 = vrot.lane.b32.xlu0 %v335, 96
  %v393 = vpop.permute.xlu0 %392
  %394 = vrot.lane.b32.xlu0 %v337, 96
  %v395 = vpop.permute.xlu0 %394
  %396 = vrot.lane.b32.xlu0 %v340, 96
  %v397 = vpop.permute.xlu0 %396
  %401 = vxpose.xlu0.b32.start [1/16] %v393, 128
  %402 = vxpose.xlu0.b32.cont [2/16] %v395, 128
  %403 = vxpose.xlu0.b32.cont [3/16] %v397, 128
  %404 = vxpose.xlu0.b32.cont [4/16] 0.0, 128
  %405 = vxpose.xlu0.b32.cont [5/16] 0.0, 128
  %406 = vxpose.xlu0.b32.cont [6/16] 0.0, 128
  %407 = vxpose.xlu0.b32.cont [7/16] 0.0, 128
  %408 = vxpose.xlu0.b32.cont [8/16] 0.0, 128
  %409 = vxpose.xlu0.b32.cont [9/16] 0.0, 128
  %410 = vxpose.xlu0.b32.cont [10/16] 0.0, 128
  %411 = vxpose.xlu0.b32.cont [11/16] 0.0, 128
  %412 = vxpose.xlu0.b32.cont [12/16] 0.0, 128
  %413 = vxpose.xlu0.b32.cont [13/16] 0.0, 128
  %414 = vxpose.xlu0.b32.cont [14/16] 0.0, 128
  %415 = vxpose.xlu0.b32.cont [15/16] 0.0, 128
  %416 = vxpose.xlu0.b32.end [16/16] 0.0, 128
  %v417 = vpop.trf.xlu0
  %v418 = vpop.trf.xlu0
  %v419 = vpop.trf.xlu0
  %v420 = vpop.trf.xlu0
  %v421 = vpop.trf.xlu0
  %v422 = vpop.trf.xlu0
  %v423 = vpop.trf.xlu0
  %v424 = vpop.trf.xlu0
  %v425 = vpop.trf.xlu0
  %v426 = vpop.trf.xlu0
  %v427 = vpop.trf.xlu0
  %v428 = vpop.trf.xlu0
  %v429 = vpop.trf.xlu0
  %v430 = vpop.trf.xlu0
  %v431 = vpop.trf.xlu0
  %v432 = vpop.trf.xlu0
  %v433 = vpack.c.bf16 %v337, %v335
  %v434 = vpack.c.bf16 %v340, %v340
  %v435 = vpack.c.bf16 %v417, %v417
  %vm436 = vcmask 64512
  %v438 = vsel %vm436, %v433, 0
  %v441 = vsel %vm436, %v434, 0
  %v444 = vsel %vm193, %v435, 0
  %446 = vmatpush.bf16.msra.mxu0 0
  %447 = vmatpush.bf16.msra.mxu0 0
  %448 = vmatpush.bf16.msra.mxu0 0
  %449 = vmatpush.bf16.msra.mxu0 0
  %450 = vmatpush.bf16.msra.mxu0 0
  %451 = vmatpush.bf16.msra.mxu0 0
  %452 = vmatpush.bf16.msra.mxu0 0
  %453 = vmatpush.bf16.msra.mxu0 %v444
  %454 = vmatmul.bf16.gmra.mxu0 %v438
  %v455 = vpop.f32.mrf.mxu0
  %v456 = vadd.f32 0.0, %v455
  %v457 = vpop.f32.mrf.mxu0
  %v458 = vadd.f32 0.0, %v457
  %459 = vmatmul.bf16.gmra.mxu0 %v441
  %v460 = vpop.f32.mrf.mxu0
  %v461 = vadd.f32 0.0, %v460
  %v462 = vpop.f32.mrf.mxu0
  %463 = vdwg.mxu0
  %v464 = vmul.f32 %v456, 0.35355338
  %v465 = vmul.f32 %v458, 0.35355338
  %v466 = vmul.f32 %v461, 0.35355338
  %v468 = vperm.slane %v290, 0
  %v470 = vadd.f32 %v464, %v468
  %v471 = vadd.f32 %v465, %v468
  %v472 = vadd.f32 %v466, %v468
  %vm473 = vcmask 154624
  %v474 = vsel %vm473, %v470, -inf
  %475 = vmax.xlane.f32.xlu0 %v474
  %v476 = vpop.xlane.xlu0 %475
  %v477 = vsel %vm473, %v471, -inf
  %478 = vmax.xlane.f32.xlu0 %v477
  %v479 = vpop.xlane.xlu0 %478
  %vm480 = vcmask 149504
  %v481 = vsel %vm480, %v472, -inf
  %482 = vmax.xlane.f32.xlu0 %v481
  %v483 = vpop.xlane.xlu0 %482
  %v484 = vsub.f32 %v470, %v476
  %v485 = vsub.f32 %v471, %v479
  %v486 = vsub.f32 %v472, %v483
  %v487 = vmul.f32 %v484, 1.442695
  %v488 = vpow.pop %v487
  %v489 = vmul.f32 %v485, 1.442695
  %v490 = vpow.pop %v489
  %v491 = vmul.f32 %v486, 1.442695
  %v492 = vpow.pop %v491
  %v493 = vsel %vm473, %v488, 0.0
  %494 = vadd.xlane.f32.xlu0 %v493
  %v495 = vpop.xlane.xlu0 %494
  %v496 = vsel %vm473, %v490, 0.0
  %497 = vadd.xlane.f32.xlu0 %v496
  %v498 = vpop.xlane.xlu0 %497
  %v499 = vsel %vm480, %v492, 0.0
  %500 = vadd.xlane.f32.xlu0 %v499
  %v501 = vpop.xlane.xlu0 %500
  %v502 = vrcp.pop %v495
  %v503 = vrcp.pop %v498
  %v504 = vrcp.pop %v501
  %v505 = vmul.f32 %v488, %v502
  %v506 = vmul.f32 %v490, %v503
  %v507 = vmul.f32 %v492, %v504
  %v508 = vpack.c.bf16 %v506, %v505
  %v509 = vpack.c.bf16 %v507, %v507
  %v510 = vpack.c.bf16 %v383, %v381
  %v511 = vpack.c.bf16 %v386, %v386
  %v513 = vsel %vm473, %v508, 0
  %v516 = vsel %vm473, %v509, 0
  %v518 = vsel %vm262, 4294967295, 65535
  %v519 = vsel %vm236, %v518, 0
  %v521 = vand.u32 %v511, %v519
  %523 = vmatpush.bf16.msra.mxu0 0
  %524 = vmatpush.bf16.msra.mxu0 0
  %525 = vmatpush.bf16.msra.mxu0 0
  %526 = vmatpush.bf16.msra.mxu0 0
  %527 = vmatpush.bf16.msra.mxu0 0
  %528 = vmatpush.bf16.msra.mxu0 0
  %529 = vmatpush.bf16.msra.mxu0 %v521
  %530 = vmatpush.bf16.msra.mxu0 %v510
  %531 = vmatmul.bf16.gmra.mxu0 %v513
  %v532 = vpop.f32.mrf.mxu0
  %v533 = vadd.f32 0.0, %v532
  %v534 = vpop.f32.mrf.mxu0
  %v535 = vadd.f32 0.0, %v534
  %536 = vmatmul.bf16.gmra.mxu0 %v516
  %v537 = vpop.f32.mrf.mxu0
  %v538 = vadd.f32 0.0, %v537
  %v539 = vpop.f32.mrf.mxu0
  %540 = vdwg.mxu0
  %v541 = vpack.c.bf16 %v418, %v418
  %544 = vrot.lane.b32.xlu0 %v433, 120
  %v545 = vpop.permute.xlu0 %544
  %546 = vrot.lane.b32.xlu0 %v434, 120
  %v547 = vpop.permute.xlu0 %546
  %v549 = vsel %vm436, %v545, 0
  %v552 = vsel %vm436, %v547, 0
  %v555 = vsel %vm193, %v541, 0
  %557 = vmatpush.bf16.msra.mxu0 0
  %558 = vmatpush.bf16.msra.mxu0 0
  %559 = vmatpush.bf16.msra.mxu0 0
  %560 = vmatpush.bf16.msra.mxu0 0
  %561 = vmatpush.bf16.msra.mxu0 0
  %562 = vmatpush.bf16.msra.mxu0 0
  %563 = vmatpush.bf16.msra.mxu0 0
  %564 = vmatpush.bf16.msra.mxu0 %v555
  %565 = vmatmul.bf16.gmra.mxu0 %v549
  %v566 = vpop.f32.mrf.mxu0
  %v567 = vadd.f32 0.0, %v566
  %v568 = vpop.f32.mrf.mxu0
  %v569 = vadd.f32 0.0, %v568
  %570 = vmatmul.bf16.gmra.mxu0 %v552
  %v571 = vpop.f32.mrf.mxu0
  %v572 = vadd.f32 0.0, %v571
  %v573 = vpop.f32.mrf.mxu0
  %574 = vdwg.mxu0
  %v575 = vmul.f32 %v567, 0.35355338
  %v576 = vmul.f32 %v569, 0.35355338
  %v577 = vmul.f32 %v572, 0.35355338
  %v578 = vadd.f32 %v575, %v468
  %v579 = vadd.f32 %v576, %v468
  %v580 = vadd.f32 %v577, %v468
  %v581 = vsel %vm473, %v578, -inf
  %582 = vmax.xlane.f32.xlu0 %v581
  %v583 = vpop.xlane.xlu0 %582
  %v584 = vsel %vm473, %v579, -inf
  %585 = vmax.xlane.f32.xlu0 %v584
  %v586 = vpop.xlane.xlu0 %585
  %v587 = vsel %vm480, %v580, -inf
  %588 = vmax.xlane.f32.xlu0 %v587
  %v589 = vpop.xlane.xlu0 %588
  %v590 = vsub.f32 %v578, %v583
  %v591 = vsub.f32 %v579, %v586
  %v592 = vsub.f32 %v580, %v589
  %v593 = vmul.f32 %v590, 1.442695
  %v594 = vpow.pop %v593
  %v595 = vmul.f32 %v591, 1.442695
  %v596 = vpow.pop %v595
  %v597 = vmul.f32 %v592, 1.442695
  %v598 = vpow.pop %v597
  %v599 = vsel %vm473, %v594, 0.0
  %600 = vadd.xlane.f32.xlu0 %v599
  %v601 = vpop.xlane.xlu0 %600
  %v602 = vsel %vm473, %v596, 0.0
  %603 = vadd.xlane.f32.xlu0 %v602
  %v604 = vpop.xlane.xlu0 %603
  %v605 = vsel %vm480, %v598, 0.0
  %606 = vadd.xlane.f32.xlu0 %v605
  %v607 = vpop.xlane.xlu0 %606
  %v608 = vrcp.pop %v601
  %v609 = vrcp.pop %v604
  %v610 = vrcp.pop %v607
  %v611 = vmul.f32 %v594, %v608
  %v612 = vmul.f32 %v596, %v609
  %v613 = vmul.f32 %v598, %v610
  %v614 = vpack.c.bf16 %v612, %v611
  %v615 = vpack.c.bf16 %v613, %v613
  %618 = vrot.lane.b32.xlu0 %v510, 120
  %v619 = vpop.permute.xlu0 %618
  %620 = vrot.lane.b32.xlu0 %v511, 120
  %v621 = vpop.permute.xlu0 %620
  %v624 = vsel %vm473, %v614, 0
  %v627 = vsel %vm473, %v615, 0
  %v630 = vand.u32 %v621, %v519
  %632 = vmatpush.bf16.msra.mxu0 0
  %633 = vmatpush.bf16.msra.mxu0 0
  %634 = vmatpush.bf16.msra.mxu0 0
  %635 = vmatpush.bf16.msra.mxu0 0
  %636 = vmatpush.bf16.msra.mxu0 0
  %637 = vmatpush.bf16.msra.mxu0 0
  %638 = vmatpush.bf16.msra.mxu0 %v630
  %639 = vmatpush.bf16.msra.mxu0 %v619
  %640 = vmatmul.bf16.gmra.mxu0 %v624
  %v641 = vpop.f32.mrf.mxu0
  %v642 = vadd.f32 0.0, %v641
  %v643 = vpop.f32.mrf.mxu0
  %v644 = vadd.f32 0.0, %v643
  %645 = vmatmul.bf16.gmra.mxu0 %v627
  %v646 = vpop.f32.mrf.mxu0
  %v647 = vadd.f32 0.0, %v646
  %v648 = vpop.f32.mrf.mxu0
  %649 = vdwg.mxu0
  %v650 = vpack.c.bf16 %v419, %v419
  %651 = vrot.lane.b32.xlu0 %v433, 112
  %v652 = vpop.permute.xlu0 %651
  %653 = vrot.lane.b32.xlu0 %v434, 112
  %v654 = vpop.permute.xlu0 %653
  %v656 = vsel %vm436, %v652, 0
  %v659 = vsel %vm436, %v654, 0
  %v662 = vsel %vm193, %v650, 0
  %664 = vmatpush.bf16.msra.mxu0 0
  %665 = vmatpush.bf16.msra.mxu0 0
  %666 = vmatpush.bf16.msra.mxu0 0
  %667 = vmatpush.bf16.msra.mxu0 0
  %668 = vmatpush.bf16.msra.mxu0 0
  %669 = vmatpush.bf16.msra.mxu0 0
  %670 = vmatpush.bf16.msra.mxu0 0
  %671 = vmatpush.bf16.msra.mxu0 %v662
  %672 = vmatmul.bf16.gmra.mxu0 %v656
  %v673 = vpop.f32.mrf.mxu0
  %v674 = vadd.f32 0.0, %v673
  %v675 = vpop.f32.mrf.mxu0
  %v676 = vadd.f32 0.0, %v675
  %677 = vmatmul.bf16.gmra.mxu0 %v659
  %v678 = vpop.f32.mrf.mxu0
  %v679 = vadd.f32 0.0, %v678
  %v680 = vpop.f32.mrf.mxu0
  %681 = vdwg.mxu0
  %v682 = vmul.f32 %v674, 0.35355338
  %v683 = vmul.f32 %v676, 0.35355338
  %v684 = vmul.f32 %v679, 0.35355338
  %v685 = vadd.f32 %v682, %v468
  %v686 = vadd.f32 %v683, %v468
  %v687 = vadd.f32 %v684, %v468
  %v688 = vsel %vm473, %v685, -inf
  %689 = vmax.xlane.f32.xlu0 %v688
  %v690 = vpop.xlane.xlu0 %689
  %v691 = vsel %vm473, %v686, -inf
  %692 = vmax.xlane.f32.xlu0 %v691
  %v693 = vpop.xlane.xlu0 %692
  %v694 = vsel %vm480, %v687, -inf
  %695 = vmax.xlane.f32.xlu0 %v694
  %v696 = vpop.xlane.xlu0 %695
  %v697 = vsub.f32 %v685, %v690
  %v698 = vsub.f32 %v686, %v693
  %v699 = vsub.f32 %v687, %v696
  %v700 = vmul.f32 %v697, 1.442695
  %v701 = vpow.pop %v700
  %v702 = vmul.f32 %v698, 1.442695
  %v703 = vpow.pop %v702
  %v704 = vmul.f32 %v699, 1.442695
  %v705 = vpow.pop %v704
  %v706 = vsel %vm473, %v701, 0.0
  %707 = vadd.xlane.f32.xlu0 %v706
  %v708 = vpop.xlane.xlu0 %707
  %v709 = vsel %vm473, %v703, 0.0
  %710 = vadd.xlane.f32.xlu0 %v709
  %v711 = vpop.xlane.xlu0 %710
  %v712 = vsel %vm480, %v705, 0.0
  %713 = vadd.xlane.f32.xlu0 %v712
  %v714 = vpop.xlane.xlu0 %713
  %v715 = vrcp.pop %v708
  %v716 = vrcp.pop %v711
  %v717 = vrcp.pop %v714
  %v718 = vmul.f32 %v701, %v715
  %v719 = vmul.f32 %v703, %v716
  %v720 = vmul.f32 %v705, %v717
  %v721 = vpack.c.bf16 %v719, %v718
  %v722 = vpack.c.bf16 %v720, %v720
  %723 = vrot.lane.b32.xlu0 %v510, 112
  %v724 = vpop.permute.xlu0 %723
  %725 = vrot.lane.b32.xlu0 %v511, 112
  %v726 = vpop.permute.xlu0 %725
  %v729 = vsel %vm473, %v721, 0
  %v732 = vsel %vm473, %v722, 0
  %v735 = vand.u32 %v726, %v519
  %737 = vmatpush.bf16.msra.mxu0 0
  %738 = vmatpush.bf16.msra.mxu0 0
  %739 = vmatpush.bf16.msra.mxu0 0
  %740 = vmatpush.bf16.msra.mxu0 0
  %741 = vmatpush.bf16.msra.mxu0 0
  %742 = vmatpush.bf16.msra.mxu0 0
  %743 = vmatpush.bf16.msra.mxu0 %v735
  %744 = vmatpush.bf16.msra.mxu0 %v724
  %745 = vmatmul.bf16.gmra.mxu0 %v729
  %v746 = vpop.f32.mrf.mxu0
  %v747 = vadd.f32 0.0, %v746
  %v748 = vpop.f32.mrf.mxu0
  %v749 = vadd.f32 0.0, %v748
  %750 = vmatmul.bf16.gmra.mxu0 %v732
  %v751 = vpop.f32.mrf.mxu0
  %v752 = vadd.f32 0.0, %v751
  %v753 = vpop.f32.mrf.mxu0
  %754 = vdwg.mxu0
  %v755 = vpack.c.bf16 %v420, %v420
  %756 = vrot.lane.b32.xlu0 %v433, 104
  %v757 = vpop.permute.xlu0 %756
  %758 = vrot.lane.b32.xlu0 %v434, 104
  %v759 = vpop.permute.xlu0 %758
  %v761 = vsel %vm436, %v757, 0
  %v764 = vsel %vm436, %v759, 0
  %v767 = vsel %vm193, %v755, 0
  %769 = vmatpush.bf16.msra.mxu0 0
  %770 = vmatpush.bf16.msra.mxu0 0
  %771 = vmatpush.bf16.msra.mxu0 0
  %772 = vmatpush.bf16.msra.mxu0 0
  %773 = vmatpush.bf16.msra.mxu0 0
  %774 = vmatpush.bf16.msra.mxu0 0
  %775 = vmatpush.bf16.msra.mxu0 0
  %776 = vmatpush.bf16.msra.mxu0 %v767
  %777 = vmatmul.bf16.gmra.mxu0 %v761
  %v778 = vpop.f32.mrf.mxu0
  %v779 = vadd.f32 0.0, %v778
  %v780 = vpop.f32.mrf.mxu0
  %v781 = vadd.f32 0.0, %v780
  %782 = vmatmul.bf16.gmra.mxu0 %v764
  %v783 = vpop.f32.mrf.mxu0
  %v784 = vadd.f32 0.0, %v783
  %v785 = vpop.f32.mrf.mxu0
  %786 = vdwg.mxu0
  %v787 = vmul.f32 %v779, 0.35355338
  %v788 = vmul.f32 %v781, 0.35355338
  %v789 = vmul.f32 %v784, 0.35355338
  %v790 = vadd.f32 %v787, %v468
  %v791 = vadd.f32 %v788, %v468
  %v792 = vadd.f32 %v789, %v468
  %v793 = vsel %vm473, %v790, -inf
  %794 = vmax.xlane.f32.xlu0 %v793
  %v795 = vpop.xlane.xlu0 %794
  %v796 = vsel %vm473, %v791, -inf
  %797 = vmax.xlane.f32.xlu0 %v796
  %v798 = vpop.xlane.xlu0 %797
  %v799 = vsel %vm480, %v792, -inf
  %800 = vmax.xlane.f32.xlu0 %v799
  %v801 = vpop.xlane.xlu0 %800
  %v802 = vsub.f32 %v790, %v795
  %v803 = vsub.f32 %v791, %v798
  %v804 = vsub.f32 %v792, %v801
  %v805 = vmul.f32 %v802, 1.442695
  %v806 = vpow.pop %v805
  %v807 = vmul.f32 %v803, 1.442695
  %v808 = vpow.pop %v807
  %v809 = vmul.f32 %v804, 1.442695
  %v810 = vpow.pop %v809
  %v811 = vsel %vm473, %v806, 0.0
  %812 = vadd.xlane.f32.xlu0 %v811
  %v813 = vpop.xlane.xlu0 %812
  %v814 = vsel %vm473, %v808, 0.0
  %815 = vadd.xlane.f32.xlu0 %v814
  %v816 = vpop.xlane.xlu0 %815
  %v817 = vsel %vm480, %v810, 0.0
  %818 = vadd.xlane.f32.xlu0 %v817
  %v819 = vpop.xlane.xlu0 %818
  %v820 = vrcp.pop %v813
  %v821 = vrcp.pop %v816
  %v822 = vrcp.pop %v819
  %v823 = vmul.f32 %v806, %v820
  %v824 = vmul.f32 %v808, %v821
  %v825 = vmul.f32 %v810, %v822
  %v826 = vpack.c.bf16 %v824, %v823
  %v827 = vpack.c.bf16 %v825, %v825
  %828 = vrot.lane.b32.xlu0 %v510, 104
  %v829 = vpop.permute.xlu0 %828
  %830 = vrot.lane.b32.xlu0 %v511, 104
  %v831 = vpop.permute.xlu0 %830
  %v834 = vsel %vm473, %v826, 0
  %v837 = vsel %vm473, %v827, 0
  %v840 = vand.u32 %v831, %v519
  %842 = vmatpush.bf16.msra.mxu0 0
  %843 = vmatpush.bf16.msra.mxu0 0
  %844 = vmatpush.bf16.msra.mxu0 0
  %845 = vmatpush.bf16.msra.mxu0 0
  %846 = vmatpush.bf16.msra.mxu0 0
  %847 = vmatpush.bf16.msra.mxu0 0
  %848 = vmatpush.bf16.msra.mxu0 %v840
  %849 = vmatpush.bf16.msra.mxu0 %v829
  %850 = vmatmul.bf16.gmra.mxu0 %v834
  %v851 = vpop.f32.mrf.mxu0
  %v852 = vadd.f32 0.0, %v851
  %v853 = vpop.f32.mrf.mxu0
  %v854 = vadd.f32 0.0, %v853
  %855 = vmatmul.bf16.gmra.mxu0 %v837
  %v856 = vpop.f32.mrf.mxu0
  %v857 = vadd.f32 0.0, %v856
  %v858 = vpop.f32.mrf.mxu0
  %859 = vdwg.mxu0
  %863 = vrot.lane.b32.xlu0 %v642, 8
  %v864 = vpop.permute.xlu0 %863
  %865 = vrot.lane.b32.xlu0 %v644, 8
  %v866 = vpop.permute.xlu0 %865
  %867 = vrot.lane.b32.xlu0 %v647, 8
  %v868 = vpop.permute.xlu0 %867
  %875 = vrot.lane.b32.xlu0 %v747, 16
  %v876 = vpop.permute.xlu0 %875
  %877 = vrot.lane.b32.xlu0 %v749, 16
  %v878 = vpop.permute.xlu0 %877
  %879 = vrot.lane.b32.xlu0 %v752, 16
  %v880 = vpop.permute.xlu0 %879
  %887 = vrot.lane.b32.xlu0 %v852, 24
  %v888 = vpop.permute.xlu0 %887
  %889 = vrot.lane.b32.xlu0 %v854, 24
  %v890 = vpop.permute.xlu0 %889
  %891 = vrot.lane.b32.xlu0 %v857, 24
  %v892 = vpop.permute.xlu0 %891
  %v896 = vsel %vm436, %v533, %v864
  %v897 = vsel %vm436, %v535, %v866
  %v898 = vsel %vm436, %v538, %v868
  %vm899 = vcmask 130048
  %v900 = vsel %vm899, %v896, %v876
  %v901 = vsel %vm899, %v897, %v878
  %v902 = vsel %vm899, %v898, %v880
  %v903 = vsel %vm129, %v900, %v888
  %v904 = vsel %vm129, %v901, %v890
  %v905 = vsel %vm129, %v902, %v892
  %v906 = vpack.c.bf16 %v904, %v903
  %v907 = vpack.c.bf16 %v905, %v905
  %v908 = vld [vmem:[%s13] sm:$0xf]
  %v909 = vld [vmem:[%s13 + $0x4] sm:$0xf]
  %v910 = vld [vmem:[%s13 + $0x8] sm:$0xf]
  %v911 = vld [vmem:[%s13 + $0xc] sm:$0xf]
  %v912 = vld [vmem:[%s14] sm:$0x1]
  %v914 = vperm.slane %v912, 0
  %v920 = vunpack.c.l.b16 %v908
  %v921 = vunpack.c.l.b16 %v909
  %v922 = vunpack.c.l.b16 %v910
  %v923 = vunpack.c.l.b16 %v911
  %v924 = vpack.c.b16 %v921, %v920
  %v925 = vpack.c.b16 %v923, %v922
  %v929 = vsel %vm285, %v906, 0
  %v932 = vsel %vm285, %v907, 0
  %934 = vmatpush.bf16.msra.mxu0 0
  %935 = vmatpush.bf16.msra.mxu0 0
  %936 = vmatpush.bf16.msra.mxu0 0
  %937 = vmatpush.bf16.msra.mxu0 0
  %938 = vmatpush.bf16.msra.mxu0 0
  %939 = vmatpush.bf16.msra.mxu0 0
  %940 = vmatpush.bf16.msra.mxu0 %v925
  %941 = vmatpush.bf16.msra.mxu0 %v924
  %942 = vmatmul.bf16.gmra.mxu0 %v929
  %v943 = vpop.f32.mrf.mxu0
  %v944 = vadd.f32 %v914, %v943
  %v945 = vpop.f32.mrf.mxu0
  %v946 = vadd.f32 %v914, %v945
  %947 = vmatmul.bf16.gmra.mxu0 %v932
  %v948 = vpop.f32.mrf.mxu0
  %v949 = vadd.f32 %v914, %v948
  %v950 = vpop.f32.mrf.mxu0
  %951 = vdwg.mxu0
  %v952 = vadd.f32 %v271, %v944
  %v953 = vadd.f32 %v273, %v946
  %v954 = vadd.f32 %v269, %v949
  %v955 = vld [vmem:[%s15] sm:$0x1]
  %v956 = vld [vmem:[%s16] sm:$0x1]
  %v957 = vsel %vm285, %v952, 0.0
  %958 = vadd.xlane.f32.xlu0 %v957
  %v959 = vpop.xlane.xlu0 %958
  %v960 = vsel %vm285, %v953, 0.0
  %961 = vadd.xlane.f32.xlu0 %v960
  %v962 = vpop.xlane.xlu0 %961
  %v963 = vsel %vm288, %v954, 0.0
  %964 = vadd.xlane.f32.xlu0 %v963
  %v965 = vpop.xlane.xlu0 %964
  %v966 = vrcp.pop 32.0
  %v967 = vmul.f32 32.0, %v966
  %v968 = vsub.f32 1.0, %v967
  %v969 = vmul.f32 %v966, %v968
  %v970 = vadd.f32 %v966, %v969
  %vm971 = vweird.f32 %v966
  %v972 = vsel %vm971, %v966, %v970
  %v973 = vmul.f32 %v959, %v972
  %v974 = vmul.f32 %v962, %v972
  %v975 = vmul.f32 %v965, %v972
  %v976 = vsub.f32 %v952, %v973
  %v977 = vsub.f32 %v953, %v974
  %v978 = vsub.f32 %v954, %v975
  %v979 = vmul.f32 %v976, %v976
  %v980 = vmul.f32 %v977, %v977
  %v981 = vmul.f32 %v978, %v978
  %v982 = vsel %vm285, %v979, 0.0
  %983 = vadd.xlane.f32.xlu0 %v982
  %v984 = vpop.xlane.xlu0 %983
  %v985 = vsel %vm285, %v980, 0.0
  %986 = vadd.xlane.f32.xlu0 %v985
  %v987 = vpop.xlane.xlu0 %986
  %v988 = vsel %vm288, %v981, 0.0
  %989 = vadd.xlane.f32.xlu0 %v988
  %v990 = vpop.xlane.xlu0 %989
  %v991 = vmul.f32 %v984, %v972
  %v992 = vmul.f32 %v987, %v972
  %v993 = vmul.f32 %v990, %v972
  %v994 = vadd.f32 %v991, 1e-05
  %v995 = vadd.f32 %v992, 1e-05
  %v996 = vadd.f32 %v993, 1e-05
  %v997 = vrsqrt.pop %v994
  %v998 = vmul.f32 %v997, %v994
  %v999 = vmul.f32 %v998, %v997
  %v1000 = vmul.f32 0.5, %v999
  %v1001 = vsub.f32 1.5, %v1000
  %v1002 = vmul.f32 %v997, %v1001
  %vm1003 = vweird.f32 %v994
  %vm1004 = vweird.f32 %v997
  %vm1005 = vmor %vm1003, %vm1004
  %v1006 = vsel %vm1005, %v997, %v1002
  %v1007 = vrsqrt.pop %v995
  %v1008 = vmul.f32 %v1007, %v995
  %v1009 = vmul.f32 %v1008, %v1007
  %v1010 = vmul.f32 0.5, %v1009
  %v1011 = vsub.f32 1.5, %v1010
  %v1012 = vmul.f32 %v1007, %v1011
  %vm1013 = vweird.f32 %v995
  %vm1014 = vweird.f32 %v1007
  %vm1015 = vmor %vm1013, %vm1014
  %v1016 = vsel %vm1015, %v1007, %v1012
  %v1017 = vrsqrt.pop %v996
  %v1018 = vmul.f32 %v1017, %v996
  %v1019 = vmul.f32 %v1018, %v1017
  %v1020 = vmul.f32 0.5, %v1019
  %v1021 = vsub.f32 1.5, %v1020
  %v1022 = vmul.f32 %v1017, %v1021
  %vm1023 = vweird.f32 %v996
  %vm1024 = vweird.f32 %v1017
  %vm1025 = vmor %vm1023, %vm1024
  %v1026 = vsel %vm1025, %v1017, %v1022
  %v1027 = vmul.f32 %v976, %v1006
  %v1028 = vmul.f32 %v977, %v1016
  %v1029 = vmul.f32 %v978, %v1026
  %v1031 = vperm.slane %v955, 0
  %v1033 = vmul.f32 %v1027, %v1031
  %v1034 = vmul.f32 %v1028, %v1031
  %v1035 = vmul.f32 %v1029, %v1031
  %v1037 = vperm.slane %v956, 0
  %v1039 = vadd.f32 %v1033, %v1037
  %v1040 = vadd.f32 %v1034, %v1037
  %v1041 = vadd.f32 %v1035, %v1037
  %v1042 = vpack.c.bf16 %v1040, %v1039
  %v1043 = vpack.c.bf16 %v1041, %v1041
  %v1044 = vld [vmem:[%s19] sm:$0xf]
  %v1045 = vld [vmem:[%s19 + $0x4] sm:$0xf]
  %v1046 = vld [vmem:[%s19 + $0x8] sm:$0xf]
  %v1047 = vld [vmem:[%s19 + $0xc] sm:$0xf]
  %v1048 = vld [vmem:[%s20] sm:$0x1]
  %v1050 = vperm.slane %v1048, 0
  %v1056 = vunpack.c.l.b16 %v1044
  %v1057 = vunpack.c.l.b16 %v1045
  %v1058 = vunpack.c.l.b16 %v1046
  %v1059 = vunpack.c.l.b16 %v1047
  %v1060 = vpack.c.b16 %v1057, %v1056
  %v1061 = vpack.c.b16 %v1059, %v1058
  %v1065 = vsel %vm285, %v1042, 0
  %v1068 = vsel %vm285, %v1043, 0
  %1070 = vmatpush.bf16.msra.mxu0 0
  %1071 = vmatpush.bf16.msra.mxu0 0
  %1072 = vmatpush.bf16.msra.mxu0 0
  %1073 = vmatpush.bf16.msra.mxu0 0
  %1074 = vmatpush.bf16.msra.mxu0 0
  %1075 = vmatpush.bf16.msra.mxu0 0
  %1076 = vmatpush.bf16.msra.mxu0 %v1061
  %1077 = vmatpush.bf16.msra.mxu0 %v1060
  %1078 = vmatmul.bf16.gmra.mxu0 %v1065
  %v1079 = vpop.f32.mrf.mxu0
  %v1080 = vadd.f32 %v1050, %v1079
  %v1081 = vpop.f32.mrf.mxu0
  %v1082 = vadd.f32 %v1050, %v1081
  %1083 = vmatmul.bf16.gmra.mxu0 %v1068
  %v1084 = vpop.f32.mrf.mxu0
  %v1085 = vadd.f32 %v1050, %v1084
  %v1086 = vpop.f32.mrf.mxu0
  %1087 = vdwg.mxu0
  %v1088 = vmax.f32 %v1080, 0.0
  %v1089 = vmax.f32 %v1082, 0.0
  %v1090 = vmax.f32 %v1085, 0.0
  %v1091 = vpack.c.bf16 %v1089, %v1088
  %v1092 = vpack.c.bf16 %v1090, %v1090
  %v1093 = vld [vmem:[%s21] sm:$0xf]
  %v1094 = vld [vmem:[%s21 + $0x4] sm:$0xf]
  %v1095 = vld [vmem:[%s21 + $0x8] sm:$0xf]
  %v1096 = vld [vmem:[%s21 + $0xc] sm:$0xf]
  %v1097 = vld [vmem:[%s21 + $0x10] sm:$0xf]
  %v1098 = vld [vmem:[%s21 + $0x14] sm:$0xf]
  %v1099 = vld [vmem:[%s21 + $0x18] sm:$0xf]
  %v1100 = vld [vmem:[%s21 + $0x1c] sm:$0xf]
  %v1101 = vld [vmem:[%s22] sm:$0x1]
  %v1103 = vperm.slane %v1101, 0
  %v1113 = vunpack.c.l.b16 %v1093
  %v1114 = vunpack.c.l.b16 %v1094
  %v1115 = vunpack.c.l.b16 %v1095
  %v1116 = vunpack.c.l.b16 %v1096
  %v1117 = vunpack.c.l.b16 %v1097
  %v1118 = vunpack.c.l.b16 %v1098
  %v1119 = vunpack.c.l.b16 %v1099
  %v1120 = vunpack.c.l.b16 %v1100
  %v1121 = vpack.c.b16 %v1114, %v1113
  %v1122 = vpack.c.b16 %v1116, %v1115
  %v1123 = vpack.c.b16 %v1118, %v1117
  %v1124 = vpack.c.b16 %v1120, %v1119
  %vm1129 = vcmask 523264
  %v1131 = vsel %vm1129, %v1091, 0
  %v1134 = vsel %vm1129, %v1092, 0
  %1136 = vmatpush.bf16.msra.mxu0 0
  %1137 = vmatpush.bf16.msra.mxu0 0
  %1138 = vmatpush.bf16.msra.mxu0 0
  %1139 = vmatpush.bf16.msra.mxu0 0
  %1140 = vmatpush.bf16.msra.mxu0 %v1124
  %1141 = vmatpush.bf16.msra.mxu0 %v1123
  %1142 = vmatpush.bf16.msra.mxu0 %v1122
  %1143 = vmatpush.bf16.msra.mxu0 %v1121
  %1144 = vmatmul.bf16.gmra.mxu0 %v1131
  %v1145 = vpop.f32.mrf.mxu0
  %v1146 = vadd.f32 %v1103, %v1145
  %v1147 = vpop.f32.mrf.mxu0
  %v1148 = vadd.f32 %v1103, %v1147
  %1149 = vmatmul.bf16.gmra.mxu0 %v1134
  %v1150 = vpop.f32.mrf.mxu0
  %v1151 = vadd.f32 %v1103, %v1150
  %v1152 = vpop.f32.mrf.mxu0
  %1153 = vdwg.mxu0
  %v1154 = vadd.f32 %v1039, %v1146
  %v1155 = vadd.f32 %v1040, %v1148
  %v1156 = vadd.f32 %v1041, %v1151
  %v1157 = vld [vmem:[%s17] sm:$0x1]
  %v1158 = vld [vmem:[%s18] sm:$0x1]
  %v1159 = vsel %vm285, %v1154, 0.0
  %1160 = vadd.xlane.f32.xlu0 %v1159
  %v1161 = vpop.xlane.xlu0 %1160
  %v1162 = vsel %vm285, %v1155, 0.0
  %1163 = vadd.xlane.f32.xlu0 %v1162
  %v1164 = vpop.xlane.xlu0 %1163
  %v1165 = vsel %vm288, %v1156, 0.0
  %1166 = vadd.xlane.f32.xlu0 %v1165
  %v1167 = vpop.xlane.xlu0 %1166
  %v1168 = vmul.f32 %v1161, %v972
  %v1169 = vmul.f32 %v1164, %v972
  %v1170 = vmul.f32 %v1167, %v972
  %v1171 = vsub.f32 %v1154, %v1168
  %v1172 = vsub.f32 %v1155, %v1169
  %v1173 = vsub.f32 %v1156, %v1170
  %v1174 = vmul.f32 %v1171, %v1171
  %v1175 = vmul.f32 %v1172, %v1172
  %v1176 = vmul.f32 %v1173, %v1173
  %v1177 = vsel %vm285, %v1174, 0.0
  %1178 = vadd.xlane.f32.xlu0 %v1177
  %v1179 = vpop.xlane.xlu0 %1178
  %v1180 = vsel %vm285, %v1175, 0.0
  %1181 = vadd.xlane.f32.xlu0 %v1180
  %v1182 = vpop.xlane.xlu0 %1181
  %v1183 = vsel %vm288, %v1176, 0.0
  %1184 = vadd.xlane.f32.xlu0 %v1183
  %v1185 = vpop.xlane.xlu0 %1184
  %v1186 = vmul.f32 %v1179, %v972
  %v1187 = vmul.f32 %v1182, %v972
  %v1188 = vmul.f32 %v1185, %v972
  %v1189 = vadd.f32 %v1186, 1e-05
  %v1190 = vadd.f32 %v1187, 1e-05
  %v1191 = vadd.f32 %v1188, 1e-05
  %v1192 = vrsqrt.pop %v1189
  %v1193 = vmul.f32 %v1192, %v1189
  %v1194 = vmul.f32 %v1193, %v1192
  %v1195 = vmul.f32 0.5, %v1194
  %v1196 = vsub.f32 1.5, %v1195
  %v1197 = vmul.f32 %v1192, %v1196
  %vm1198 = vweird.f32 %v1189
  %vm1199 = vweird.f32 %v1192
  %vm1200 = vmor %vm1198, %vm1199
  %v1201 = vsel %vm1200, %v1192, %v1197
  %v1202 = vrsqrt.pop %v1190
  %v1203 = vmul.f32 %v1202, %v1190
  %v1204 = vmul.f32 %v1203, %v1202
  %v1205 = vmul.f32 0.5, %v1204
  %v1206 = vsub.f32 1.5, %v1205
  %v1207 = vmul.f32 %v1202, %v1206
  %vm1208 = vweird.f32 %v1190
  %vm1209 = vweird.f32 %v1202
  %vm1210 = vmor %vm1208, %vm1209
  %v1211 = vsel %vm1210, %v1202, %v1207
  %v1212 = vrsqrt.pop %v1191
  %v1213 = vmul.f32 %v1212, %v1191
  %v1214 = vmul.f32 %v1213, %v1212
  %v1215 = vmul.f32 0.5, %v1214
  %v1216 = vsub.f32 1.5, %v1215
  %v1217 = vmul.f32 %v1212, %v1216
  %vm1218 = vweird.f32 %v1191
  %vm1219 = vweird.f32 %v1212
  %vm1220 = vmor %vm1218, %vm1219
  %v1221 = vsel %vm1220, %v1212, %v1217
  %v1222 = vmul.f32 %v1171, %v1201
  %v1223 = vmul.f32 %v1172, %v1211
  %v1224 = vmul.f32 %v1173, %v1221
  %v1226 = vperm.slane %v1157, 0
  %v1228 = vmul.f32 %v1222, %v1226
  %v1229 = vmul.f32 %v1223, %v1226
  %v1230 = vmul.f32 %v1224, %v1226
  %v1232 = vperm.slane %v1158, 0
  %v1234 = vadd.f32 %v1228, %v1232
  %v1235 = vadd.f32 %v1229, %v1232
  %v1236 = vadd.f32 %v1230, %v1232
  %v1237 = vadd.f32 %v1234, %v291
  %v1238 = vadd.f32 %v1235, %v292
  %v1239 = vadd.f32 %v1236, %v293
  %v1240 = vpack.c.bf16 %v1238, %v1237
  %v1241 = vpack.c.bf16 %v1239, %v1239
  %s1242 = scalar_lea.vmem %s9, 16
  %v1243 = vld [vmem:[%s1242] sm:$0xf]
  %v1244 = vld [vmem:[%s1242 + $0x4] sm:$0xf]
  %v1245 = vld [vmem:[%s1242 + $0x8] sm:$0xf]
  %v1246 = vld [vmem:[%s1242 + $0xc] sm:$0xf]
  %s1247 = scalar_lea.vmem %s10, 1
  %v1248 = vld [vmem:[%s1247] sm:$0x1]
  %v1250 = vperm.slane %v1248, 0
  %v1256 = vunpack.c.l.b16 %v1243
  %v1257 = vunpack.c.l.b16 %v1244
  %v1258 = vunpack.c.l.b16 %v1245
  %v1259 = vunpack.c.l.b16 %v1246
  %v1260 = vpack.c.b16 %v1257, %v1256
  %v1261 = vpack.c.b16 %v1259, %v1258
  %v1265 = vsel %vm285, %v1240, 0
  %v1268 = vsel %vm285, %v1241, 0
  %1270 = vmatpush.bf16.msra.mxu0 0
  %1271 = vmatpush.bf16.msra.mxu0 0
  %1272 = vmatpush.bf16.msra.mxu0 0
  %1273 = vmatpush.bf16.msra.mxu0 0
  %1274 = vmatpush.bf16.msra.mxu0 0
  %1275 = vmatpush.bf16.msra.mxu0 0
  %1276 = vmatpush.bf16.msra.mxu0 %v1261
  %1277 = vmatpush.bf16.msra.mxu0 %v1260
  %1278 = vmatmul.bf16.gmra.mxu0 %v1265
  %v1279 = vpop.f32.mrf.mxu0
  %v1280 = vadd.f32 %v1250, %v1279
  %v1281 = vpop.f32.mrf.mxu0
  %v1282 = vadd.f32 %v1250, %v1281
  %1283 = vmatmul.bf16.gmra.mxu0 %v1268
  %v1284 = vpop.f32.mrf.mxu0
  %v1285 = vadd.f32 %v1250, %v1284
  %v1286 = vpop.f32.mrf.mxu0
  %1287 = vdwg.mxu0
  %v1288 = vpack.c.bf16 %v1235, %v1234
  %v1289 = vpack.c.bf16 %v1236, %v1236
  %s1290 = scalar_lea.vmem %s11, 16
  %v1291 = vld [vmem:[%s1290] sm:$0xf]
  %v1292 = vld [vmem:[%s1290 + $0x4] sm:$0xf]
  %v1293 = vld [vmem:[%s1290 + $0x8] sm:$0xf]
  %v1294 = vld [vmem:[%s1290 + $0xc] sm:$0xf]
  %s1295 = scalar_lea.vmem %s12, 1
  %v1296 = vld [vmem:[%s1295] sm:$0x1]
  %v1298 = vperm.slane %v1296, 0
  %v1304 = vunpack.c.l.b16 %v1291
  %v1305 = vunpack.c.l.b16 %v1292
  %v1306 = vunpack.c.l.b16 %v1293
  %v1307 = vunpack.c.l.b16 %v1294
  %v1308 = vpack.c.b16 %v1305, %v1304
  %v1309 = vpack.c.b16 %v1307, %v1306
  %v1313 = vsel %vm285, %v1288, 0
  %v1316 = vsel %vm285, %v1289, 0
  %1318 = vmatpush.bf16.msra.mxu0 0
  %1319 = vmatpush.bf16.msra.mxu0 0
  %1320 = vmatpush.bf16.msra.mxu0 0
  %1321 = vmatpush.bf16.msra.mxu0 0
  %1322 = vmatpush.bf16.msra.mxu0 0
  %1323 = vmatpush.bf16.msra.mxu0 0
  %1324 = vmatpush.bf16.msra.mxu0 %v1309
  %1325 = vmatpush.bf16.msra.mxu0 %v1308
  %1326 = vmatmul.bf16.gmra.mxu0 %v1313
  %v1327 = vpop.f32.mrf.mxu0
  %v1328 = vadd.f32 %v1298, %v1327
  %v1329 = vpop.f32.mrf.mxu0
  %v1330 = vadd.f32 %v1298, %v1329
  %1331 = vmatmul.bf16.gmra.mxu0 %v1316
  %v1332 = vpop.f32.mrf.mxu0
  %v1333 = vadd.f32 %v1298, %v1332
  %v1334 = vpop.f32.mrf.mxu0
  %1335 = vdwg.mxu0
  %1339 = vrot.lane.b32.xlu0 %v1280, 96
  %v1340 = vpop.permute.xlu0 %1339
  %1341 = vrot.lane.b32.xlu0 %v1282, 96
  %v1342 = vpop.permute.xlu0 %1341
  %1343 = vrot.lane.b32.xlu0 %v1285, 96
  %v1344 = vpop.permute.xlu0 %1343
  %1348 = vxpose.xlu0.b32.start [1/16] %v1340, 128
  %1349 = vxpose.xlu0.b32.cont [2/16] %v1342, 128
  %1350 = vxpose.xlu0.b32.cont [3/16] %v1344, 128
  %1351 = vxpose.xlu0.b32.cont [4/16] 0.0, 128
  %1352 = vxpose.xlu0.b32.cont [5/16] 0.0, 128
  %1353 = vxpose.xlu0.b32.cont [6/16] 0.0, 128
  %1354 = vxpose.xlu0.b32.cont [7/16] 0.0, 128
  %1355 = vxpose.xlu0.b32.cont [8/16] 0.0, 128
  %1356 = vxpose.xlu0.b32.cont [9/16] 0.0, 128
  %1357 = vxpose.xlu0.b32.cont [10/16] 0.0, 128
  %1358 = vxpose.xlu0.b32.cont [11/16] 0.0, 128
  %1359 = vxpose.xlu0.b32.cont [12/16] 0.0, 128
  %1360 = vxpose.xlu0.b32.cont [13/16] 0.0, 128
  %1361 = vxpose.xlu0.b32.cont [14/16] 0.0, 128
  %1362 = vxpose.xlu0.b32.cont [15/16] 0.0, 128
  %1363 = vxpose.xlu0.b32.end [16/16] 0.0, 128
  %v1364 = vpop.trf.xlu0
  %v1365 = vpop.trf.xlu0
  %v1366 = vpop.trf.xlu0
  %v1367 = vpop.trf.xlu0
  %v1368 = vpop.trf.xlu0
  %v1369 = vpop.trf.xlu0
  %v1370 = vpop.trf.xlu0
  %v1371 = vpop.trf.xlu0
  %v1372 = vpop.trf.xlu0
  %v1373 = vpop.trf.xlu0
  %v1374 = vpop.trf.xlu0
  %v1375 = vpop.trf.xlu0
  %v1376 = vpop.trf.xlu0
  %v1377 = vpop.trf.xlu0
  %v1378 = vpop.trf.xlu0
  %v1379 = vpop.trf.xlu0
  %v1380 = vpack.c.bf16 %v1282, %v1280
  %v1381 = vpack.c.bf16 %v1285, %v1285
  %v1382 = vpack.c.bf16 %v1364, %v1364
  %v1384 = vsel %vm436, %v1380, 0
  %v1387 = vsel %vm436, %v1381, 0
  %v1390 = vsel %vm193, %v1382, 0
  %1392 = vmatpush.bf16.msra.mxu0 0
  %1393 = vmatpush.bf16.msra.mxu0 0
  %1394 = vmatpush.bf16.msra.mxu0 0
  %1395 = vmatpush.bf16.msra.mxu0 0
  %1396 = vmatpush.bf16.msra.mxu0 0
  %1397 = vmatpush.bf16.msra.mxu0 0
  %1398 = vmatpush.bf16.msra.mxu0 0
  %1399 = vmatpush.bf16.msra.mxu0 %v1390
  %1400 = vmatmul.bf16.gmra.mxu0 %v1384
  %v1401 = vpop.f32.mrf.mxu0
  %v1402 = vadd.f32 0.0, %v1401
  %v1403 = vpop.f32.mrf.mxu0
  %v1404 = vadd.f32 0.0, %v1403
  %1405 = vmatmul.bf16.gmra.mxu0 %v1387
  %v1406 = vpop.f32.mrf.mxu0
  %v1407 = vadd.f32 0.0, %v1406
  %v1408 = vpop.f32.mrf.mxu0
  %1409 = vdwg.mxu0
  %v1410 = vmul.f32 %v1402, 0.35355338
  %v1411 = vmul.f32 %v1404, 0.35355338
  %v1412 = vmul.f32 %v1407, 0.35355338
  %v1413 = vadd.f32 %v1410, %v468
  %v1414 = vadd.f32 %v1411, %v468
  %v1415 = vadd.f32 %v1412, %v468
  %v1416 = vsel %vm473, %v1413, -inf
  %1417 = vmax.xlane.f32.xlu0 %v1416
  %v1418 = vpop.xlane.xlu0 %1417
  %v1419 = vsel %vm473, %v1414, -inf
  %1420 = vmax.xlane.f32.xlu0 %v1419
  %v1421 = vpop.xlane.xlu0 %1420
  %v1422 = vsel %vm480, %v1415, -inf
  %1423 = vmax.xlane.f32.xlu0 %v1422
  %v1424 = vpop.xlane.xlu0 %1423
  %v1425 = vsub.f32 %v1413, %v1418
  %v1426 = vsub.f32 %v1414, %v1421
  %v1427 = vsub.f32 %v1415, %v1424
  %v1428 = vmul.f32 %v1425, 1.442695
  %v1429 = vpow.pop %v1428
  %v1430 = vmul.f32 %v1426, 1.442695
  %v1431 = vpow.pop %v1430
  %v1432 = vmul.f32 %v1427, 1.442695
  %v1433 = vpow.pop %v1432
  %v1434 = vsel %vm473, %v1429, 0.0
  %1435 = vadd.xlane.f32.xlu0 %v1434
  %v1436 = vpop.xlane.xlu0 %1435
  %v1437 = vsel %vm473, %v1431, 0.0
  %1438 = vadd.xlane.f32.xlu0 %v1437
  %v1439 = vpop.xlane.xlu0 %1438
  %v1440 = vsel %vm480, %v1433, 0.0
  %1441 = vadd.xlane.f32.xlu0 %v1440
  %v1442 = vpop.xlane.xlu0 %1441
  %v1443 = vrcp.pop %v1436
  %v1444 = vrcp.pop %v1439
  %v1445 = vrcp.pop %v1442
  %v1446 = vmul.f32 %v1429, %v1443
  %v1447 = vmul.f32 %v1431, %v1444
  %v1448 = vmul.f32 %v1433, %v1445
  %v1449 = vpack.c.bf16 %v1447, %v1446
  %v1450 = vpack.c.bf16 %v1448, %v1448
  %v1451 = vpack.c.bf16 %v1330, %v1328
  %v1452 = vpack.c.bf16 %v1333, %v1333
  %v1454 = vsel %vm473, %v1449, 0
  %v1457 = vsel %vm473, %v1450, 0
  %v1460 = vand.u32 %v1452, %v519
  %1462 = vmatpush.bf16.msra.mxu0 0
  %1463 = vmatpush.bf16.msra.mxu0 0
  %1464 = vmatpush.bf16.msra.mxu0 0
  %1465 = vmatpush.bf16.msra.mxu0 0
  %1466 = vmatpush.bf16.msra.mxu0 0
  %1467 = vmatpush.bf16.msra.mxu0 0
  %1468 = vmatpush.bf16.msra.mxu0 %v1460
  %1469 = vmatpush.bf16.msra.mxu0 %v1451
  %1470 = vmatmul.bf16.gmra.mxu0 %v1454
  %v1471 = vpop.f32.mrf.mxu0
  %v1472 = vadd.f32 0.0, %v1471
  %v1473 = vpop.f32.mrf.mxu0
  %v1474 = vadd.f32 0.0, %v1473
  %1475 = vmatmul.bf16.gmra.mxu0 %v1457
  %v1476 = vpop.f32.mrf.mxu0
  %v1477 = vadd.f32 0.0, %v1476
  %v1478 = vpop.f32.mrf.mxu0
  %1479 = vdwg.mxu0
  %v1480 = vpack.c.bf16 %v1365, %v1365
  %1483 = vrot.lane.b32.xlu0 %v1380, 120
  %v1484 = vpop.permute.xlu0 %1483
  %1485 = vrot.lane.b32.xlu0 %v1381, 120
  %v1486 = vpop.permute.xlu0 %1485
  %v1488 = vsel %vm436, %v1484, 0
  %v1491 = vsel %vm436, %v1486, 0
  %v1494 = vsel %vm193, %v1480, 0
  %1496 = vmatpush.bf16.msra.mxu0 0
  %1497 = vmatpush.bf16.msra.mxu0 0
  %1498 = vmatpush.bf16.msra.mxu0 0
  %1499 = vmatpush.bf16.msra.mxu0 0
  %1500 = vmatpush.bf16.msra.mxu0 0
  %1501 = vmatpush.bf16.msra.mxu0 0
  %1502 = vmatpush.bf16.msra.mxu0 0
  %1503 = vmatpush.bf16.msra.mxu0 %v1494
  %1504 = vmatmul.bf16.gmra.mxu0 %v1488
  %v1505 = vpop.f32.mrf.mxu0
  %v1506 = vadd.f32 0.0, %v1505
  %v1507 = vpop.f32.mrf.mxu0
  %v1508 = vadd.f32 0.0, %v1507
  %1509 = vmatmul.bf16.gmra.mxu0 %v1491
  %v1510 = vpop.f32.mrf.mxu0
  %v1511 = vadd.f32 0.0, %v1510
  %v1512 = vpop.f32.mrf.mxu0
  %1513 = vdwg.mxu0
  %v1514 = vmul.f32 %v1506, 0.35355338
  %v1515 = vmul.f32 %v1508, 0.35355338
  %v1516 = vmul.f32 %v1511, 0.35355338
  %v1517 = vadd.f32 %v1514, %v468
  %v1518 = vadd.f32 %v1515, %v468
  %v1519 = vadd.f32 %v1516, %v468
  %v1520 = vsel %vm473, %v1517, -inf
  %1521 = vmax.xlane.f32.xlu0 %v1520
  %v1522 = vpop.xlane.xlu0 %1521
  %v1523 = vsel %vm473, %v1518, -inf
  %1524 = vmax.xlane.f32.xlu0 %v1523
  %v1525 = vpop.xlane.xlu0 %1524
  %v1526 = vsel %vm480, %v1519, -inf
  %1527 = vmax.xlane.f32.xlu0 %v1526
  %v1528 = vpop.xlane.xlu0 %1527
  %v1529 = vsub.f32 %v1517, %v1522
  %v1530 = vsub.f32 %v1518, %v1525
  %v1531 = vsub.f32 %v1519, %v1528
  %v1532 = vmul.f32 %v1529, 1.442695
  %v1533 = vpow.pop %v1532
  %v1534 = vmul.f32 %v1530, 1.442695
  %v1535 = vpow.pop %v1534
  %v1536 = vmul.f32 %v1531, 1.442695
  %v1537 = vpow.pop %v1536
  %v1538 = vsel %vm473, %v1533, 0.0
  %1539 = vadd.xlane.f32.xlu0 %v1538
  %v1540 = vpop.xlane.xlu0 %1539
  %v1541 = vsel %vm473, %v1535, 0.0
  %1542 = vadd.xlane.f32.xlu0 %v1541
  %v1543 = vpop.xlane.xlu0 %1542
  %v1544 = vsel %vm480, %v1537, 0.0
  %1545 = vadd.xlane.f32.xlu0 %v1544
  %v1546 = vpop.xlane.xlu0 %1545
  %v1547 = vrcp.pop %v1540
  %v1548 = vrcp.pop %v1543
  %v1549 = vrcp.pop %v1546
  %v1550 = vmul.f32 %v1533, %v1547
  %v1551 = vmul.f32 %v1535, %v1548
  %v1552 = vmul.f32 %v1537, %v1549
  %v1553 = vpack.c.bf16 %v1551, %v1550
  %v1554 = vpack.c.bf16 %v1552, %v1552
  %1557 = vrot.lane.b32.xlu0 %v1451, 120
  %v1558 = vpop.permute.xlu0 %1557
  %1559 = vrot.lane.b32.xlu0 %v1452, 120
  %v1560 = vpop.permute.xlu0 %1559
  %v1563 = vsel %vm473, %v1553, 0
  %v1566 = vsel %vm473, %v1554, 0
  %v1569 = vand.u32 %v1560, %v519
  %1571 = vmatpush.bf16.msra.mxu0 0
  %1572 = vmatpush.bf16.msra.mxu0 0
  %1573 = vmatpush.bf16.msra.mxu0 0
  %1574 = vmatpush.bf16.msra.mxu0 0
  %1575 = vmatpush.bf16.msra.mxu0 0
  %1576 = vmatpush.bf16.msra.mxu0 0
  %1577 = vmatpush.bf16.msra.mxu0 %v1569
  %1578 = vmatpush.bf16.msra.mxu0 %v1558
  %1579 = vmatmul.bf16.gmra.mxu0 %v1563
  %v1580 = vpop.f32.mrf.mxu0
  %v1581 = vadd.f32 0.0, %v1580
  %v1582 = vpop.f32.mrf.mxu0
  %v1583 = vadd.f32 0.0, %v1582
  %1584 = vmatmul.bf16.gmra.mxu0 %v1566
  %v1585 = vpop.f32.mrf.mxu0
  %v1586 = vadd.f32 0.0, %v1585
  %v1587 = vpop.f32.mrf.mxu0
  %1588 = vdwg.mxu0
  %v1589 = vpack.c.bf16 %v1366, %v1366
  %1590 = vrot.lane.b32.xlu0 %v1380, 112
  %v1591 = vpop.permute.xlu0 %1590
  %1592 = vrot.lane.b32.xlu0 %v1381, 112
  %v1593 = vpop.permute.xlu0 %1592
  %v1595 = vsel %vm436, %v1591, 0
  %v1598 = vsel %vm436, %v1593, 0
  %v1601 = vsel %vm193, %v1589, 0
  %1603 = vmatpush.bf16.msra.mxu0 0
  %1604 = vmatpush.bf16.msra.mxu0 0
  %1605 = vmatpush.bf16.msra.mxu0 0
  %1606 = vmatpush.bf16.msra.mxu0 0
  %1607 = vmatpush.bf16.msra.mxu0 0
  %1608 = vmatpush.bf16.msra.mxu0 0
  %1609 = vmatpush.bf16.msra.mxu0 0
  %1610 = vmatpush.bf16.msra.mxu0 %v1601
  %1611 = vmatmul.bf16.gmra.mxu0 %v1595
  %v1612 = vpop.f32.mrf.mxu0
  %v1613 = vadd.f32 0.0, %v1612
  %v1614 = vpop.f32.mrf.mxu0
  %v1615 = vadd.f32 0.0, %v1614
  %1616 = vmatmul.bf16.gmra.mxu0 %v1598
  %v1617 = vpop.f32.mrf.mxu0
  %v1618 = vadd.f32 0.0, %v1617
  %v1619 = vpop.f32.mrf.mxu0
  %1620 = vdwg.mxu0
  %v1621 = vmul.f32 %v1613, 0.35355338
  %v1622 = vmul.f32 %v1615, 0.35355338
  %v1623 = vmul.f32 %v1618, 0.35355338
  %v1624 = vadd.f32 %v1621, %v468
  %v1625 = vadd.f32 %v1622, %v468
  %v1626 = vadd.f32 %v1623, %v468
  %v1627 = vsel %vm473, %v1624, -inf
  %1628 = vmax.xlane.f32.xlu0 %v1627
  %v1629 = vpop.xlane.xlu0 %1628
  %v1630 = vsel %vm473, %v1625, -inf
  %1631 = vmax.xlane.f32.xlu0 %v1630
  %v1632 = vpop.xlane.xlu0 %1631
  %v1633 = vsel %vm480, %v1626, -inf
  %1634 = vmax.xlane.f32.xlu0 %v1633
  %v1635 = vpop.xlane.xlu0 %1634
  %v1636 = vsub.f32 %v1624, %v1629
  %v1637 = vsub.f32 %v1625, %v1632
  %v1638 = vsub.f32 %v1626, %v1635
  %v1639 = vmul.f32 %v1636, 1.442695
  %v1640 = vpow.pop %v1639
  %v1641 = vmul.f32 %v1637, 1.442695
  %v1642 = vpow.pop %v1641
  %v1643 = vmul.f32 %v1638, 1.442695
  %v1644 = vpow.pop %v1643
  %v1645 = vsel %vm473, %v1640, 0.0
  %1646 = vadd.xlane.f32.xlu0 %v1645
  %v1647 = vpop.xlane.xlu0 %1646
  %v1648 = vsel %vm473, %v1642, 0.0
  %1649 = vadd.xlane.f32.xlu0 %v1648
  %v1650 = vpop.xlane.xlu0 %1649
  %v1651 = vsel %vm480, %v1644, 0.0
  %1652 = vadd.xlane.f32.xlu0 %v1651
  %v1653 = vpop.xlane.xlu0 %1652
  %v1654 = vrcp.pop %v1647
  %v1655 = vrcp.pop %v1650
  %v1656 = vrcp.pop %v1653
  %v1657 = vmul.f32 %v1640, %v1654
  %v1658 = vmul.f32 %v1642, %v1655
  %v1659 = vmul.f32 %v1644, %v1656
  %v1660 = vpack.c.bf16 %v1658, %v1657
  %v1661 = vpack.c.bf16 %v1659, %v1659
  %1662 = vrot.lane.b32.xlu0 %v1451, 112
  %v1663 = vpop.permute.xlu0 %1662
  %1664 = vrot.lane.b32.xlu0 %v1452, 112
  %v1665 = vpop.permute.xlu0 %1664
  %v1668 = vsel %vm473, %v1660, 0
  %v1671 = vsel %vm473, %v1661, 0
  %v1674 = vand.u32 %v1665, %v519
  %1676 = vmatpush.bf16.msra.mxu0 0
  %1677 = vmatpush.bf16.msra.mxu0 0
  %1678 = vmatpush.bf16.msra.mxu0 0
  %1679 = vmatpush.bf16.msra.mxu0 0
  %1680 = vmatpush.bf16.msra.mxu0 0
  %1681 = vmatpush.bf16.msra.mxu0 0
  %1682 = vmatpush.bf16.msra.mxu0 %v1674
  %1683 = vmatpush.bf16.msra.mxu0 %v1663
  %1684 = vmatmul.bf16.gmra.mxu0 %v1668
  %v1685 = vpop.f32.mrf.mxu0
  %v1686 = vadd.f32 0.0, %v1685
  %v1687 = vpop.f32.mrf.mxu0
  %v1688 = vadd.f32 0.0, %v1687
  %1689 = vmatmul.bf16.gmra.mxu0 %v1671
  %v1690 = vpop.f32.mrf.mxu0
  %v1691 = vadd.f32 0.0, %v1690
  %v1692 = vpop.f32.mrf.mxu0
  %1693 = vdwg.mxu0
  %v1694 = vpack.c.bf16 %v1367, %v1367
  %1695 = vrot.lane.b32.xlu0 %v1380, 104
  %v1696 = vpop.permute.xlu0 %1695
  %1697 = vrot.lane.b32.xlu0 %v1381, 104
  %v1698 = vpop.permute.xlu0 %1697
  %v1700 = vsel %vm436, %v1696, 0
  %v1703 = vsel %vm436, %v1698, 0
  %v1706 = vsel %vm193, %v1694, 0
  %1708 = vmatpush.bf16.msra.mxu0 0
  %1709 = vmatpush.bf16.msra.mxu0 0
  %1710 = vmatpush.bf16.msra.mxu0 0
  %1711 = vmatpush.bf16.msra.mxu0 0
  %1712 = vmatpush.bf16.msra.mxu0 0
  %1713 = vmatpush.bf16.msra.mxu0 0
  %1714 = vmatpush.bf16.msra.mxu0 0
  %1715 = vmatpush.bf16.msra.mxu0 %v1706
  %1716 = vmatmul.bf16.gmra.mxu0 %v1700
  %v1717 = vpop.f32.mrf.mxu0
  %v1718 = vadd.f32 0.0, %v1717
  %v1719 = vpop.f32.mrf.mxu0
  %v1720 = vadd.f32 0.0, %v1719
  %1721 = vmatmul.bf16.gmra.mxu0 %v1703
  %v1722 = vpop.f32.mrf.mxu0
  %v1723 = vadd.f32 0.0, %v1722
  %v1724 = vpop.f32.mrf.mxu0
  %1725 = vdwg.mxu0
  %v1726 = vmul.f32 %v1718, 0.35355338
  %v1727 = vmul.f32 %v1720, 0.35355338
  %v1728 = vmul.f32 %v1723, 0.35355338
  %v1729 = vadd.f32 %v1726, %v468
  %v1730 = vadd.f32 %v1727, %v468
  %v1731 = vadd.f32 %v1728, %v468
  %v1732 = vsel %vm473, %v1729, -inf
  %1733 = vmax.xlane.f32.xlu0 %v1732
  %v1734 = vpop.xlane.xlu0 %1733
  %v1735 = vsel %vm473, %v1730, -inf
  %1736 = vmax.xlane.f32.xlu0 %v1735
  %v1737 = vpop.xlane.xlu0 %1736
  %v1738 = vsel %vm480, %v1731, -inf
  %1739 = vmax.xlane.f32.xlu0 %v1738
  %v1740 = vpop.xlane.xlu0 %1739
  %v1741 = vsub.f32 %v1729, %v1734
  %v1742 = vsub.f32 %v1730, %v1737
  %v1743 = vsub.f32 %v1731, %v1740
  %v1744 = vmul.f32 %v1741, 1.442695
  %v1745 = vpow.pop %v1744
  %v1746 = vmul.f32 %v1742, 1.442695
  %v1747 = vpow.pop %v1746
  %v1748 = vmul.f32 %v1743, 1.442695
  %v1749 = vpow.pop %v1748
  %v1750 = vsel %vm473, %v1745, 0.0
  %1751 = vadd.xlane.f32.xlu0 %v1750
  %v1752 = vpop.xlane.xlu0 %1751
  %v1753 = vsel %vm473, %v1747, 0.0
  %1754 = vadd.xlane.f32.xlu0 %v1753
  %v1755 = vpop.xlane.xlu0 %1754
  %v1756 = vsel %vm480, %v1749, 0.0
  %1757 = vadd.xlane.f32.xlu0 %v1756
  %v1758 = vpop.xlane.xlu0 %1757
  %v1759 = vrcp.pop %v1752
  %v1760 = vrcp.pop %v1755
  %v1761 = vrcp.pop %v1758
  %v1762 = vmul.f32 %v1745, %v1759
  %v1763 = vmul.f32 %v1747, %v1760
  %v1764 = vmul.f32 %v1749, %v1761
  %v1765 = vpack.c.bf16 %v1763, %v1762
  %v1766 = vpack.c.bf16 %v1764, %v1764
  %1767 = vrot.lane.b32.xlu0 %v1451, 104
  %v1768 = vpop.permute.xlu0 %1767
  %1769 = vrot.lane.b32.xlu0 %v1452, 104
  %v1770 = vpop.permute.xlu0 %1769
  %v1773 = vsel %vm473, %v1765, 0
  %v1776 = vsel %vm473, %v1766, 0
  %v1779 = vand.u32 %v1770, %v519
  %1781 = vmatpush.bf16.msra.mxu0 0
  %1782 = vmatpush.bf16.msra.mxu0 0
  %1783 = vmatpush.bf16.msra.mxu0 0
  %1784 = vmatpush.bf16.msra.mxu0 0
  %1785 = vmatpush.bf16.msra.mxu0 0
  %1786 = vmatpush.bf16.msra.mxu0 0
  %1787 = vmatpush.bf16.msra.mxu0 %v1779
  %1788 = vmatpush.bf16.msra.mxu0 %v1768
  %1789 = vmatmul.bf16.gmra.mxu0 %v1773
  %v1790 = vpop.f32.mrf.mxu0
  %v1791 = vadd.f32 0.0, %v1790
  %v1792 = vpop.f32.mrf.mxu0
  %v1793 = vadd.f32 0.0, %v1792
  %1794 = vmatmul.bf16.gmra.mxu0 %v1776
  %v1795 = vpop.f32.mrf.mxu0
  %v1796 = vadd.f32 0.0, %v1795
  %v1797 = vpop.f32.mrf.mxu0
  %1798 = vdwg.mxu0
  %1802 = vrot.lane.b32.xlu0 %v1581, 8
  %v1803 = vpop.permute.xlu0 %1802
  %1804 = vrot.lane.b32.xlu0 %v1583, 8
  %v1805 = vpop.permute.xlu0 %1804
  %1806 = vrot.lane.b32.xlu0 %v1586, 8
  %v1807 = vpop.permute.xlu0 %1806
  %1814 = vrot.lane.b32.xlu0 %v1686, 16
  %v1815 = vpop.permute.xlu0 %1814
  %1816 = vrot.lane.b32.xlu0 %v1688, 16
  %v1817 = vpop.permute.xlu0 %1816
  %1818 = vrot.lane.b32.xlu0 %v1691, 16
  %v1819 = vpop.permute.xlu0 %1818
  %1826 = vrot.lane.b32.xlu0 %v1791, 24
  %v1827 = vpop.permute.xlu0 %1826
  %1828 = vrot.lane.b32.xlu0 %v1793, 24
  %v1829 = vpop.permute.xlu0 %1828
  %1830 = vrot.lane.b32.xlu0 %v1796, 24
  %v1831 = vpop.permute.xlu0 %1830
  %v1835 = vsel %vm436, %v1472, %v1803
  %v1836 = vsel %vm436, %v1474, %v1805
  %v1837 = vsel %vm436, %v1477, %v1807
  %v1838 = vsel %vm899, %v1835, %v1815
  %v1839 = vsel %vm899, %v1836, %v1817
  %v1840 = vsel %vm899, %v1837, %v1819
  %v1841 = vsel %vm129, %v1838, %v1827
  %v1842 = vsel %vm129, %v1839, %v1829
  %v1843 = vsel %vm129, %v1840, %v1831
  %v1844 = vpack.c.bf16 %v1842, %v1841
  %v1845 = vpack.c.bf16 %v1843, %v1843
  %s1846 = scalar_lea.vmem %s13, 16
  %v1847 = vld [vmem:[%s1846] sm:$0xf]
  %v1848 = vld [vmem:[%s1846 + $0x4] sm:$0xf]
  %v1849 = vld [vmem:[%s1846 + $0x8] sm:$0xf]
  %v1850 = vld [vmem:[%s1846 + $0xc] sm:$0xf]
  %s1851 = scalar_lea.vmem %s14, 1
  %v1852 = vld [vmem:[%s1851] sm:$0x1]
  %v1854 = vperm.slane %v1852, 0
  %v1860 = vunpack.c.l.b16 %v1847
  %v1861 = vunpack.c.l.b16 %v1848
  %v1862 = vunpack.c.l.b16 %v1849
  %v1863 = vunpack.c.l.b16 %v1850
  %v1864 = vpack.c.b16 %v1861, %v1860
  %v1865 = vpack.c.b16 %v1863, %v1862
  %v1869 = vsel %vm285, %v1844, 0
  %v1872 = vsel %vm285, %v1845, 0
  %1874 = vmatpush.bf16.msra.mxu0 0
  %1875 = vmatpush.bf16.msra.mxu0 0
  %1876 = vmatpush.bf16.msra.mxu0 0
  %1877 = vmatpush.bf16.msra.mxu0 0
  %1878 = vmatpush.bf16.msra.mxu0 0
  %1879 = vmatpush.bf16.msra.mxu0 0
  %1880 = vmatpush.bf16.msra.mxu0 %v1865
  %1881 = vmatpush.bf16.msra.mxu0 %v1864
  %1882 = vmatmul.bf16.gmra.mxu0 %v1869
  %v1883 = vpop.f32.mrf.mxu0
  %v1884 = vadd.f32 %v1854, %v1883
  %v1885 = vpop.f32.mrf.mxu0
  %v1886 = vadd.f32 %v1854, %v1885
  %1887 = vmatmul.bf16.gmra.mxu0 %v1872
  %v1888 = vpop.f32.mrf.mxu0
  %v1889 = vadd.f32 %v1854, %v1888
  %v1890 = vpop.f32.mrf.mxu0
  %1891 = vdwg.mxu0
  %v1892 = vadd.f32 %v1234, %v1884
  %v1893 = vadd.f32 %v1235, %v1886
  %v1894 = vadd.f32 %v1236, %v1889
  %s1895 = scalar_lea.vmem %s15, 1
  %v1896 = vld [vmem:[%s1895] sm:$0x1]
  %s1897 = scalar_lea.vmem %s16, 1
  %v1898 = vld [vmem:[%s1897] sm:$0x1]
  %v1899 = vsel %vm285, %v1892, 0.0
  %1900 = vadd.xlane.f32.xlu0 %v1899
  %v1901 = vpop.xlane.xlu0 %1900
  %v1902 = vsel %vm285, %v1893, 0.0
  %1903 = vadd.xlane.f32.xlu0 %v1902
  %v1904 = vpop.xlane.xlu0 %1903
  %v1905 = vsel %vm288, %v1894, 0.0
  %1906 = vadd.xlane.f32.xlu0 %v1905
  %v1907 = vpop.xlane.xlu0 %1906
  %v1908 = vmul.f32 %v1901, %v972
  %v1909 = vmul.f32 %v1904, %v972
  %v1910 = vmul.f32 %v1907, %v972
  %v1911 = vsub.f32 %v1892, %v1908
  %v1912 = vsub.f32 %v1893, %v1909
  %v1913 = vsub.f32 %v1894, %v1910
  %v1914 = vmul.f32 %v1911, %v1911
  %v1915 = vmul.f32 %v1912, %v1912
  %v1916 = vmul.f32 %v1913, %v1913
  %v1917 = vsel %vm285, %v1914, 0.0
  %1918 = vadd.xlane.f32.xlu0 %v1917
  %v1919 = vpop.xlane.xlu0 %1918
  %v1920 = vsel %vm285, %v1915, 0.0
  %1921 = vadd.xlane.f32.xlu0 %v1920
  %v1922 = vpop.xlane.xlu0 %1921
  %v1923 = vsel %vm288, %v1916, 0.0
  %1924 = vadd.xlane.f32.xlu0 %v1923
  %v1925 = vpop.xlane.xlu0 %1924
  %v1926 = vmul.f32 %v1919, %v972
  %v1927 = vmul.f32 %v1922, %v972
  %v1928 = vmul.f32 %v1925, %v972
  %v1929 = vadd.f32 %v1926, 1e-05
  %v1930 = vadd.f32 %v1927, 1e-05
  %v1931 = vadd.f32 %v1928, 1e-05
  %v1932 = vrsqrt.pop %v1929
  %v1933 = vmul.f32 %v1932, %v1929
  %v1934 = vmul.f32 %v1933, %v1932
  %v1935 = vmul.f32 0.5, %v1934
  %v1936 = vsub.f32 1.5, %v1935
  %v1937 = vmul.f32 %v1932, %v1936
  %vm1938 = vweird.f32 %v1929
  %vm1939 = vweird.f32 %v1932
  %vm1940 = vmor %vm1938, %vm1939
  %v1941 = vsel %vm1940, %v1932, %v1937
  %v1942 = vrsqrt.pop %v1930
  %v1943 = vmul.f32 %v1942, %v1930
  %v1944 = vmul.f32 %v1943, %v1942
  %v1945 = vmul.f32 0.5, %v1944
  %v1946 = vsub.f32 1.5, %v1945
  %v1947 = vmul.f32 %v1942, %v1946
  %vm1948 = vweird.f32 %v1930
  %vm1949 = vweird.f32 %v1942
  %vm1950 = vmor %vm1948, %vm1949
  %v1951 = vsel %vm1950, %v1942, %v1947
  %v1952 = vrsqrt.pop %v1931
  %v1953 = vmul.f32 %v1952, %v1931
  %v1954 = vmul.f32 %v1953, %v1952
  %v1955 = vmul.f32 0.5, %v1954
  %v1956 = vsub.f32 1.5, %v1955
  %v1957 = vmul.f32 %v1952, %v1956
  %vm1958 = vweird.f32 %v1931
  %vm1959 = vweird.f32 %v1952
  %vm1960 = vmor %vm1958, %vm1959
  %v1961 = vsel %vm1960, %v1952, %v1957
  %v1962 = vmul.f32 %v1911, %v1941
  %v1963 = vmul.f32 %v1912, %v1951
  %v1964 = vmul.f32 %v1913, %v1961
  %v1966 = vperm.slane %v1896, 0
  %v1968 = vmul.f32 %v1962, %v1966
  %v1969 = vmul.f32 %v1963, %v1966
  %v1970 = vmul.f32 %v1964, %v1966
  %v1972 = vperm.slane %v1898, 0
  %v1974 = vadd.f32 %v1968, %v1972
  %v1975 = vadd.f32 %v1969, %v1972
  %v1976 = vadd.f32 %v1970, %v1972
  %v1977 = vpack.c.bf16 %v1975, %v1974
  %v1978 = vpack.c.bf16 %v1976, %v1976
  %s1979 = scalar_lea.vmem %s19, 16
  %v1980 = vld [vmem:[%s1979] sm:$0xf]
  %v1981 = vld [vmem:[%s1979 + $0x4] sm:$0xf]
  %v1982 = vld [vmem:[%s1979 + $0x8] sm:$0xf]
  %v1983 = vld [vmem:[%s1979 + $0xc] sm:$0xf]
  %s1984 = scalar_lea.vmem %s20, 1
  %v1985 = vld [vmem:[%s1984] sm:$0x1]
  %v1987 = vperm.slane %v1985, 0
  %v1993 = vunpack.c.l.b16 %v1980
  %v1994 = vunpack.c.l.b16 %v1981
  %v1995 = vunpack.c.l.b16 %v1982
  %v1996 = vunpack.c.l.b16 %v1983
  %v1997 = vpack.c.b16 %v1994, %v1993
  %v1998 = vpack.c.b16 %v1996, %v1995
  %v2002 = vsel %vm285, %v1977, 0
  %v2005 = vsel %vm285, %v1978, 0
  %2007 = vmatpush.bf16.msra.mxu0 0
  %2008 = vmatpush.bf16.msra.mxu0 0
  %2009 = vmatpush.bf16.msra.mxu0 0
  %2010 = vmatpush.bf16.msra.mxu0 0
  %2011 = vmatpush.bf16.msra.mxu0 0
  %2012 = vmatpush.bf16.msra.mxu0 0
  %2013 = vmatpush.bf16.msra.mxu0 %v1998
  %2014 = vmatpush.bf16.msra.mxu0 %v1997
  %2015 = vmatmul.bf16.gmra.mxu0 %v2002
  %v2016 = vpop.f32.mrf.mxu0
  %v2017 = vadd.f32 %v1987, %v2016
  %v2018 = vpop.f32.mrf.mxu0
  %v2019 = vadd.f32 %v1987, %v2018
  %2020 = vmatmul.bf16.gmra.mxu0 %v2005
  %v2021 = vpop.f32.mrf.mxu0
  %v2022 = vadd.f32 %v1987, %v2021
  %v2023 = vpop.f32.mrf.mxu0
  %2024 = vdwg.mxu0
  %v2025 = vmax.f32 %v2017, 0.0
  %v2026 = vmax.f32 %v2019, 0.0
  %v2027 = vmax.f32 %v2022, 0.0
  %v2028 = vpack.c.bf16 %v2026, %v2025
  %v2029 = vpack.c.bf16 %v2027, %v2027
  %s2030 = scalar_lea.vmem %s21, 32
  %v2031 = vld [vmem:[%s2030] sm:$0xf]
  %v2032 = vld [vmem:[%s2030 + $0x4] sm:$0xf]
  %v2033 = vld [vmem:[%s2030 + $0x8] sm:$0xf]
  %v2034 = vld [vmem:[%s2030 + $0xc] sm:$0xf]
  %v2035 = vld [vmem:[%s2030 + $0x10] sm:$0xf]
  %v2036 = vld [vmem:[%s2030 + $0x14] sm:$0xf]
  %v2037 = vld [vmem:[%s2030 + $0x18] sm:$0xf]
  %v2038 = vld [vmem:[%s2030 + $0x1c] sm:$0xf]
  %s2039 = scalar_lea.vmem %s22, 1
  %v2040 = vld [vmem:[%s2039] sm:$0x1]
  %v2042 = vperm.slane %v2040, 0
  %v2052 = vunpack.c.l.b16 %v2031
  %v2053 = vunpack.c.l.b16 %v2032
  %v2054 = vunpack.c.l.b16 %v2033
  %v2055 = vunpack.c.l.b16 %v2034
  %v2056 = vunpack.c.l.b16 %v2035
  %v2057 = vunpack.c.l.b16 %v2036
  %v2058 = vunpack.c.l.b16 %v2037
  %v2059 = vunpack.c.l.b16 %v2038
  %v2060 = vpack.c.b16 %v2053, %v2052
  %v2061 = vpack.c.b16 %v2055, %v2054
  %v2062 = vpack.c.b16 %v2057, %v2056
  %v2063 = vpack.c.b16 %v2059, %v2058
  %v2069 = vsel %vm1129, %v2028, 0
  %v2072 = vsel %vm1129, %v2029, 0
  %2074 = vmatpush.bf16.msra.mxu0 0
  %2075 = vmatpush.bf16.msra.mxu0 0
  %2076 = vmatpush.bf16.msra.mxu0 0
  %2077 = vmatpush.bf16.msra.mxu0 0
  %2078 = vmatpush.bf16.msra.mxu0 %v2063
  %2079 = vmatpush.bf16.msra.mxu0 %v2062
  %2080 = vmatpush.bf16.msra.mxu0 %v2061
  %2081 = vmatpush.bf16.msra.mxu0 %v2060
  %2082 = vmatmul.bf16.gmra.mxu0 %v2069
  %v2083 = vpop.f32.mrf.mxu0
  %v2084 = vadd.f32 %v2042, %v2083
  %v2085 = vpop.f32.mrf.mxu0
  %v2086 = vadd.f32 %v2042, %v2085
  %2087 = vmatmul.bf16.gmra.mxu0 %v2072
  %v2088 = vpop.f32.mrf.mxu0
  %v2089 = vadd.f32 %v2042, %v2088
  %v2090 = vpop.f32.mrf.mxu0
  %2091 = vdwg.mxu0
  %v2092 = vadd.f32 %v1974, %v2084
  %v2093 = vadd.f32 %v1975, %v2086
  %v2094 = vadd.f32 %v1976, %v2089
  %s2095 = scalar_lea.vmem %s17, 1
  %v2096 = vld [vmem:[%s2095] sm:$0x1]
  %s2097 = scalar_lea.vmem %s18, 1
  %v2098 = vld [vmem:[%s2097] sm:$0x1]
  %v2099 = vsel %vm285, %v2092, 0.0
  %2100 = vadd.xlane.f32.xlu0 %v2099
  %v2101 = vpop.xlane.xlu0 %2100
  %v2102 = vsel %vm285, %v2093, 0.0
  %2103 = vadd.xlane.f32.xlu0 %v2102
  %v2104 = vpop.xlane.xlu0 %2103
  %v2105 = vsel %vm288, %v2094, 0.0
  %2106 = vadd.xlane.f32.xlu0 %v2105
  %v2107 = vpop.xlane.xlu0 %2106
  %v2108 = vmul.f32 %v2101, %v972
  %v2109 = vmul.f32 %v2104, %v972
  %v2110 = vmul.f32 %v2107, %v972
  %v2111 = vsub.f32 %v2092, %v2108
  %v2112 = vsub.f32 %v2093, %v2109
  %v2113 = vsub.f32 %v2094, %v2110
  %v2114 = vmul.f32 %v2111, %v2111
  %v2115 = vmul.f32 %v2112, %v2112
  %v2116 = vmul.f32 %v2113, %v2113
  %v2117 = vsel %vm285, %v2114, 0.0
  %2118 = vadd.xlane.f32.xlu0 %v2117
  %v2119 = vpop.xlane.xlu0 %2118
  %v2120 = vsel %vm285, %v2115, 0.0
  %2121 = vadd.xlane.f32.xlu0 %v2120
  %v2122 = vpop.xlane.xlu0 %2121
  %v2123 = vsel %vm288, %v2116, 0.0
  %2124 = vadd.xlane.f32.xlu0 %v2123
  %v2125 = vpop.xlane.xlu0 %2124
  %v2126 = vmul.f32 %v2119, %v972
  %v2127 = vmul.f32 %v2122, %v972
  %v2128 = vmul.f32 %v2125, %v972
  %v2129 = vadd.f32 %v2126, 1e-05
  %v2130 = vadd.f32 %v2127, 1e-05
  %v2131 = vadd.f32 %v2128, 1e-05
  %v2132 = vrsqrt.pop %v2129
  %v2133 = vmul.f32 %v2132, %v2129
  %v2134 = vmul.f32 %v2133, %v2132
  %v2135 = vmul.f32 0.5, %v2134
  %v2136 = vsub.f32 1.5, %v2135
  %v2137 = vmul.f32 %v2132, %v2136
  %vm2138 = vweird.f32 %v2129
  %vm2139 = vweird.f32 %v2132
  %vm2140 = vmor %vm2138, %vm2139
  %v2141 = vsel %vm2140, %v2132, %v2137
  %v2142 = vrsqrt.pop %v2130
  %v2143 = vmul.f32 %v2142, %v2130
  %v2144 = vmul.f32 %v2143, %v2142
  %v2145 = vmul.f32 0.5, %v2144
  %v2146 = vsub.f32 1.5, %v2145
  %v2147 = vmul.f32 %v2142, %v2146
  %vm2148 = vweird.f32 %v2130
  %vm2149 = vweird.f32 %v2142
  %vm2150 = vmor %vm2148, %vm2149
  %v2151 = vsel %vm2150, %v2142, %v2147
  %v2152 = vrsqrt.pop %v2131
  %v2153 = vmul.f32 %v2152, %v2131
  %v2154 = vmul.f32 %v2153, %v2152
  %v2155 = vmul.f32 0.5, %v2154
  %v2156 = vsub.f32 1.5, %v2155
  %v2157 = vmul.f32 %v2152, %v2156
  %vm2158 = vweird.f32 %v2131
  %vm2159 = vweird.f32 %v2152
  %vm2160 = vmor %vm2158, %vm2159
  %v2161 = vsel %vm2160, %v2152, %v2157
  %v2162 = vmul.f32 %v2111, %v2141
  %v2163 = vmul.f32 %v2112, %v2151
  %v2164 = vmul.f32 %v2113, %v2161
  %v2166 = vperm.slane %v2096, 0
  %v2168 = vmul.f32 %v2162, %v2166
  %v2169 = vmul.f32 %v2163, %v2166
  %v2170 = vmul.f32 %v2164, %v2166
  %v2172 = vperm.slane %v2098, 0
  %v2174 = vadd.f32 %v2168, %v2172
  %v2175 = vadd.f32 %v2169, %v2172
  %v2176 = vadd.f32 %v2170, %v2172
  %2177 = vst.msk [vmem:[%s23] sm:$0xff] %vm285, %v2174
  %2178 = vst.msk [vmem:[%s23 + $0x8] sm:$0xff] %vm285, %v2175
  %2179 = vst.msk [vmem:[%s23 + $0x10] sm:$0x7] %vm288, %v2176
  %s2180 = scalar_lea.vmem %s0, 16
  %v2181 = vld [vmem:[%s2180] sm:$0xff]
  %v2182 = vld [vmem:[%s2180 + $0x8] sm:$0x3]
  %2183 = vset.pattern.permute.xlu0 0
  %2184 = vperm.xlu0 %2183, %v2181
  %v2185 = vpop.permute.xlu0 %2184
  %2186 = vset.pattern.permute.xlu0 0
  %2187 = vperm.xlu0 %2186, %v2182
  %v2188 = vpop.permute.xlu0 %2187
  %vm2189 = vcmp.eq.s32.totalorder %v2185, %v109
  %vm2190 = vcmp.eq.s32.totalorder %v2185, %v110
  %vm2191 = vcmp.eq.s32.totalorder %v2188, %v109
  %vm2192 = vcmp.eq.s32.totalorder %v2188, %v110
  %v2193 = vsel %vm2189, 1, 0
  %v2194 = vsel %vm2190, 1, 0
  %v2195 = vsel %vm2191, 1, 0
  %v2196 = vsel %vm2192, 1, 0
  %v2197 = vcvt.s32.f32 %v2193
  %v2198 = vcvt.s32.f32 %v2194
  %v2199 = vcvt.s32.f32 %v2195
  %v2200 = vcvt.s32.f32 %v2196
  %v2202 = vsel %vm129, %v2198, 0
  %v2205 = vsel %vm129, %v2200, 0
  %2207 = vmatpush.msra.mxu0 %v92
  %2208 = vmatpush.msra.mxu0 %v91
  %2209 = vmatpush.msra.mxu0 %v90
  %2210 = vmatpush.msra.mxu0 %v89
  %2211 = vmatpush.msra.mxu0 %v88
  %2212 = vmatpush.msra.mxu0 %v87
  %2213 = vmatpush.msra.mxu0 %v86
  %2214 = vmatpush.msra.mxu0 %v85
  %2215 = vmatpush.msra.mxu0 %v84
  %2216 = vmatpush.msra.mxu0 %v83
  %2217 = vmatpush.msra.mxu0 %v82
  %2218 = vmatpush.msra.mxu0 %v81
  %2219 = vmatpush.msra.mxu0 %v80
  %2220 = vmatpush.msra.mxu0 %v79
  %2221 = vmatpush.msra.mxu0 %v78
  %2222 = vmatpush.msra.mxu0 %v77
  %2223 = vmatmul.f32.gmra.mxu0 %v2197
  %v2224 = vpop.f32.mrf.mxu0
  %v2225 = vadd.f32 0.0, %v2224
  %2226 = vmatmul.f32.gmra.mxu0 %v2199
  %v2227 = vpop.f32.mrf.mxu0
  %v2228 = vadd.f32 0.0, %v2227
  %2229 = vdwg.mxu0
  %2230 = vmatpush.msra.mxu0 0.0
  %2231 = vmatpush.msra.mxu0 0.0
  %2232 = vmatpush.msra.mxu0 0.0
  %2233 = vmatpush.msra.mxu0 0.0
  %2234 = vmatpush.msra.mxu0 0.0
  %2235 = vmatpush.msra.mxu0 0.0
  %2236 = vmatpush.msra.mxu0 0.0
  %2237 = vmatpush.msra.mxu0 0.0
  %2238 = vmatpush.msra.mxu0 0.0
  %2239 = vmatpush.msra.mxu0 0.0
  %2240 = vmatpush.msra.mxu0 0.0
  %2241 = vmatpush.msra.mxu0 0.0
  %2242 = vmatpush.msra.mxu0 0.0
  %2243 = vmatpush.msra.mxu0 %v95
  %2244 = vmatpush.msra.mxu0 %v94
  %2245 = vmatpush.msra.mxu0 %v93
  %2246 = vmatmul.f32.gmra.mxu0 %v2202
  %v2247 = vpop.f32.mrf.mxu0
  %v2248 = vadd.f32 %v2225, %v2247
  %2249 = vmatmul.f32.gmra.mxu0 %v2205
  %v2250 = vpop.f32.mrf.mxu0
  %v2251 = vadd.f32 %v2228, %v2250
  %2252 = vdwg.mxu0
  %s2253 = scalar_lea.vmem %s3, 8
  %v2254 = vld [vmem:[%s2253] sm:$0xff]
  %2255 = vset.pattern.permute.xlu0 0
  %2256 = vperm.xlu0 %2255, %v2254
  %v2257 = vpop.permute.xlu0 %2256
  %vm2258 = vcmp.eq.s32.totalorder %v2257, %v109
  %v2259 = vsel %vm2258, 1, 0
  %v2260 = vcvt.s32.f32 %v2259
  %v2262 = vsel %vm189, %v2260, 0
  %2264 = vmatpush.msra.mxu0 0.0
  %2265 = vmatpush.msra.mxu0 0.0
  %2266 = vmatpush.msra.mxu0 0.0
  %2267 = vmatpush.msra.mxu0 0.0
  %2268 = vmatpush.msra.mxu0 0.0
  %2269 = vmatpush.msra.mxu0 0.0
  %2270 = vmatpush.msra.mxu0 0.0
  %2271 = vmatpush.msra.mxu0 0.0
  %2272 = vmatpush.msra.mxu0 0.0
  %2273 = vmatpush.msra.mxu0 %v195
  %2274 = vmatpush.msra.mxu0 %v101
  %2275 = vmatpush.msra.mxu0 %v100
  %2276 = vmatpush.msra.mxu0 %v99
  %2277 = vmatpush.msra.mxu0 %v98
  %2278 = vmatpush.msra.mxu0 %v97
  %2279 = vmatpush.msra.mxu0 %v96
  %2280 = vmatmul.f32.gmra.mxu0 %v2262
  %v2281 = vpop.f32.mrf.mxu0
  %v2282 = vadd.f32 0.0, %v2281
  %2283 = vdwg.mxu0
  %s2284 = scalar_lea.vmem %s1, 8
  %v2285 = vld [vmem:[%s2284] sm:$0xff]
  %2286 = vset.pattern.permute.xlu0 0
  %2287 = vperm.xlu0 %2286, %v2285
  %v2288 = vpop.permute.xlu0 %2287
  %vm2289 = vcmp.eq.s32.totalorder %v2288, %v109
  %v2290 = vsel %vm2289, 1, 0
  %v2291 = vcvt.s32.f32 %v2290
  %s2292 = scalar_lea.vmem %s2, 8
  %v2293 = vld [vmem:[%s2292] sm:$0xff]
  %2294 = vset.pattern.permute.xlu0 0
  %2295 = vperm.xlu0 %2294, %v2293
  %v2296 = vpop.permute.xlu0 %2295
  %vm2297 = vcmp.eq.s32.totalorder %v2296, %v109
  %v2298 = vsel %vm2297, 1, 0
  %v2299 = vcvt.s32.f32 %v2298
  %v2300 = vsub.f32 %v2291, %v2299
  %v2302 = vsel %vm232, %v2300, 0
  %2304 = vmatpush.msra.mxu0 0.0
  %2305 = vmatpush.msra.mxu0 0.0
  %2306 = vmatpush.msra.mxu0 0.0
  %2307 = vmatpush.msra.mxu0 0.0
  %2308 = vmatpush.msra.mxu0 0.0
  %2309 = vmatpush.msra.mxu0 0.0
  %2310 = vmatpush.msra.mxu0 0.0
  %2311 = vmatpush.msra.mxu0 0.0
  %2312 = vmatpush.msra.mxu0 0.0
  %2313 = vmatpush.msra.mxu0 0.0
  %2314 = vmatpush.msra.mxu0 0.0
  %2315 = vmatpush.msra.mxu0 0.0
  %2316 = vmatpush.msra.mxu0 0.0
  %2317 = vmatpush.msra.mxu0 0.0
  %2318 = vmatpush.msra.mxu0 %v238
  %2319 = vmatpush.msra.mxu0 %v103
  %2320 = vmatmul.f32.gmra.mxu0 %v2302
  %v2321 = vpop.f32.mrf.mxu0
  %v2322 = vadd.f32 0.0, %v2321
  %2323 = vdwg.mxu0
  %v2326 = vrot.slane %v2248, 7
  %v2327 = vrot.slane %v2251, 7
  %v2328 = vsel %vm262, %v2326, %v2327
  %v2332 = vrot.slane %v2282, 5
  %v2334 = vsel %vm262, %v105, %v2326
  %v2335 = vsel %vm272, %v2328, %v2332
  %v2337 = vrot.slane %v2322, 5
  %v2339 = vsel %vm272, %v277, %v2337
  %s2340 = scalar_lea.vmem %s24, 24
  %2341 = vst.msk [vmem:[%s2340] sm:$0xff] %vm285, %v283
  %2342 = vst.msk [vmem:[%s2340 + $0x8] sm:$0xff] %vm285, %v2339
  %2343 = vst.msk [vmem:[%s2340 + $0x10] sm:$0x7] %vm288, %v2337
  %s2344 = scalar_lea.vmem %s4, 1
  %v2345 = vld [vmem:[%s2344] sm:$0x1]
  %v2346 = vld [vmem:[%s2340] sm:$0xff]
  %v2347 = vld [vmem:[%s2340 + $0x8] sm:$0xff]
  %v2348 = vld [vmem:[%s2340 + $0x10] sm:$0x7]
  %v2349 = vadd.f32 %v2334, %v2346
  %v2350 = vadd.f32 %v2335, %v2347
  %v2351 = vadd.f32 %v2332, %v2348
  %v2352 = vpack.c.bf16 %v2350, %v2349
  %v2353 = vpack.c.bf16 %v2351, %v2351
  %v2354 = vld [vmem:[%s9] sm:$0xf]
  %v2355 = vld [vmem:[%s9 + $0x4] sm:$0xf]
  %v2356 = vld [vmem:[%s9 + $0x8] sm:$0xf]
  %v2357 = vld [vmem:[%s9 + $0xc] sm:$0xf]
  %v2358 = vld [vmem:[%s10] sm:$0x1]
  %v2360 = vperm.slane %v2358, 0
  %v2366 = vunpack.c.l.b16 %v2354
  %v2367 = vunpack.c.l.b16 %v2355
  %v2368 = vunpack.c.l.b16 %v2356
  %v2369 = vunpack.c.l.b16 %v2357
  %v2370 = vpack.c.b16 %v2367, %v2366
  %v2371 = vpack.c.b16 %v2369, %v2368
  %v2375 = vsel %vm285, %v2352, 0
  %v2378 = vsel %vm285, %v2353, 0
  %2380 = vmatpush.bf16.msra.mxu0 0
  %2381 = vmatpush.bf16.msra.mxu0 0
  %2382 = vmatpush.bf16.msra.mxu0 0
  %2383 = vmatpush.bf16.msra.mxu0 0
  %2384 = vmatpush.bf16.msra.mxu0 0
  %2385 = vmatpush.bf16.msra.mxu0 0
  %2386 = vmatpush.bf16.msra.mxu0 %v2371
  %2387 = vmatpush.bf16.msra.mxu0 %v2370
  %2388 = vmatmul.bf16.gmra.mxu0 %v2375
  %v2389 = vpop.f32.mrf.mxu0
  %v2390 = vadd.f32 %v2360, %v2389
  %v2391 = vpop.f32.mrf.mxu0
  %v2392 = vadd.f32 %v2360, %v2391
  %2393 = vmatmul.bf16.gmra.mxu0 %v2378
  %v2394 = vpop.f32.mrf.mxu0
  %v2395 = vadd.f32 %v2360, %v2394
  %v2396 = vpop.f32.mrf.mxu0
  %2397 = vdwg.mxu0
  %v2398 = vpack.c.bf16 %v2335, %v2334
  %v2399 = vpack.c.bf16 %v2332, %v2332
  %v2400 = vld [vmem:[%s11] sm:$0xf]
  %v2401 = vld [vmem:[%s11 + $0x4] sm:$0xf]
  %v2402 = vld [vmem:[%s11 + $0x8] sm:$0xf]
  %v2403 = vld [vmem:[%s11 + $0xc] sm:$0xf]
  %v2404 = vld [vmem:[%s12] sm:$0x1]
  %v2406 = vperm.slane %v2404, 0
  %v2412 = vunpack.c.l.b16 %v2400
  %v2413 = vunpack.c.l.b16 %v2401
  %v2414 = vunpack.c.l.b16 %v2402
  %v2415 = vunpack.c.l.b16 %v2403
  %v2416 = vpack.c.b16 %v2413, %v2412
  %v2417 = vpack.c.b16 %v2415, %v2414
  %v2421 = vsel %vm285, %v2398, 0
  %v2424 = vsel %vm285, %v2399, 0
  %2426 = vmatpush.bf16.msra.mxu0 0
  %2427 = vmatpush.bf16.msra.mxu0 0
  %2428 = vmatpush.bf16.msra.mxu0 0
  %2429 = vmatpush.bf16.msra.mxu0 0
  %2430 = vmatpush.bf16.msra.mxu0 0
  %2431 = vmatpush.bf16.msra.mxu0 0
  %2432 = vmatpush.bf16.msra.mxu0 %v2417
  %2433 = vmatpush.bf16.msra.mxu0 %v2416
  %2434 = vmatmul.bf16.gmra.mxu0 %v2421
  %v2435 = vpop.f32.mrf.mxu0
  %v2436 = vadd.f32 %v2406, %v2435
  %v2437 = vpop.f32.mrf.mxu0
  %v2438 = vadd.f32 %v2406, %v2437
  %2439 = vmatmul.bf16.gmra.mxu0 %v2424
  %v2440 = vpop.f32.mrf.mxu0
  %v2441 = vadd.f32 %v2406, %v2440
  %v2442 = vpop.f32.mrf.mxu0
  %2443 = vdwg.mxu0
  %2447 = vrot.lane.b32.xlu0 %v2390, 96
  %v2448 = vpop.permute.xlu0 %2447
  %2449 = vrot.lane.b32.xlu0 %v2392, 96
  %v2450 = vpop.permute.xlu0 %2449
  %2451 = vrot.lane.b32.xlu0 %v2395, 96
  %v2452 = vpop.permute.xlu0 %2451
  %2456 = vxpose.xlu0.b32.start [1/16] %v2448, 128
  %2457 = vxpose.xlu0.b32.cont [2/16] %v2450, 128
  %2458 = vxpose.xlu0.b32.cont [3/16] %v2452, 128
  %2459 = vxpose.xlu0.b32.cont [4/16] 0.0, 128
  %2460 = vxpose.xlu0.b32.cont [5/16] 0.0, 128
  %2461 = vxpose.xlu0.b32.cont [6/16] 0.0, 128
  %2462 = vxpose.xlu0.b32.cont [7/16] 0.0, 128
  %2463 = vxpose.xlu0.b32.cont [8/16] 0.0, 128
  %2464 = vxpose.xlu0.b32.cont [9/16] 0.0, 128
  %2465 = vxpose.xlu0.b32.cont [10/16] 0.0, 128
  %2466 = vxpose.xlu0.b32.cont [11/16] 0.0, 128
  %2467 = vxpose.xlu0.b32.cont [12/16] 0.0, 128
  %2468 = vxpose.xlu0.b32.cont [13/16] 0.0, 128
  %2469 = vxpose.xlu0.b32.cont [14/16] 0.0, 128
  %2470 = vxpose.xlu0.b32.cont [15/16] 0.0, 128
  %2471 = vxpose.xlu0.b32.end [16/16] 0.0, 128
  %v2472 = vpop.trf.xlu0
  %v2473 = vpop.trf.xlu0
  %v2474 = vpop.trf.xlu0
  %v2475 = vpop.trf.xlu0
  %v2476 = vpop.trf.xlu0
  %v2477 = vpop.trf.xlu0
  %v2478 = vpop.trf.xlu0
  %v2479 = vpop.trf.xlu0
  %v2480 = vpop.trf.xlu0
  %v2481 = vpop.trf.xlu0
  %v2482 = vpop.trf.xlu0
  %v2483 = vpop.trf.xlu0
  %v2484 = vpop.trf.xlu0
  %v2485 = vpop.trf.xlu0
  %v2486 = vpop.trf.xlu0
  %v2487 = vpop.trf.xlu0
  %v2488 = vpack.c.bf16 %v2392, %v2390
  %v2489 = vpack.c.bf16 %v2395, %v2395
  %v2490 = vpack.c.bf16 %v2472, %v2472
  %v2492 = vsel %vm436, %v2488, 0
  %v2495 = vsel %vm436, %v2489, 0
  %v2498 = vsel %vm193, %v2490, 0
  %2500 = vmatpush.bf16.msra.mxu0 0
  %2501 = vmatpush.bf16.msra.mxu0 0
  %2502 = vmatpush.bf16.msra.mxu0 0
  %2503 = vmatpush.bf16.msra.mxu0 0
  %2504 = vmatpush.bf16.msra.mxu0 0
  %2505 = vmatpush.bf16.msra.mxu0 0
  %2506 = vmatpush.bf16.msra.mxu0 0
  %2507 = vmatpush.bf16.msra.mxu0 %v2498
  %2508 = vmatmul.bf16.gmra.mxu0 %v2492
  %v2509 = vpop.f32.mrf.mxu0
  %v2510 = vadd.f32 0.0, %v2509
  %v2511 = vpop.f32.mrf.mxu0
  %v2512 = vadd.f32 0.0, %v2511
  %2513 = vmatmul.bf16.gmra.mxu0 %v2495
  %v2514 = vpop.f32.mrf.mxu0
  %v2515 = vadd.f32 0.0, %v2514
  %v2516 = vpop.f32.mrf.mxu0
  %2517 = vdwg.mxu0
  %v2518 = vmul.f32 %v2510, 0.35355338
  %v2519 = vmul.f32 %v2512, 0.35355338
  %v2520 = vmul.f32 %v2515, 0.35355338
  %v2522 = vperm.slane %v2345, 0
  %v2524 = vadd.f32 %v2518, %v2522
  %v2525 = vadd.f32 %v2519, %v2522
  %v2526 = vadd.f32 %v2520, %v2522
  %v2527 = vsel %vm473, %v2524, -inf
  %2528 = vmax.xlane.f32.xlu0 %v2527
  %v2529 = vpop.xlane.xlu0 %2528
  %v2530 = vsel %vm473, %v2525, -inf
  %2531 = vmax.xlane.f32.xlu0 %v2530
  %v2532 = vpop.xlane.xlu0 %2531
  %v2533 = vsel %vm480, %v2526, -inf
  %2534 = vmax.xlane.f32.xlu0 %v2533
  %v2535 = vpop.xlane.xlu0 %2534
  %v2536 = vsub.f32 %v2524, %v2529
  %v2537 = vsub.f32 %v2525, %v2532
  %v2538 = vsub.f32 %v2526, %v2535
  %v2539 = vmul.f32 %v2536, 1.442695
  %v2540 = vpow.pop %v2539
  %v2541 = vmul.f32 %v2537, 1.442695
  %v2542 = vpow.pop %v2541
  %v2543 = vmul.f32 %v2538, 1.442695
  %v2544 = vpow.pop %v2543
  %v2545 = vsel %vm473, %v2540, 0.0
  %2546 = vadd.xlane.f32.xlu0 %v2545
  %v2547 = vpop.xlane.xlu0 %2546
  %v2548 = vsel %vm473, %v2542, 0.0
  %2549 = vadd.xlane.f32.xlu0 %v2548
  %v2550 = vpop.xlane.xlu0 %2549
  %v2551 = vsel %vm480, %v2544, 0.0
  %2552 = vadd.xlane.f32.xlu0 %v2551
  %v2553 = vpop.xlane.xlu0 %2552
  %v2554 = vrcp.pop %v2547
  %v2555 = vrcp.pop %v2550
  %v2556 = vrcp.pop %v2553
  %v2557 = vmul.f32 %v2540, %v2554
  %v2558 = vmul.f32 %v2542, %v2555
  %v2559 = vmul.f32 %v2544, %v2556
  %v2560 = vpack.c.bf16 %v2558, %v2557
  %v2561 = vpack.c.bf16 %v2559, %v2559
  %v2562 = vpack.c.bf16 %v2438, %v2436
  %v2563 = vpack.c.bf16 %v2441, %v2441
  %v2565 = vsel %vm473, %v2560, 0
  %v2568 = vsel %vm473, %v2561, 0
  %v2571 = vand.u32 %v2563, %v519
  %2573 = vmatpush.bf16.msra.mxu0 0
  %2574 = vmatpush.bf16.msra.mxu0 0
  %2575 = vmatpush.bf16.msra.mxu0 0
  %2576 = vmatpush.bf16.msra.mxu0 0
  %2577 = vmatpush.bf16.msra.mxu0 0
  %2578 = vmatpush.bf16.msra.mxu0 0
  %2579 = vmatpush.bf16.msra.mxu0 %v2571
  %2580 = vmatpush.bf16.msra.mxu0 %v2562
  %2581 = vmatmul.bf16.gmra.mxu0 %v2565
  %v2582 = vpop.f32.mrf.mxu0
  %v2583 = vadd.f32 0.0, %v2582
  %v2584 = vpop.f32.mrf.mxu0
  %v2585 = vadd.f32 0.0, %v2584
  %2586 = vmatmul.bf16.gmra.mxu0 %v2568
  %v2587 = vpop.f32.mrf.mxu0
  %v2588 = vadd.f32 0.0, %v2587
  %v2589 = vpop.f32.mrf.mxu0
  %2590 = vdwg.mxu0
  %v2591 = vpack.c.bf16 %v2473, %v2473
  %2594 = vrot.lane.b32.xlu0 %v2488, 120
  %v2595 = vpop.permute.xlu0 %2594
  %2596 = vrot.lane.b32.xlu0 %v2489, 120
  %v2597 = vpop.permute.xlu0 %2596
  %v2599 = vsel %vm436, %v2595, 0
  %v2602 = vsel %vm436, %v2597, 0
  %v2605 = vsel %vm193, %v2591, 0
  %2607 = vmatpush.bf16.msra.mxu0 0
  %2608 = vmatpush.bf16.msra.mxu0 0
  %2609 = vmatpush.bf16.msra.mxu0 0
  %2610 = vmatpush.bf16.msra.mxu0 0
  %2611 = vmatpush.bf16.msra.mxu0 0
  %2612 = vmatpush.bf16.msra.mxu0 0
  %2613 = vmatpush.bf16.msra.mxu0 0
  %2614 = vmatpush.bf16.msra.mxu0 %v2605
  %2615 = vmatmul.bf16.gmra.mxu0 %v2599
  %v2616 = vpop.f32.mrf.mxu0
  %v2617 = vadd.f32 0.0, %v2616
  %v2618 = vpop.f32.mrf.mxu0
  %v2619 = vadd.f32 0.0, %v2618
  %2620 = vmatmul.bf16.gmra.mxu0 %v2602
  %v2621 = vpop.f32.mrf.mxu0
  %v2622 = vadd.f32 0.0, %v2621
  %v2623 = vpop.f32.mrf.mxu0
  %2624 = vdwg.mxu0
  %v2625 = vmul.f32 %v2617, 0.35355338
  %v2626 = vmul.f32 %v2619, 0.35355338
  %v2627 = vmul.f32 %v2622, 0.35355338
  %v2628 = vadd.f32 %v2625, %v2522
  %v2629 = vadd.f32 %v2626, %v2522
  %v2630 = vadd.f32 %v2627, %v2522
  %v2631 = vsel %vm473, %v2628, -inf
  %2632 = vmax.xlane.f32.xlu0 %v2631
  %v2633 = vpop.xlane.xlu0 %2632
  %v2634 = vsel %vm473, %v2629, -inf
  %2635 = vmax.xlane.f32.xlu0 %v2634
  %v2636 = vpop.xlane.xlu0 %2635
  %v2637 = vsel %vm480, %v2630, -inf
  %2638 = vmax.xlane.f32.xlu0 %v2637
  %v2639 = vpop.xlane.xlu0 %2638
  %v2640 = vsub.f32 %v2628, %v2633
  %v2641 = vsub.f32 %v2629, %v2636
  %v2642 = vsub.f32 %v2630, %v2639
  %v2643 = vmul.f32 %v2640, 1.442695
  %v2644 = vpow.pop %v2643
  %v2645 = vmul.f32 %v2641, 1.442695
  %v2646 = vpow.pop %v2645
  %v2647 = vmul.f32 %v2642, 1.442695
  %v2648 = vpow.pop %v2647
  %v2649 = vsel %vm473, %v2644, 0.0
  %2650 = vadd.xlane.f32.xlu0 %v2649
  %v2651 = vpop.xlane.xlu0 %2650
  %v2652 = vsel %vm473, %v2646, 0.0
  %2653 = vadd.xlane.f32.xlu0 %v2652
  %v2654 = vpop.xlane.xlu0 %2653
  %v2655 = vsel %vm480, %v2648, 0.0
  %2656 = vadd.xlane.f32.xlu0 %v2655
  %v2657 = vpop.xlane.xlu0 %2656
  %v2658 = vrcp.pop %v2651
  %v2659 = vrcp.pop %v2654
  %v2660 = vrcp.pop %v2657
  %v2661 = vmul.f32 %v2644, %v2658
  %v2662 = vmul.f32 %v2646, %v2659
  %v2663 = vmul.f32 %v2648, %v2660
  %v2664 = vpack.c.bf16 %v2662, %v2661
  %v2665 = vpack.c.bf16 %v2663, %v2663
  %2668 = vrot.lane.b32.xlu0 %v2562, 120
  %v2669 = vpop.permute.xlu0 %2668
  %2670 = vrot.lane.b32.xlu0 %v2563, 120
  %v2671 = vpop.permute.xlu0 %2670
  %v2674 = vsel %vm473, %v2664, 0
  %v2677 = vsel %vm473, %v2665, 0
  %v2680 = vand.u32 %v2671, %v519
  %2682 = vmatpush.bf16.msra.mxu0 0
  %2683 = vmatpush.bf16.msra.mxu0 0
  %2684 = vmatpush.bf16.msra.mxu0 0
  %2685 = vmatpush.bf16.msra.mxu0 0
  %2686 = vmatpush.bf16.msra.mxu0 0
  %2687 = vmatpush.bf16.msra.mxu0 0
  %2688 = vmatpush.bf16.msra.mxu0 %v2680
  %2689 = vmatpush.bf16.msra.mxu0 %v2669
  %2690 = vmatmul.bf16.gmra.mxu0 %v2674
  %v2691 = vpop.f32.mrf.mxu0
  %v2692 = vadd.f32 0.0, %v2691
  %v2693 = vpop.f32.mrf.mxu0
  %v2694 = vadd.f32 0.0, %v2693
  %2695 = vmatmul.bf16.gmra.mxu0 %v2677
  %v2696 = vpop.f32.mrf.mxu0
  %v2697 = vadd.f32 0.0, %v2696
  %v2698 = vpop.f32.mrf.mxu0
  %2699 = vdwg.mxu0
  %v2700 = vpack.c.bf16 %v2474, %v2474
  %2701 = vrot.lane.b32.xlu0 %v2488, 112
  %v2702 = vpop.permute.xlu0 %2701
  %2703 = vrot.lane.b32.xlu0 %v2489, 112
  %v2704 = vpop.permute.xlu0 %2703
  %v2706 = vsel %vm436, %v2702, 0
  %v2709 = vsel %vm436, %v2704, 0
  %v2712 = vsel %vm193, %v2700, 0
  %2714 = vmatpush.bf16.msra.mxu0 0
  %2715 = vmatpush.bf16.msra.mxu0 0
  %2716 = vmatpush.bf16.msra.mxu0 0
  %2717 = vmatpush.bf16.msra.mxu0 0
  %2718 = vmatpush.bf16.msra.mxu0 0
  %2719 = vmatpush.bf16.msra.mxu0 0
  %2720 = vmatpush.bf16.msra.mxu0 0
  %2721 = vmatpush.bf16.msra.mxu0 %v2712
  %2722 = vmatmul.bf16.gmra.mxu0 %v2706
  %v2723 = vpop.f32.mrf.mxu0
  %v2724 = vadd.f32 0.0, %v2723
  %v2725 = vpop.f32.mrf.mxu0
  %v2726 = vadd.f32 0.0, %v2725
  %2727 = vmatmul.bf16.gmra.mxu0 %v2709
  %v2728 = vpop.f32.mrf.mxu0
  %v2729 = vadd.f32 0.0, %v2728
  %v2730 = vpop.f32.mrf.mxu0
  %2731 = vdwg.mxu0
  %v2732 = vmul.f32 %v2724, 0.35355338
  %v2733 = vmul.f32 %v2726, 0.35355338
  %v2734 = vmul.f32 %v2729, 0.35355338
  %v2735 = vadd.f32 %v2732, %v2522
  %v2736 = vadd.f32 %v2733, %v2522
  %v2737 = vadd.f32 %v2734, %v2522
  %v2738 = vsel %vm473, %v2735, -inf
  %2739 = vmax.xlane.f32.xlu0 %v2738
  %v2740 = vpop.xlane.xlu0 %2739
  %v2741 = vsel %vm473, %v2736, -inf
  %2742 = vmax.xlane.f32.xlu0 %v2741
  %v2743 = vpop.xlane.xlu0 %2742
  %v2744 = vsel %vm480, %v2737, -inf
  %2745 = vmax.xlane.f32.xlu0 %v2744
  %v2746 = vpop.xlane.xlu0 %2745
  %v2747 = vsub.f32 %v2735, %v2740
  %v2748 = vsub.f32 %v2736, %v2743
  %v2749 = vsub.f32 %v2737, %v2746
  %v2750 = vmul.f32 %v2747, 1.442695
  %v2751 = vpow.pop %v2750
  %v2752 = vmul.f32 %v2748, 1.442695
  %v2753 = vpow.pop %v2752
  %v2754 = vmul.f32 %v2749, 1.442695
  %v2755 = vpow.pop %v2754
  %v2756 = vsel %vm473, %v2751, 0.0
  %2757 = vadd.xlane.f32.xlu0 %v2756
  %v2758 = vpop.xlane.xlu0 %2757
  %v2759 = vsel %vm473, %v2753, 0.0
  %2760 = vadd.xlane.f32.xlu0 %v2759
  %v2761 = vpop.xlane.xlu0 %2760
  %v2762 = vsel %vm480, %v2755, 0.0
  %2763 = vadd.xlane.f32.xlu0 %v2762
  %v2764 = vpop.xlane.xlu0 %2763
  %v2765 = vrcp.pop %v2758
  %v2766 = vrcp.pop %v2761
  %v2767 = vrcp.pop %v2764
  %v2768 = vmul.f32 %v2751, %v2765
  %v2769 = vmul.f32 %v2753, %v2766
  %v2770 = vmul.f32 %v2755, %v2767
  %v2771 = vpack.c.bf16 %v2769, %v2768
  %v2772 = vpack.c.bf16 %v2770, %v2770
  %2773 = vrot.lane.b32.xlu0 %v2562, 112
  %v2774 = vpop.permute.xlu0 %2773
  %2775 = vrot.lane.b32.xlu0 %v2563, 112
  %v2776 = vpop.permute.xlu0 %2775
  %v2779 = vsel %vm473, %v2771, 0
  %v2782 = vsel %vm473, %v2772, 0
  %v2785 = vand.u32 %v2776, %v519
  %2787 = vmatpush.bf16.msra.mxu0 0
  %2788 = vmatpush.bf16.msra.mxu0 0
  %2789 = vmatpush.bf16.msra.mxu0 0
  %2790 = vmatpush.bf16.msra.mxu0 0
  %2791 = vmatpush.bf16.msra.mxu0 0
  %2792 = vmatpush.bf16.msra.mxu0 0
  %2793 = vmatpush.bf16.msra.mxu0 %v2785
  %2794 = vmatpush.bf16.msra.mxu0 %v2774
  %2795 = vmatmul.bf16.gmra.mxu0 %v2779
  %v2796 = vpop.f32.mrf.mxu0
  %v2797 = vadd.f32 0.0, %v2796
  %v2798 = vpop.f32.mrf.mxu0
  %v2799 = vadd.f32 0.0, %v2798
  %2800 = vmatmul.bf16.gmra.mxu0 %v2782
  %v2801 = vpop.f32.mrf.mxu0
  %v2802 = vadd.f32 0.0, %v2801
  %v2803 = vpop.f32.mrf.mxu0
  %2804 = vdwg.mxu0
  %v2805 = vpack.c.bf16 %v2475, %v2475
  %2806 = vrot.lane.b32.xlu0 %v2488, 104
  %v2807 = vpop.permute.xlu0 %2806
  %2808 = vrot.lane.b32.xlu0 %v2489, 104
  %v2809 = vpop.permute.xlu0 %2808
  %v2811 = vsel %vm436, %v2807, 0
  %v2814 = vsel %vm436, %v2809, 0
  %v2817 = vsel %vm193, %v2805, 0
  %2819 = vmatpush.bf16.msra.mxu0 0
  %2820 = vmatpush.bf16.msra.mxu0 0
  %2821 = vmatpush.bf16.msra.mxu0 0
  %2822 = vmatpush.bf16.msra.mxu0 0
  %2823 = vmatpush.bf16.msra.mxu0 0
  %2824 = vmatpush.bf16.msra.mxu0 0
  %2825 = vmatpush.bf16.msra.mxu0 0
  %2826 = vmatpush.bf16.msra.mxu0 %v2817
  %2827 = vmatmul.bf16.gmra.mxu0 %v2811
  %v2828 = vpop.f32.mrf.mxu0
  %v2829 = vadd.f32 0.0, %v2828
  %v2830 = vpop.f32.mrf.mxu0
  %v2831 = vadd.f32 0.0, %v2830
  %2832 = vmatmul.bf16.gmra.mxu0 %v2814
  %v2833 = vpop.f32.mrf.mxu0
  %v2834 = vadd.f32 0.0, %v2833
  %v2835 = vpop.f32.mrf.mxu0
  %2836 = vdwg.mxu0
  %v2837 = vmul.f32 %v2829, 0.35355338
  %v2838 = vmul.f32 %v2831, 0.35355338
  %v2839 = vmul.f32 %v2834, 0.35355338
  %v2840 = vadd.f32 %v2837, %v2522
  %v2841 = vadd.f32 %v2838, %v2522
  %v2842 = vadd.f32 %v2839, %v2522
  %v2843 = vsel %vm473, %v2840, -inf
  %2844 = vmax.xlane.f32.xlu0 %v2843
  %v2845 = vpop.xlane.xlu0 %2844
  %v2846 = vsel %vm473, %v2841, -inf
  %2847 = vmax.xlane.f32.xlu0 %v2846
  %v2848 = vpop.xlane.xlu0 %2847
  %v2849 = vsel %vm480, %v2842, -inf
  %2850 = vmax.xlane.f32.xlu0 %v2849
  %v2851 = vpop.xlane.xlu0 %2850
  %v2852 = vsub.f32 %v2840, %v2845
  %v2853 = vsub.f32 %v2841, %v2848
  %v2854 = vsub.f32 %v2842, %v2851
  %v2855 = vmul.f32 %v2852, 1.442695
  %v2856 = vpow.pop %v2855
  %v2857 = vmul.f32 %v2853, 1.442695
  %v2858 = vpow.pop %v2857
  %v2859 = vmul.f32 %v2854, 1.442695
  %v2860 = vpow.pop %v2859
  %v2861 = vsel %vm473, %v2856, 0.0
  %2862 = vadd.xlane.f32.xlu0 %v2861
  %v2863 = vpop.xlane.xlu0 %2862
  %v2864 = vsel %vm473, %v2858, 0.0
  %2865 = vadd.xlane.f32.xlu0 %v2864
  %v2866 = vpop.xlane.xlu0 %2865
  %v2867 = vsel %vm480, %v2860, 0.0
  %2868 = vadd.xlane.f32.xlu0 %v2867
  %v2869 = vpop.xlane.xlu0 %2868
  %v2870 = vrcp.pop %v2863
  %v2871 = vrcp.pop %v2866
  %v2872 = vrcp.pop %v2869
  %v2873 = vmul.f32 %v2856, %v2870
  %v2874 = vmul.f32 %v2858, %v2871
  %v2875 = vmul.f32 %v2860, %v2872
  %v2876 = vpack.c.bf16 %v2874, %v2873
  %v2877 = vpack.c.bf16 %v2875, %v2875
  %2878 = vrot.lane.b32.xlu0 %v2562, 104
  %v2879 = vpop.permute.xlu0 %2878
  %2880 = vrot.lane.b32.xlu0 %v2563, 104
  %v2881 = vpop.permute.xlu0 %2880
  %v2884 = vsel %vm473, %v2876, 0
  %v2887 = vsel %vm473, %v2877, 0
  %v2890 = vand.u32 %v2881, %v519
  %2892 = vmatpush.bf16.msra.mxu0 0
  %2893 = vmatpush.bf16.msra.mxu0 0
  %2894 = vmatpush.bf16.msra.mxu0 0
  %2895 = vmatpush.bf16.msra.mxu0 0
  %2896 = vmatpush.bf16.msra.mxu0 0
  %2897 = vmatpush.bf16.msra.mxu0 0
  %2898 = vmatpush.bf16.msra.mxu0 %v2890
  %2899 = vmatpush.bf16.msra.mxu0 %v2879
  %2900 = vmatmul.bf16.gmra.mxu0 %v2884
  %v2901 = vpop.f32.mrf.mxu0
  %v2902 = vadd.f32 0.0, %v2901
  %v2903 = vpop.f32.mrf.mxu0
  %v2904 = vadd.f32 0.0, %v2903
  %2905 = vmatmul.bf16.gmra.mxu0 %v2887
  %v2906 = vpop.f32.mrf.mxu0
  %v2907 = vadd.f32 0.0, %v2906
  %v2908 = vpop.f32.mrf.mxu0
  %2909 = vdwg.mxu0
  %2913 = vrot.lane.b32.xlu0 %v2692, 8
  %v2914 = vpop.permute.xlu0 %2913
  %2915 = vrot.lane.b32.xlu0 %v2694, 8
  %v2916 = vpop.permute.xlu0 %2915
  %2917 = vrot.lane.b32.xlu0 %v2697, 8
  %v2918 = vpop.permute.xlu0 %2917
  %2925 = vrot.lane.b32.xlu0 %v2797, 16
  %v2926 = vpop.permute.xlu0 %2925
  %2927 = vrot.lane.b32.xlu0 %v2799, 16
  %v2928 = vpop.permute.xlu0 %2927
  %2929 = vrot.lane.b32.xlu0 %v2802, 16
  %v2930 = vpop.permute.xlu0 %2929
  %2937 = vrot.lane.b32.xlu0 %v2902, 24
  %v2938 = vpop.permute.xlu0 %2937
  %2939 = vrot.lane.b32.xlu0 %v2904, 24
  %v2940 = vpop.permute.xlu0 %2939
  %2941 = vrot.lane.b32.xlu0 %v2907, 24
  %v2942 = vpop.permute.xlu0 %2941
  %v2946 = vsel %vm436, %v2583, %v2914
  %v2947 = vsel %vm436, %v2585, %v2916
  %v2948 = vsel %vm436, %v2588, %v2918
  %v2949 = vsel %vm899, %v2946, %v2926
  %v2950 = vsel %vm899, %v2947, %v2928
  %v2951 = vsel %vm899, %v2948, %v2930
  %v2952 = vsel %vm129, %v2949, %v2938
  %v2953 = vsel %vm129, %v2950, %v2940
  %v2954 = vsel %vm129, %v2951, %v2942
  %v2955 = vpack.c.bf16 %v2953, %v2952
  %v2956 = vpack.c.bf16 %v2954, %v2954
  %v2957 = vld [vmem:[%s13] sm:$0xf]
  %v2958 = vld [vmem:[%s13 + $0x4] sm:$0xf]
  %v2959 = vld [vmem:[%s13 + $0x8] sm:$0xf]
  %v2960 = vld [vmem:[%s13 + $0xc] sm:$0xf]
  %v2961 = vld [vmem:[%s14] sm:$0x1]
  %v2963 = vperm.slane %v2961, 0
  %v2969 = vunpack.c.l.b16 %v2957
  %v2970 = vunpack.c.l.b16 %v2958
  %v2971 = vunpack.c.l.b16 %v2959
  %v2972 = vunpack.c.l.b16 %v2960
  %v2973 = vpack.c.b16 %v2970, %v2969
  %v2974 = vpack.c.b16 %v2972, %v2971
  %v2978 = vsel %vm285, %v2955, 0
  %v2981 = vsel %vm285, %v2956, 0
  %2983 = vmatpush.bf16.msra.mxu0 0
  %2984 = vmatpush.bf16.msra.mxu0 0
  %2985 = vmatpush.bf16.msra.mxu0 0
  %2986 = vmatpush.bf16.msra.mxu0 0
  %2987 = vmatpush.bf16.msra.mxu0 0
  %2988 = vmatpush.bf16.msra.mxu0 0
  %2989 = vmatpush.bf16.msra.mxu0 %v2974
  %2990 = vmatpush.bf16.msra.mxu0 %v2973
  %2991 = vmatmul.bf16.gmra.mxu0 %v2978
  %v2992 = vpop.f32.mrf.mxu0
  %v2993 = vadd.f32 %v2963, %v2992
  %v2994 = vpop.f32.mrf.mxu0
  %v2995 = vadd.f32 %v2963, %v2994
  %2996 = vmatmul.bf16.gmra.mxu0 %v2981
  %v2997 = vpop.f32.mrf.mxu0
  %v2998 = vadd.f32 %v2963, %v2997
  %v2999 = vpop.f32.mrf.mxu0
  %3000 = vdwg.mxu0
  %v3001 = vadd.f32 %v2334, %v2993
  %v3002 = vadd.f32 %v2335, %v2995
  %v3003 = vadd.f32 %v2332, %v2998
  %v3004 = vld [vmem:[%s15] sm:$0x1]
  %v3005 = vld [vmem:[%s16] sm:$0x1]
  %v3006 = vsel %vm285, %v3001, 0.0
  %3007 = vadd.xlane.f32.xlu0 %v3006
  %v3008 = vpop.xlane.xlu0 %3007
  %v3009 = vsel %vm285, %v3002, 0.0
  %3010 = vadd.xlane.f32.xlu0 %v3009
  %v3011 = vpop.xlane.xlu0 %3010
  %v3012 = vsel %vm288, %v3003, 0.0
  %3013 = vadd.xlane.f32.xlu0 %v3012
  %v3014 = vpop.xlane.xlu0 %3013
  %v3015 = vmul.f32 %v3008, %v972
  %v3016 = vmul.f32 %v3011, %v972
  %v3017 = vmul.f32 %v3014, %v972
  %v3018 = vsub.f32 %v3001, %v3015
  %v3019 = vsub.f32 %v3002, %v3016
  %v3020 = vsub.f32 %v3003, %v3017
  %v3021 = vmul.f32 %v3018, %v3018
  %v3022 = vmul.f32 %v3019, %v3019
  %v3023 = vmul.f32 %v3020, %v3020
  %v3024 = vsel %vm285, %v3021, 0.0
  %3025 = vadd.xlane.f32.xlu0 %v3024
  %v3026 = vpop.xlane.xlu0 %3025
  %v3027 = vsel %vm285, %v3022, 0.0
  %3028 = vadd.xlane.f32.xlu0 %v3027
  %v3029 = vpop.xlane.xlu0 %3028
  %v3030 = vsel %vm288, %v3023, 0.0
  %3031 = vadd.xlane.f32.xlu0 %v3030
  %v3032 = vpop.xlane.xlu0 %3031
  %v3033 = vmul.f32 %v3026, %v972
  %v3034 = vmul.f32 %v3029, %v972
  %v3035 = vmul.f32 %v3032, %v972
  %v3036 = vadd.f32 %v3033, 1e-05
  %v3037 = vadd.f32 %v3034, 1e-05
  %v3038 = vadd.f32 %v3035, 1e-05
  %v3039 = vrsqrt.pop %v3036
  %v3040 = vmul.f32 %v3039, %v3036
  %v3041 = vmul.f32 %v3040, %v3039
  %v3042 = vmul.f32 0.5, %v3041
  %v3043 = vsub.f32 1.5, %v3042
  %v3044 = vmul.f32 %v3039, %v3043
  %vm3045 = vweird.f32 %v3036
  %vm3046 = vweird.f32 %v3039
  %vm3047 = vmor %vm3045, %vm3046
  %v3048 = vsel %vm3047, %v3039, %v3044
  %v3049 = vrsqrt.pop %v3037
  %v3050 = vmul.f32 %v3049, %v3037
  %v3051 = vmul.f32 %v3050, %v3049
  %v3052 = vmul.f32 0.5, %v3051
  %v3053 = vsub.f32 1.5, %v3052
  %v3054 = vmul.f32 %v3049, %v3053
  %vm3055 = vweird.f32 %v3037
  %vm3056 = vweird.f32 %v3049
  %vm3057 = vmor %vm3055, %vm3056
  %v3058 = vsel %vm3057, %v3049, %v3054
  %v3059 = vrsqrt.pop %v3038
  %v3060 = vmul.f32 %v3059, %v3038
  %v3061 = vmul.f32 %v3060, %v3059
  %v3062 = vmul.f32 0.5, %v3061
  %v3063 = vsub.f32 1.5, %v3062
  %v3064 = vmul.f32 %v3059, %v3063
  %vm3065 = vweird.f32 %v3038
  %vm3066 = vweird.f32 %v3059
  %vm3067 = vmor %vm3065, %vm3066
  %v3068 = vsel %vm3067, %v3059, %v3064
  %v3069 = vmul.f32 %v3018, %v3048
  %v3070 = vmul.f32 %v3019, %v3058
  %v3071 = vmul.f32 %v3020, %v3068
  %v3073 = vperm.slane %v3004, 0
  %v3075 = vmul.f32 %v3069, %v3073
  %v3076 = vmul.f32 %v3070, %v3073
  %v3077 = vmul.f32 %v3071, %v3073
  %v3079 = vperm.slane %v3005, 0
  %v3081 = vadd.f32 %v3075, %v3079
  %v3082 = vadd.f32 %v3076, %v3079
  %v3083 = vadd.f32 %v3077, %v3079
  %v3084 = vpack.c.bf16 %v3082, %v3081
  %v3085 = vpack.c.bf16 %v3083, %v3083
  %v3086 = vld [vmem:[%s19] sm:$0xf]
  %v3087 = vld [vmem:[%s19 + $0x4] sm:$0xf]
  %v3088 = vld [vmem:[%s19 + $0x8] sm:$0xf]
  %v3089 = vld [vmem:[%s19 + $0xc] sm:$0xf]
  %v3090 = vld [vmem:[%s20] sm:$0x1]
  %v3092 = vperm.slane %v3090, 0
  %v3098 = vunpack.c.l.b16 %v3086
  %v3099 = vunpack.c.l.b16 %v3087
  %v3100 = vunpack.c.l.b16 %v3088
  %v3101 = vunpack.c.l.b16 %v3089
  %v3102 = vpack.c.b16 %v3099, %v3098
  %v3103 = vpack.c.b16 %v3101, %v3100
  %v3107 = vsel %vm285, %v3084, 0
  %v3110 = vsel %vm285, %v3085, 0
  %3112 = vmatpush.bf16.msra.mxu0 0
  %3113 = vmatpush.bf16.msra.mxu0 0
  %3114 = vmatpush.bf16.msra.mxu0 0
  %3115 = vmatpush.bf16.msra.mxu0 0
  %3116 = vmatpush.bf16.msra.mxu0 0
  %3117 = vmatpush.bf16.msra.mxu0 0
  %3118 = vmatpush.bf16.msra.mxu0 %v3103
  %3119 = vmatpush.bf16.msra.mxu0 %v3102
  %3120 = vmatmul.bf16.gmra.mxu0 %v3107
  %v3121 = vpop.f32.mrf.mxu0
  %v3122 = vadd.f32 %v3092, %v3121
  %v3123 = vpop.f32.mrf.mxu0
  %v3124 = vadd.f32 %v3092, %v3123
  %3125 = vmatmul.bf16.gmra.mxu0 %v3110
  %v3126 = vpop.f32.mrf.mxu0
  %v3127 = vadd.f32 %v3092, %v3126
  %v3128 = vpop.f32.mrf.mxu0
  %3129 = vdwg.mxu0
  %v3130 = vmax.f32 %v3122, 0.0
  %v3131 = vmax.f32 %v3124, 0.0
  %v3132 = vmax.f32 %v3127, 0.0
  %v3133 = vpack.c.bf16 %v3131, %v3130
  %v3134 = vpack.c.bf16 %v3132, %v3132
  %v3135 = vld [vmem:[%s21] sm:$0xf]
  %v3136 = vld [vmem:[%s21 + $0x4] sm:$0xf]
  %v3137 = vld [vmem:[%s21 + $0x8] sm:$0xf]
  %v3138 = vld [vmem:[%s21 + $0xc] sm:$0xf]
  %v3139 = vld [vmem:[%s21 + $0x10] sm:$0xf]
  %v3140 = vld [vmem:[%s21 + $0x14] sm:$0xf]
  %v3141 = vld [vmem:[%s21 + $0x18] sm:$0xf]
  %v3142 = vld [vmem:[%s21 + $0x1c] sm:$0xf]
  %v3143 = vld [vmem:[%s22] sm:$0x1]
  %v3145 = vperm.slane %v3143, 0
  %v3155 = vunpack.c.l.b16 %v3135
  %v3156 = vunpack.c.l.b16 %v3136
  %v3157 = vunpack.c.l.b16 %v3137
  %v3158 = vunpack.c.l.b16 %v3138
  %v3159 = vunpack.c.l.b16 %v3139
  %v3160 = vunpack.c.l.b16 %v3140
  %v3161 = vunpack.c.l.b16 %v3141
  %v3162 = vunpack.c.l.b16 %v3142
  %v3163 = vpack.c.b16 %v3156, %v3155
  %v3164 = vpack.c.b16 %v3158, %v3157
  %v3165 = vpack.c.b16 %v3160, %v3159
  %v3166 = vpack.c.b16 %v3162, %v3161
  %v3172 = vsel %vm1129, %v3133, 0
  %v3175 = vsel %vm1129, %v3134, 0
  %3177 = vmatpush.bf16.msra.mxu0 0
  %3178 = vmatpush.bf16.msra.mxu0 0
  %3179 = vmatpush.bf16.msra.mxu0 0
  %3180 = vmatpush.bf16.msra.mxu0 0
  %3181 = vmatpush.bf16.msra.mxu0 %v3166
  %3182 = vmatpush.bf16.msra.mxu0 %v3165
  %3183 = vmatpush.bf16.msra.mxu0 %v3164
  %3184 = vmatpush.bf16.msra.mxu0 %v3163
  %3185 = vmatmul.bf16.gmra.mxu0 %v3172
  %v3186 = vpop.f32.mrf.mxu0
  %v3187 = vadd.f32 %v3145, %v3186
  %v3188 = vpop.f32.mrf.mxu0
  %v3189 = vadd.f32 %v3145, %v3188
  %3190 = vmatmul.bf16.gmra.mxu0 %v3175
  %v3191 = vpop.f32.mrf.mxu0
  %v3192 = vadd.f32 %v3145, %v3191
  %v3193 = vpop.f32.mrf.mxu0
  %3194 = vdwg.mxu0
  %v3195 = vadd.f32 %v3081, %v3187
  %v3196 = vadd.f32 %v3082, %v3189
  %v3197 = vadd.f32 %v3083, %v3192
  %v3198 = vld [vmem:[%s17] sm:$0x1]
  %v3199 = vld [vmem:[%s18] sm:$0x1]
  %v3200 = vsel %vm285, %v3195, 0.0
  %3201 = vadd.xlane.f32.xlu0 %v3200
  %v3202 = vpop.xlane.xlu0 %3201
  %v3203 = vsel %vm285, %v3196, 0.0
  %3204 = vadd.xlane.f32.xlu0 %v3203
  %v3205 = vpop.xlane.xlu0 %3204
  %v3206 = vsel %vm288, %v3197, 0.0
  %3207 = vadd.xlane.f32.xlu0 %v3206
  %v3208 = vpop.xlane.xlu0 %3207
  %v3209 = vmul.f32 %v3202, %v972
  %v3210 = vmul.f32 %v3205, %v972
  %v3211 = vmul.f32 %v3208, %v972
  %v3212 = vsub.f32 %v3195, %v3209
  %v3213 = vsub.f32 %v3196, %v3210
  %v3214 = vsub.f32 %v3197, %v3211
  %v3215 = vmul.f32 %v3212, %v3212
  %v3216 = vmul.f32 %v3213, %v3213
  %v3217 = vmul.f32 %v3214, %v3214
  %v3218 = vsel %vm285, %v3215, 0.0
  %3219 = vadd.xlane.f32.xlu0 %v3218
  %v3220 = vpop.xlane.xlu0 %3219
  %v3221 = vsel %vm285, %v3216, 0.0
  %3222 = vadd.xlane.f32.xlu0 %v3221
  %v3223 = vpop.xlane.xlu0 %3222
  %v3224 = vsel %vm288, %v3217, 0.0
  %3225 = vadd.xlane.f32.xlu0 %v3224
  %v3226 = vpop.xlane.xlu0 %3225
  %v3227 = vmul.f32 %v3220, %v972
  %v3228 = vmul.f32 %v3223, %v972
  %v3229 = vmul.f32 %v3226, %v972
  %v3230 = vadd.f32 %v3227, 1e-05
  %v3231 = vadd.f32 %v3228, 1e-05
  %v3232 = vadd.f32 %v3229, 1e-05
  %v3233 = vrsqrt.pop %v3230
  %v3234 = vmul.f32 %v3233, %v3230
  %v3235 = vmul.f32 %v3234, %v3233
  %v3236 = vmul.f32 0.5, %v3235
  %v3237 = vsub.f32 1.5, %v3236
  %v3238 = vmul.f32 %v3233, %v3237
  %vm3239 = vweird.f32 %v3230
  %vm3240 = vweird.f32 %v3233
  %vm3241 = vmor %vm3239, %vm3240
  %v3242 = vsel %vm3241, %v3233, %v3238
  %v3243 = vrsqrt.pop %v3231
  %v3244 = vmul.f32 %v3243, %v3231
  %v3245 = vmul.f32 %v3244, %v3243
  %v3246 = vmul.f32 0.5, %v3245
  %v3247 = vsub.f32 1.5, %v3246
  %v3248 = vmul.f32 %v3243, %v3247
  %vm3249 = vweird.f32 %v3231
  %vm3250 = vweird.f32 %v3243
  %vm3251 = vmor %vm3249, %vm3250
  %v3252 = vsel %vm3251, %v3243, %v3248
  %v3253 = vrsqrt.pop %v3232
  %v3254 = vmul.f32 %v3253, %v3232
  %v3255 = vmul.f32 %v3254, %v3253
  %v3256 = vmul.f32 0.5, %v3255
  %v3257 = vsub.f32 1.5, %v3256
  %v3258 = vmul.f32 %v3253, %v3257
  %vm3259 = vweird.f32 %v3232
  %vm3260 = vweird.f32 %v3253
  %vm3261 = vmor %vm3259, %vm3260
  %v3262 = vsel %vm3261, %v3253, %v3258
  %v3263 = vmul.f32 %v3212, %v3242
  %v3264 = vmul.f32 %v3213, %v3252
  %v3265 = vmul.f32 %v3214, %v3262
  %v3267 = vperm.slane %v3198, 0
  %v3269 = vmul.f32 %v3263, %v3267
  %v3270 = vmul.f32 %v3264, %v3267
  %v3271 = vmul.f32 %v3265, %v3267
  %v3273 = vperm.slane %v3199, 0
  %v3275 = vadd.f32 %v3269, %v3273
  %v3276 = vadd.f32 %v3270, %v3273
  %v3277 = vadd.f32 %v3271, %v3273
  %v3278 = vadd.f32 %v3275, %v2346
  %v3279 = vadd.f32 %v3276, %v2347
  %v3280 = vadd.f32 %v3277, %v2348
  %v3281 = vpack.c.bf16 %v3279, %v3278
  %v3282 = vpack.c.bf16 %v3280, %v3280
  %v3283 = vld [vmem:[%s1242] sm:$0xf]
  %v3284 = vld [vmem:[%s1242 + $0x4] sm:$0xf]
  %v3285 = vld [vmem:[%s1242 + $0x8] sm:$0xf]
  %v3286 = vld [vmem:[%s1242 + $0xc] sm:$0xf]
  %v3287 = vld [vmem:[%s1247] sm:$0x1]
  %v3289 = vperm.slane %v3287, 0
  %v3295 = vunpack.c.l.b16 %v3283
  %v3296 = vunpack.c.l.b16 %v3284
  %v3297 = vunpack.c.l.b16 %v3285
  %v3298 = vunpack.c.l.b16 %v3286
  %v3299 = vpack.c.b16 %v3296, %v3295
  %v3300 = vpack.c.b16 %v3298, %v3297
  %v3304 = vsel %vm285, %v3281, 0
  %v3307 = vsel %vm285, %v3282, 0
  %3309 = vmatpush.bf16.msra.mxu0 0
  %3310 = vmatpush.bf16.msra.mxu0 0
  %3311 = vmatpush.bf16.msra.mxu0 0
  %3312 = vmatpush.bf16.msra.mxu0 0
  %3313 = vmatpush.bf16.msra.mxu0 0
  %3314 = vmatpush.bf16.msra.mxu0 0
  %3315 = vmatpush.bf16.msra.mxu0 %v3300
  %3316 = vmatpush.bf16.msra.mxu0 %v3299
  %3317 = vmatmul.bf16.gmra.mxu0 %v3304
  %v3318 = vpop.f32.mrf.mxu0
  %v3319 = vadd.f32 %v3289, %v3318
  %v3320 = vpop.f32.mrf.mxu0
  %v3321 = vadd.f32 %v3289, %v3320
  %3322 = vmatmul.bf16.gmra.mxu0 %v3307
  %v3323 = vpop.f32.mrf.mxu0
  %v3324 = vadd.f32 %v3289, %v3323
  %v3325 = vpop.f32.mrf.mxu0
  %3326 = vdwg.mxu0
  %v3327 = vpack.c.bf16 %v3276, %v3275
  %v3328 = vpack.c.bf16 %v3277, %v3277
  %v3329 = vld [vmem:[%s1290] sm:$0xf]
  %v3330 = vld [vmem:[%s1290 + $0x4] sm:$0xf]
  %v3331 = vld [vmem:[%s1290 + $0x8] sm:$0xf]
  %v3332 = vld [vmem:[%s1290 + $0xc] sm:$0xf]
  %v3333 = vld [vmem:[%s1295] sm:$0x1]
  %v3335 = vperm.slane %v3333, 0
  %v3341 = vunpack.c.l.b16 %v3329
  %v3342 = vunpack.c.l.b16 %v3330
  %v3343 = vunpack.c.l.b16 %v3331
  %v3344 = vunpack.c.l.b16 %v3332
  %v3345 = vpack.c.b16 %v3342, %v3341
  %v3346 = vpack.c.b16 %v3344, %v3343
  %v3350 = vsel %vm285, %v3327, 0
  %v3353 = vsel %vm285, %v3328, 0
  %3355 = vmatpush.bf16.msra.mxu0 0
  %3356 = vmatpush.bf16.msra.mxu0 0
  %3357 = vmatpush.bf16.msra.mxu0 0
  %3358 = vmatpush.bf16.msra.mxu0 0
  %3359 = vmatpush.bf16.msra.mxu0 0
  %3360 = vmatpush.bf16.msra.mxu0 0
  %3361 = vmatpush.bf16.msra.mxu0 %v3346
  %3362 = vmatpush.bf16.msra.mxu0 %v3345
  %3363 = vmatmul.bf16.gmra.mxu0 %v3350
  %v3364 = vpop.f32.mrf.mxu0
  %v3365 = vadd.f32 %v3335, %v3364
  %v3366 = vpop.f32.mrf.mxu0
  %v3367 = vadd.f32 %v3335, %v3366
  %3368 = vmatmul.bf16.gmra.mxu0 %v3353
  %v3369 = vpop.f32.mrf.mxu0
  %v3370 = vadd.f32 %v3335, %v3369
  %v3371 = vpop.f32.mrf.mxu0
  %3372 = vdwg.mxu0
  %3376 = vrot.lane.b32.xlu0 %v3319, 96
  %v3377 = vpop.permute.xlu0 %3376
  %3378 = vrot.lane.b32.xlu0 %v3321, 96
  %v3379 = vpop.permute.xlu0 %3378
  %3380 = vrot.lane.b32.xlu0 %v3324, 96
  %v3381 = vpop.permute.xlu0 %3380
  %3385 = vxpose.xlu0.b32.start [1/16] %v3377, 128
  %3386 = vxpose.xlu0.b32.cont [2/16] %v3379, 128
  %3387 = vxpose.xlu0.b32.cont [3/16] %v3381, 128
  %3388 = vxpose.xlu0.b32.cont [4/16] 0.0, 128
  %3389 = vxpose.xlu0.b32.cont [5/16] 0.0, 128
  %3390 = vxpose.xlu0.b32.cont [6/16] 0.0, 128
  %3391 = vxpose.xlu0.b32.cont [7/16] 0.0, 128
  %3392 = vxpose.xlu0.b32.cont [8/16] 0.0, 128
  %3393 = vxpose.xlu0.b32.cont [9/16] 0.0, 128
  %3394 = vxpose.xlu0.b32.cont [10/16] 0.0, 128
  %3395 = vxpose.xlu0.b32.cont [11/16] 0.0, 128
  %3396 = vxpose.xlu0.b32.cont [12/16] 0.0, 128
  %3397 = vxpose.xlu0.b32.cont [13/16] 0.0, 128
  %3398 = vxpose.xlu0.b32.cont [14/16] 0.0, 128
  %3399 = vxpose.xlu0.b32.cont [15/16] 0.0, 128
  %3400 = vxpose.xlu0.b32.end [16/16] 0.0, 128
  %v3401 = vpop.trf.xlu0
  %v3402 = vpop.trf.xlu0
  %v3403 = vpop.trf.xlu0
  %v3404 = vpop.trf.xlu0
  %v3405 = vpop.trf.xlu0
  %v3406 = vpop.trf.xlu0
  %v3407 = vpop.trf.xlu0
  %v3408 = vpop.trf.xlu0
  %v3409 = vpop.trf.xlu0
  %v3410 = vpop.trf.xlu0
  %v3411 = vpop.trf.xlu0
  %v3412 = vpop.trf.xlu0
  %v3413 = vpop.trf.xlu0
  %v3414 = vpop.trf.xlu0
  %v3415 = vpop.trf.xlu0
  %v3416 = vpop.trf.xlu0
  %v3417 = vpack.c.bf16 %v3321, %v3319
  %v3418 = vpack.c.bf16 %v3324, %v3324
  %v3419 = vpack.c.bf16 %v3401, %v3401
  %v3421 = vsel %vm436, %v3417, 0
  %v3424 = vsel %vm436, %v3418, 0
  %v3427 = vsel %vm193, %v3419, 0
  %3429 = vmatpush.bf16.msra.mxu0 0
  %3430 = vmatpush.bf16.msra.mxu0 0
  %3431 = vmatpush.bf16.msra.mxu0 0
  %3432 = vmatpush.bf16.msra.mxu0 0
  %3433 = vmatpush.bf16.msra.mxu0 0
  %3434 = vmatpush.bf16.msra.mxu0 0
  %3435 = vmatpush.bf16.msra.mxu0 0
  %3436 = vmatpush.bf16.msra.mxu0 %v3427
  %3437 = vmatmul.bf16.gmra.mxu0 %v3421
  %v3438 = vpop.f32.mrf.mxu0
  %v3439 = vadd.f32 0.0, %v3438
  %v3440 = vpop.f32.mrf.mxu0
  %v3441 = vadd.f32 0.0, %v3440
  %3442 = vmatmul.bf16.gmra.mxu0 %v3424
  %v3443 = vpop.f32.mrf.mxu0
  %v3444 = vadd.f32 0.0, %v3443
  %v3445 = vpop.f32.mrf.mxu0
  %3446 = vdwg.mxu0
  %v3447 = vmul.f32 %v3439, 0.35355338
  %v3448 = vmul.f32 %v3441, 0.35355338
  %v3449 = vmul.f32 %v3444, 0.35355338
  %v3450 = vadd.f32 %v3447, %v2522
  %v3451 = vadd.f32 %v3448, %v2522
  %v3452 = vadd.f32 %v3449, %v2522
  %v3453 = vsel %vm473, %v3450, -inf
  %3454 = vmax.xlane.f32.xlu0 %v3453
  %v3455 = vpop.xlane.xlu0 %3454
  %v3456 = vsel %vm473, %v3451, -inf
  %3457 = vmax.xlane.f32.xlu0 %v3456
  %v3458 = vpop.xlane.xlu0 %3457
  %v3459 = vsel %vm480, %v3452, -inf
  %3460 = vmax.xlane.f32.xlu0 %v3459
  %v3461 = vpop.xlane.xlu0 %3460
  %v3462 = vsub.f32 %v3450, %v3455
  %v3463 = vsub.f32 %v3451, %v3458
  %v3464 = vsub.f32 %v3452, %v3461
  %v3465 = vmul.f32 %v3462, 1.442695
  %v3466 = vpow.pop %v3465
  %v3467 = vmul.f32 %v3463, 1.442695
  %v3468 = vpow.pop %v3467
  %v3469 = vmul.f32 %v3464, 1.442695
  %v3470 = vpow.pop %v3469
  %v3471 = vsel %vm473, %v3466, 0.0
  %3472 = vadd.xlane.f32.xlu0 %v3471
  %v3473 = vpop.xlane.xlu0 %3472
  %v3474 = vsel %vm473, %v3468, 0.0
  %3475 = vadd.xlane.f32.xlu0 %v3474
  %v3476 = vpop.xlane.xlu0 %3475
  %v3477 = vsel %vm480, %v3470, 0.0
  %3478 = vadd.xlane.f32.xlu0 %v3477
  %v3479 = vpop.xlane.xlu0 %3478
  %v3480 = vrcp.pop %v3473
  %v3481 = vrcp.pop %v3476
  %v3482 = vrcp.pop %v3479
  %v3483 = vmul.f32 %v3466, %v3480
  %v3484 = vmul.f32 %v3468, %v3481
  %v3485 = vmul.f32 %v3470, %v3482
  %v3486 = vpack.c.bf16 %v3484, %v3483
  %v3487 = vpack.c.bf16 %v3485, %v3485
  %v3488 = vpack.c.bf16 %v3367, %v3365
  %v3489 = vpack.c.bf16 %v3370, %v3370
  %v3491 = vsel %vm473, %v3486, 0
  %v3494 = vsel %vm473, %v3487, 0
  %v3497 = vand.u32 %v3489, %v519
  %3499 = vmatpush.bf16.msra.mxu0 0
  %3500 = vmatpush.bf16.msra.mxu0 0
  %3501 = vmatpush.bf16.msra.mxu0 0
  %3502 = vmatpush.bf16.msra.mxu0 0
  %3503 = vmatpush.bf16.msra.mxu0 0
  %3504 = vmatpush.bf16.msra.mxu0 0
  %3505 = vmatpush.bf16.msra.mxu0 %v3497
  %3506 = vmatpush.bf16.msra.mxu0 %v3488
  %3507 = vmatmul.bf16.gmra.mxu0 %v3491
  %v3508 = vpop.f32.mrf.mxu0
  %v3509 = vadd.f32 0.0, %v3508
  %v3510 = vpop.f32.mrf.mxu0
  %v3511 = vadd.f32 0.0, %v3510
  %3512 = vmatmul.bf16.gmra.mxu0 %v3494
  %v3513 = vpop.f32.mrf.mxu0
  %v3514 = vadd.f32 0.0, %v3513
  %v3515 = vpop.f32.mrf.mxu0
  %3516 = vdwg.mxu0
  %v3517 = vpack.c.bf16 %v3402, %v3402
  %3520 = vrot.lane.b32.xlu0 %v3417, 120
  %v3521 = vpop.permute.xlu0 %3520
  %3522 = vrot.lane.b32.xlu0 %v3418, 120
  %v3523 = vpop.permute.xlu0 %3522
  %v3525 = vsel %vm436, %v3521, 0
  %v3528 = vsel %vm436, %v3523, 0
  %v3531 = vsel %vm193, %v3517, 0
  %3533 = vmatpush.bf16.msra.mxu0 0
  %3534 = vmatpush.bf16.msra.mxu0 0
  %3535 = vmatpush.bf16.msra.mxu0 0
  %3536 = vmatpush.bf16.msra.mxu0 0
  %3537 = vmatpush.bf16.msra.mxu0 0
  %3538 = vmatpush.bf16.msra.mxu0 0
  %3539 = vmatpush.bf16.msra.mxu0 0
  %3540 = vmatpush.bf16.msra.mxu0 %v3531
  %3541 = vmatmul.bf16.gmra.mxu0 %v3525
  %v3542 = vpop.f32.mrf.mxu0
  %v3543 = vadd.f32 0.0, %v3542
  %v3544 = vpop.f32.mrf.mxu0
  %v3545 = vadd.f32 0.0, %v3544
  %3546 = vmatmul.bf16.gmra.mxu0 %v3528
  %v3547 = vpop.f32.mrf.mxu0
  %v3548 = vadd.f32 0.0, %v3547
  %v3549 = vpop.f32.mrf.mxu0
  %3550 = vdwg.mxu0
  %v3551 = vmul.f32 %v3543, 0.35355338
  %v3552 = vmul.f32 %v3545, 0.35355338
  %v3553 = vmul.f32 %v3548, 0.35355338
  %v3554 = vadd.f32 %v3551, %v2522
  %v3555 = vadd.f32 %v3552, %v2522
  %v3556 = vadd.f32 %v3553, %v2522
  %v3557 = vsel %vm473, %v3554, -inf
  %3558 = vmax.xlane.f32.xlu0 %v3557
  %v3559 = vpop.xlane.xlu0 %3558
  %v3560 = vsel %vm473, %v3555, -inf
  %3561 = vmax.xlane.f32.xlu0 %v3560
  %v3562 = vpop.xlane.xlu0 %3561
  %v3563 = vsel %vm480, %v3556, -inf
  %3564 = vmax.xlane.f32.xlu0 %v3563
  %v3565 = vpop.xlane.xlu0 %3564
  %v3566 = vsub.f32 %v3554, %v3559
  %v3567 = vsub.f32 %v3555, %v3562
  %v3568 = vsub.f32 %v3556, %v3565
  %v3569 = vmul.f32 %v3566, 1.442695
  %v3570 = vpow.pop %v3569
  %v3571 = vmul.f32 %v3567, 1.442695
  %v3572 = vpow.pop %v3571
  %v3573 = vmul.f32 %v3568, 1.442695
  %v3574 = vpow.pop %v3573
  %v3575 = vsel %vm473, %v3570, 0.0
  %3576 = vadd.xlane.f32.xlu0 %v3575
  %v3577 = vpop.xlane.xlu0 %3576
  %v3578 = vsel %vm473, %v3572, 0.0
  %3579 = vadd.xlane.f32.xlu0 %v3578
  %v3580 = vpop.xlane.xlu0 %3579
  %v3581 = vsel %vm480, %v3574, 0.0
  %3582 = vadd.xlane.f32.xlu0 %v3581
  %v3583 = vpop.xlane.xlu0 %3582
  %v3584 = vrcp.pop %v3577
  %v3585 = vrcp.pop %v3580
  %v3586 = vrcp.pop %v3583
  %v3587 = vmul.f32 %v3570, %v3584
  %v3588 = vmul.f32 %v3572, %v3585
  %v3589 = vmul.f32 %v3574, %v3586
  %v3590 = vpack.c.bf16 %v3588, %v3587
  %v3591 = vpack.c.bf16 %v3589, %v3589
  %3594 = vrot.lane.b32.xlu0 %v3488, 120
  %v3595 = vpop.permute.xlu0 %3594
  %3596 = vrot.lane.b32.xlu0 %v3489, 120
  %v3597 = vpop.permute.xlu0 %3596
  %v3600 = vsel %vm473, %v3590, 0
  %v3603 = vsel %vm473, %v3591, 0
  %v3606 = vand.u32 %v3597, %v519
  %3608 = vmatpush.bf16.msra.mxu0 0
  %3609 = vmatpush.bf16.msra.mxu0 0
  %3610 = vmatpush.bf16.msra.mxu0 0
  %3611 = vmatpush.bf16.msra.mxu0 0
  %3612 = vmatpush.bf16.msra.mxu0 0
  %3613 = vmatpush.bf16.msra.mxu0 0
  %3614 = vmatpush.bf16.msra.mxu0 %v3606
  %3615 = vmatpush.bf16.msra.mxu0 %v3595
  %3616 = vmatmul.bf16.gmra.mxu0 %v3600
  %v3617 = vpop.f32.mrf.mxu0
  %v3618 = vadd.f32 0.0, %v3617
  %v3619 = vpop.f32.mrf.mxu0
  %v3620 = vadd.f32 0.0, %v3619
  %3621 = vmatmul.bf16.gmra.mxu0 %v3603
  %v3622 = vpop.f32.mrf.mxu0
  %v3623 = vadd.f32 0.0, %v3622
  %v3624 = vpop.f32.mrf.mxu0
  %3625 = vdwg.mxu0
  %v3626 = vpack.c.bf16 %v3403, %v3403
  %3627 = vrot.lane.b32.xlu0 %v3417, 112
  %v3628 = vpop.permute.xlu0 %3627
  %3629 = vrot.lane.b32.xlu0 %v3418, 112
  %v3630 = vpop.permute.xlu0 %3629
  %v3632 = vsel %vm436, %v3628, 0
  %v3635 = vsel %vm436, %v3630, 0
  %v3638 = vsel %vm193, %v3626, 0
  %3640 = vmatpush.bf16.msra.mxu0 0
  %3641 = vmatpush.bf16.msra.mxu0 0
  %3642 = vmatpush.bf16.msra.mxu0 0
  %3643 = vmatpush.bf16.msra.mxu0 0
  %3644 = vmatpush.bf16.msra.mxu0 0
  %3645 = vmatpush.bf16.msra.mxu0 0
  %3646 = vmatpush.bf16.msra.mxu0 0
  %3647 = vmatpush.bf16.msra.mxu0 %v3638
  %3648 = vmatmul.bf16.gmra.mxu0 %v3632
  %v3649 = vpop.f32.mrf.mxu0
  %v3650 = vadd.f32 0.0, %v3649
  %v3651 = vpop.f32.mrf.mxu0
  %v3652 = vadd.f32 0.0, %v3651
  %3653 = vmatmul.bf16.gmra.mxu0 %v3635
  %v3654 = vpop.f32.mrf.mxu0
  %v3655 = vadd.f32 0.0, %v3654
  %v3656 = vpop.f32.mrf.mxu0
  %3657 = vdwg.mxu0
  %v3658 = vmul.f32 %v3650, 0.35355338
  %v3659 = vmul.f32 %v3652, 0.35355338
  %v3660 = vmul.f32 %v3655, 0.35355338
  %v3661 = vadd.f32 %v3658, %v2522
  %v3662 = vadd.f32 %v3659, %v2522
  %v3663 = vadd.f32 %v3660, %v2522
  %v3664 = vsel %vm473, %v3661, -inf
  %3665 = vmax.xlane.f32.xlu0 %v3664
  %v3666 = vpop.xlane.xlu0 %3665
  %v3667 = vsel %vm473, %v3662, -inf
  %3668 = vmax.xlane.f32.xlu0 %v3667
  %v3669 = vpop.xlane.xlu0 %3668
  %v3670 = vsel %vm480, %v3663, -inf
  %3671 = vmax.xlane.f32.xlu0 %v3670
  %v3672 = vpop.xlane.xlu0 %3671
  %v3673 = vsub.f32 %v3661, %v3666
  %v3674 = vsub.f32 %v3662, %v3669
  %v3675 = vsub.f32 %v3663, %v3672
  %v3676 = vmul.f32 %v3673, 1.442695
  %v3677 = vpow.pop %v3676
  %v3678 = vmul.f32 %v3674, 1.442695
  %v3679 = vpow.pop %v3678
  %v3680 = vmul.f32 %v3675, 1.442695
  %v3681 = vpow.pop %v3680
  %v3682 = vsel %vm473, %v3677, 0.0
  %3683 = vadd.xlane.f32.xlu0 %v3682
  %v3684 = vpop.xlane.xlu0 %3683
  %v3685 = vsel %vm473, %v3679, 0.0
  %3686 = vadd.xlane.f32.xlu0 %v3685
  %v3687 = vpop.xlane.xlu0 %3686
  %v3688 = vsel %vm480, %v3681, 0.0
  %3689 = vadd.xlane.f32.xlu0 %v3688
  %v3690 = vpop.xlane.xlu0 %3689
  %v3691 = vrcp.pop %v3684
  %v3692 = vrcp.pop %v3687
  %v3693 = vrcp.pop %v3690
  %v3694 = vmul.f32 %v3677, %v3691
  %v3695 = vmul.f32 %v3679, %v3692
  %v3696 = vmul.f32 %v3681, %v3693
  %v3697 = vpack.c.bf16 %v3695, %v3694
  %v3698 = vpack.c.bf16 %v3696, %v3696
  %3699 = vrot.lane.b32.xlu0 %v3488, 112
  %v3700 = vpop.permute.xlu0 %3699
  %3701 = vrot.lane.b32.xlu0 %v3489, 112
  %v3702 = vpop.permute.xlu0 %3701
  %v3705 = vsel %vm473, %v3697, 0
  %v3708 = vsel %vm473, %v3698, 0
  %v3711 = vand.u32 %v3702, %v519
  %3713 = vmatpush.bf16.msra.mxu0 0
  %3714 = vmatpush.bf16.msra.mxu0 0
  %3715 = vmatpush.bf16.msra.mxu0 0
  %3716 = vmatpush.bf16.msra.mxu0 0
  %3717 = vmatpush.bf16.msra.mxu0 0
  %3718 = vmatpush.bf16.msra.mxu0 0
  %3719 = vmatpush.bf16.msra.mxu0 %v3711
  %3720 = vmatpush.bf16.msra.mxu0 %v3700
  %3721 = vmatmul.bf16.gmra.mxu0 %v3705
  %v3722 = vpop.f32.mrf.mxu0
  %v3723 = vadd.f32 0.0, %v3722
  %v3724 = vpop.f32.mrf.mxu0
  %v3725 = vadd.f32 0.0, %v3724
  %3726 = vmatmul.bf16.gmra.mxu0 %v3708
  %v3727 = vpop.f32.mrf.mxu0
  %v3728 = vadd.f32 0.0, %v3727
  %v3729 = vpop.f32.mrf.mxu0
  %3730 = vdwg.mxu0
  %v3731 = vpack.c.bf16 %v3404, %v3404
  %3732 = vrot.lane.b32.xlu0 %v3417, 104
  %v3733 = vpop.permute.xlu0 %3732
  %3734 = vrot.lane.b32.xlu0 %v3418, 104
  %v3735 = vpop.permute.xlu0 %3734
  %v3737 = vsel %vm436, %v3733, 0
  %v3740 = vsel %vm436, %v3735, 0
  %v3743 = vsel %vm193, %v3731, 0
  %3745 = vmatpush.bf16.msra.mxu0 0
  %3746 = vmatpush.bf16.msra.mxu0 0
  %3747 = vmatpush.bf16.msra.mxu0 0
  %3748 = vmatpush.bf16.msra.mxu0 0
  %3749 = vmatpush.bf16.msra.mxu0 0
  %3750 = vmatpush.bf16.msra.mxu0 0
  %3751 = vmatpush.bf16.msra.mxu0 0
  %3752 = vmatpush.bf16.msra.mxu0 %v3743
  %3753 = vmatmul.bf16.gmra.mxu0 %v3737
  %v3754 = vpop.f32.mrf.mxu0
  %v3755 = vadd.f32 0.0, %v3754
  %v3756 = vpop.f32.mrf.mxu0
  %v3757 = vadd.f32 0.0, %v3756
  %3758 = vmatmul.bf16.gmra.mxu0 %v3740
  %v3759 = vpop.f32.mrf.mxu0
  %v3760 = vadd.f32 0.0, %v3759
  %v3761 = vpop.f32.mrf.mxu0
  %3762 = vdwg.mxu0
  %v3763 = vmul.f32 %v3755, 0.35355338
  %v3764 = vmul.f32 %v3757, 0.35355338
  %v3765 = vmul.f32 %v3760, 0.35355338
  %v3766 = vadd.f32 %v3763, %v2522
  %v3767 = vadd.f32 %v3764, %v2522
  %v3768 = vadd.f32 %v3765, %v2522
  %v3769 = vsel %vm473, %v3766, -inf
  %3770 = vmax.xlane.f32.xlu0 %v3769
  %v3771 = vpop.xlane.xlu0 %3770
  %v3772 = vsel %vm473, %v3767, -inf
  %3773 = vmax.xlane.f32.xlu0 %v3772
  %v3774 = vpop.xlane.xlu0 %3773
  %v3775 = vsel %vm480, %v3768, -inf
  %3776 = vmax.xlane.f32.xlu0 %v3775
  %v3777 = vpop.xlane.xlu0 %3776
  %v3778 = vsub.f32 %v3766, %v3771
  %v3779 = vsub.f32 %v3767, %v3774
  %v3780 = vsub.f32 %v3768, %v3777
  %v3781 = vmul.f32 %v3778, 1.442695
  %v3782 = vpow.pop %v3781
  %v3783 = vmul.f32 %v3779, 1.442695
  %v3784 = vpow.pop %v3783
  %v3785 = vmul.f32 %v3780, 1.442695
  %v3786 = vpow.pop %v3785
  %v3787 = vsel %vm473, %v3782, 0.0
  %3788 = vadd.xlane.f32.xlu0 %v3787
  %v3789 = vpop.xlane.xlu0 %3788
  %v3790 = vsel %vm473, %v3784, 0.0
  %3791 = vadd.xlane.f32.xlu0 %v3790
  %v3792 = vpop.xlane.xlu0 %3791
  %v3793 = vsel %vm480, %v3786, 0.0
  %3794 = vadd.xlane.f32.xlu0 %v3793
  %v3795 = vpop.xlane.xlu0 %3794
  %v3796 = vrcp.pop %v3789
  %v3797 = vrcp.pop %v3792
  %v3798 = vrcp.pop %v3795
  %v3799 = vmul.f32 %v3782, %v3796
  %v3800 = vmul.f32 %v3784, %v3797
  %v3801 = vmul.f32 %v3786, %v3798
  %v3802 = vpack.c.bf16 %v3800, %v3799
  %v3803 = vpack.c.bf16 %v3801, %v3801
  %3804 = vrot.lane.b32.xlu0 %v3488, 104
  %v3805 = vpop.permute.xlu0 %3804
  %3806 = vrot.lane.b32.xlu0 %v3489, 104
  %v3807 = vpop.permute.xlu0 %3806
  %v3810 = vsel %vm473, %v3802, 0
  %v3813 = vsel %vm473, %v3803, 0
  %v3816 = vand.u32 %v3807, %v519
  %3818 = vmatpush.bf16.msra.mxu0 0
  %3819 = vmatpush.bf16.msra.mxu0 0
  %3820 = vmatpush.bf16.msra.mxu0 0
  %3821 = vmatpush.bf16.msra.mxu0 0
  %3822 = vmatpush.bf16.msra.mxu0 0
  %3823 = vmatpush.bf16.msra.mxu0 0
  %3824 = vmatpush.bf16.msra.mxu0 %v3816
  %3825 = vmatpush.bf16.msra.mxu0 %v3805
  %3826 = vmatmul.bf16.gmra.mxu0 %v3810
  %v3827 = vpop.f32.mrf.mxu0
  %v3828 = vadd.f32 0.0, %v3827
  %v3829 = vpop.f32.mrf.mxu0
  %v3830 = vadd.f32 0.0, %v3829
  %3831 = vmatmul.bf16.gmra.mxu0 %v3813
  %v3832 = vpop.f32.mrf.mxu0
  %v3833 = vadd.f32 0.0, %v3832
  %v3834 = vpop.f32.mrf.mxu0
  %3835 = vdwg.mxu0
  %3839 = vrot.lane.b32.xlu0 %v3618, 8
  %v3840 = vpop.permute.xlu0 %3839
  %3841 = vrot.lane.b32.xlu0 %v3620, 8
  %v3842 = vpop.permute.xlu0 %3841
  %3843 = vrot.lane.b32.xlu0 %v3623, 8
  %v3844 = vpop.permute.xlu0 %3843
  %3851 = vrot.lane.b32.xlu0 %v3723, 16
  %v3852 = vpop.permute.xlu0 %3851
  %3853 = vrot.lane.b32.xlu0 %v3725, 16
  %v3854 = vpop.permute.xlu0 %3853
  %3855 = vrot.lane.b32.xlu0 %v3728, 16
  %v3856 = vpop.permute.xlu0 %3855
  %3863 = vrot.lane.b32.xlu0 %v3828, 24
  %v3864 = vpop.permute.xlu0 %3863
  %3865 = vrot.lane.b32.xlu0 %v3830, 24
  %v3866 = vpop.permute.xlu0 %3865
  %3867 = vrot.lane.b32.xlu0 %v3833, 24
  %v3868 = vpop.permute.xlu0 %3867
  %v3872 = vsel %vm436, %v3509, %v3840
  %v3873 = vsel %vm436, %v3511, %v3842
  %v3874 = vsel %vm436, %v3514, %v3844
  %v3875 = vsel %vm899, %v3872, %v3852
  %v3876 = vsel %vm899, %v3873, %v3854
  %v3877 = vsel %vm899, %v3874, %v3856
  %v3878 = vsel %vm129, %v3875, %v3864
  %v3879 = vsel %vm129, %v3876, %v3866
  %v3880 = vsel %vm129, %v3877, %v3868
  %v3881 = vpack.c.bf16 %v3879, %v3878
  %v3882 = vpack.c.bf16 %v3880, %v3880
  %v3883 = vld [vmem:[%s1846] sm:$0xf]
  %v3884 = vld [vmem:[%s1846 + $0x4] sm:$0xf]
  %v3885 = vld [vmem:[%s1846 + $0x8] sm:$0xf]
  %v3886 = vld [vmem:[%s1846 + $0xc] sm:$0xf]
  %v3887 = vld [vmem:[%s1851] sm:$0x1]
  %v3889 = vperm.slane %v3887, 0
  %v3895 = vunpack.c.l.b16 %v3883
  %v3896 = vunpack.c.l.b16 %v3884
  %v3897 = vunpack.c.l.b16 %v3885
  %v3898 = vunpack.c.l.b16 %v3886
  %v3899 = vpack.c.b16 %v3896, %v3895
  %v3900 = vpack.c.b16 %v3898, %v3897
  %v3904 = vsel %vm285, %v3881, 0
  %v3907 = vsel %vm285, %v3882, 0
  %3909 = vmatpush.bf16.msra.mxu0 0
  %3910 = vmatpush.bf16.msra.mxu0 0
  %3911 = vmatpush.bf16.msra.mxu0 0
  %3912 = vmatpush.bf16.msra.mxu0 0
  %3913 = vmatpush.bf16.msra.mxu0 0
  %3914 = vmatpush.bf16.msra.mxu0 0
  %3915 = vmatpush.bf16.msra.mxu0 %v3900
  %3916 = vmatpush.bf16.msra.mxu0 %v3899
  %3917 = vmatmul.bf16.gmra.mxu0 %v3904
  %v3918 = vpop.f32.mrf.mxu0
  %v3919 = vadd.f32 %v3889, %v3918
  %v3920 = vpop.f32.mrf.mxu0
  %v3921 = vadd.f32 %v3889, %v3920
  %3922 = vmatmul.bf16.gmra.mxu0 %v3907
  %v3923 = vpop.f32.mrf.mxu0
  %v3924 = vadd.f32 %v3889, %v3923
  %v3925 = vpop.f32.mrf.mxu0
  %3926 = vdwg.mxu0
  %v3927 = vadd.f32 %v3275, %v3919
  %v3928 = vadd.f32 %v3276, %v3921
  %v3929 = vadd.f32 %v3277, %v3924
  %v3930 = vld [vmem:[%s1895] sm:$0x1]
  %v3931 = vld [vmem:[%s1897] sm:$0x1]
  %v3932 = vsel %vm285, %v3927, 0.0
  %3933 = vadd.xlane.f32.xlu0 %v3932
  %v3934 = vpop.xlane.xlu0 %3933
  %v3935 = vsel %vm285, %v3928, 0.0
  %3936 = vadd.xlane.f32.xlu0 %v3935
  %v3937 = vpop.xlane.xlu0 %3936
  %v3938 = vsel %vm288, %v3929, 0.0
  %3939 = vadd.xlane.f32.xlu0 %v3938
  %v3940 = vpop.xlane.xlu0 %3939
  %v3941 = vmul.f32 %v3934, %v972
  %v3942 = vmul.f32 %v3937, %v972
  %v3943 = vmul.f32 %v3940, %v972
  %v3944 = vsub.f32 %v3927, %v3941
  %v3945 = vsub.f32 %v3928, %v3942
  %v3946 = vsub.f32 %v3929, %v3943
  %v3947 = vmul.f32 %v3944, %v3944
  %v3948 = vmul.f32 %v3945, %v3945
  %v3949 = vmul.f32 %v3946, %v3946
  %v3950 = vsel %vm285, %v3947, 0.0
  %3951 = vadd.xlane.f32.xlu0 %v3950
  %v3952 = vpop.xlane.xlu0 %3951
  %v3953 = vsel %vm285, %v3948, 0.0
  %3954 = vadd.xlane.f32.xlu0 %v3953
  %v3955 = vpop.xlane.xlu0 %3954
  %v3956 = vsel %vm288, %v3949, 0.0
  %3957 = vadd.xlane.f32.xlu0 %v3956
  %v3958 = vpop.xlane.xlu0 %3957
  %v3959 = vmul.f32 %v3952, %v972
  %v3960 = vmul.f32 %v3955, %v972
  %v3961 = vmul.f32 %v3958, %v972
  %v3962 = vadd.f32 %v3959, 1e-05
  %v3963 = vadd.f32 %v3960, 1e-05
  %v3964 = vadd.f32 %v3961, 1e-05
  %v3965 = vrsqrt.pop %v3962
  %v3966 = vmul.f32 %v3965, %v3962
  %v3967 = vmul.f32 %v3966, %v3965
  %v3968 = vmul.f32 0.5, %v3967
  %v3969 = vsub.f32 1.5, %v3968
  %v3970 = vmul.f32 %v3965, %v3969
  %vm3971 = vweird.f32 %v3962
  %vm3972 = vweird.f32 %v3965
  %vm3973 = vmor %vm3971, %vm3972
  %v3974 = vsel %vm3973, %v3965, %v3970
  %v3975 = vrsqrt.pop %v3963
  %v3976 = vmul.f32 %v3975, %v3963
  %v3977 = vmul.f32 %v3976, %v3975
  %v3978 = vmul.f32 0.5, %v3977
  %v3979 = vsub.f32 1.5, %v3978
  %v3980 = vmul.f32 %v3975, %v3979
  %vm3981 = vweird.f32 %v3963
  %vm3982 = vweird.f32 %v3975
  %vm3983 = vmor %vm3981, %vm3982
  %v3984 = vsel %vm3983, %v3975, %v3980
  %v3985 = vrsqrt.pop %v3964
  %v3986 = vmul.f32 %v3985, %v3964
  %v3987 = vmul.f32 %v3986, %v3985
  %v3988 = vmul.f32 0.5, %v3987
  %v3989 = vsub.f32 1.5, %v3988
  %v3990 = vmul.f32 %v3985, %v3989
  %vm3991 = vweird.f32 %v3964
  %vm3992 = vweird.f32 %v3985
  %vm3993 = vmor %vm3991, %vm3992
  %v3994 = vsel %vm3993, %v3985, %v3990
  %v3995 = vmul.f32 %v3944, %v3974
  %v3996 = vmul.f32 %v3945, %v3984
  %v3997 = vmul.f32 %v3946, %v3994
  %v3999 = vperm.slane %v3930, 0
  %v4001 = vmul.f32 %v3995, %v3999
  %v4002 = vmul.f32 %v3996, %v3999
  %v4003 = vmul.f32 %v3997, %v3999
  %v4005 = vperm.slane %v3931, 0
  %v4007 = vadd.f32 %v4001, %v4005
  %v4008 = vadd.f32 %v4002, %v4005
  %v4009 = vadd.f32 %v4003, %v4005
  %v4010 = vpack.c.bf16 %v4008, %v4007
  %v4011 = vpack.c.bf16 %v4009, %v4009
  %v4012 = vld [vmem:[%s1979] sm:$0xf]
  %v4013 = vld [vmem:[%s1979 + $0x4] sm:$0xf]
  %v4014 = vld [vmem:[%s1979 + $0x8] sm:$0xf]
  %v4015 = vld [vmem:[%s1979 + $0xc] sm:$0xf]
  %v4016 = vld [vmem:[%s1984] sm:$0x1]
  %v4018 = vperm.slane %v4016, 0
  %v4024 = vunpack.c.l.b16 %v4012
  %v4025 = vunpack.c.l.b16 %v4013
  %v4026 = vunpack.c.l.b16 %v4014
  %v4027 = vunpack.c.l.b16 %v4015
  %v4028 = vpack.c.b16 %v4025, %v4024
  %v4029 = vpack.c.b16 %v4027, %v4026
  %v4033 = vsel %vm285, %v4010, 0
  %v4036 = vsel %vm285, %v4011, 0
  %4038 = vmatpush.bf16.msra.mxu0 0
  %4039 = vmatpush.bf16.msra.mxu0 0
  %4040 = vmatpush.bf16.msra.mxu0 0
  %4041 = vmatpush.bf16.msra.mxu0 0
  %4042 = vmatpush.bf16.msra.mxu0 0
  %4043 = vmatpush.bf16.msra.mxu0 0
  %4044 = vmatpush.bf16.msra.mxu0 %v4029
  %4045 = vmatpush.bf16.msra.mxu0 %v4028
  %4046 = vmatmul.bf16.gmra.mxu0 %v4033
  %v4047 = vpop.f32.mrf.mxu0
  %v4048 = vadd.f32 %v4018, %v4047
  %v4049 = vpop.f32.mrf.mxu0
  %v4050 = vadd.f32 %v4018, %v4049
  %4051 = vmatmul.bf16.gmra.mxu0 %v4036
  %v4052 = vpop.f32.mrf.mxu0
  %v4053 = vadd.f32 %v4018, %v4052
  %v4054 = vpop.f32.mrf.mxu0
  %4055 = vdwg.mxu0
  %v4056 = vmax.f32 %v4048, 0.0
  %v4057 = vmax.f32 %v4050, 0.0
  %v4058 = vmax.f32 %v4053, 0.0
  %v4059 = vpack.c.bf16 %v4057, %v4056
  %v4060 = vpack.c.bf16 %v4058, %v4058
  %v4061 = vld [vmem:[%s2030] sm:$0xf]
  %v4062 = vld [vmem:[%s2030 + $0x4] sm:$0xf]
  %v4063 = vld [vmem:[%s2030 + $0x8] sm:$0xf]
  %v4064 = vld [vmem:[%s2030 + $0xc] sm:$0xf]
  %v4065 = vld [vmem:[%s2030 + $0x10] sm:$0xf]
  %v4066 = vld [vmem:[%s2030 + $0x14] sm:$0xf]
  %v4067 = vld [vmem:[%s2030 + $0x18] sm:$0xf]
  %v4068 = vld [vmem:[%s2030 + $0x1c] sm:$0xf]
  %v4069 = vld [vmem:[%s2039] sm:$0x1]
  %v4071 = vperm.slane %v4069, 0
  %v4081 = vunpack.c.l.b16 %v4061
  %v4082 = vunpack.c.l.b16 %v4062
  %v4083 = vunpack.c.l.b16 %v4063
  %v4084 = vunpack.c.l.b16 %v4064
  %v4085 = vunpack.c.l.b16 %v4065
  %v4086 = vunpack.c.l.b16 %v4066
  %v4087 = vunpack.c.l.b16 %v4067
  %v4088 = vunpack.c.l.b16 %v4068
  %v4089 = vpack.c.b16 %v4082, %v4081
  %v4090 = vpack.c.b16 %v4084, %v4083
  %v4091 = vpack.c.b16 %v4086, %v4085
  %v4092 = vpack.c.b16 %v4088, %v4087
  %v4098 = vsel %vm1129, %v4059, 0
  %v4101 = vsel %vm1129, %v4060, 0
  %4103 = vmatpush.bf16.msra.mxu0 0
  %4104 = vmatpush.bf16.msra.mxu0 0
  %4105 = vmatpush.bf16.msra.mxu0 0
  %4106 = vmatpush.bf16.msra.mxu0 0
  %4107 = vmatpush.bf16.msra.mxu0 %v4092
  %4108 = vmatpush.bf16.msra.mxu0 %v4091
  %4109 = vmatpush.bf16.msra.mxu0 %v4090
  %4110 = vmatpush.bf16.msra.mxu0 %v4089
  %4111 = vmatmul.bf16.gmra.mxu0 %v4098
  %v4112 = vpop.f32.mrf.mxu0
  %v4113 = vadd.f32 %v4071, %v4112
  %v4114 = vpop.f32.mrf.mxu0
  %v4115 = vadd.f32 %v4071, %v4114
  %4116 = vmatmul.bf16.gmra.mxu0 %v4101
  %v4117 = vpop.f32.mrf.mxu0
  %v4118 = vadd.f32 %v4071, %v4117
  %v4119 = vpop.f32.mrf.mxu0
  %4120 = vdwg.mxu0
  %v4121 = vadd.f32 %v4007, %v4113
  %v4122 = vadd.f32 %v4008, %v4115
  %v4123 = vadd.f32 %v4009, %v4118
  %v4124 = vld [vmem:[%s2095] sm:$0x1]
  %v4125 = vld [vmem:[%s2097] sm:$0x1]
  %v4126 = vsel %vm285, %v4121, 0.0
  %4127 = vadd.xlane.f32.xlu0 %v4126
  %v4128 = vpop.xlane.xlu0 %4127
  %v4129 = vsel %vm285, %v4122, 0.0
  %4130 = vadd.xlane.f32.xlu0 %v4129
  %v4131 = vpop.xlane.xlu0 %4130
  %v4132 = vsel %vm288, %v4123, 0.0
  %4133 = vadd.xlane.f32.xlu0 %v4132
  %v4134 = vpop.xlane.xlu0 %4133
  %v4135 = vmul.f32 %v4128, %v972
  %v4136 = vmul.f32 %v4131, %v972
  %v4137 = vmul.f32 %v4134, %v972
  %v4138 = vsub.f32 %v4121, %v4135
  %v4139 = vsub.f32 %v4122, %v4136
  %v4140 = vsub.f32 %v4123, %v4137
  %v4141 = vmul.f32 %v4138, %v4138
  %v4142 = vmul.f32 %v4139, %v4139
  %v4143 = vmul.f32 %v4140, %v4140
  %v4144 = vsel %vm285, %v4141, 0.0
  %4145 = vadd.xlane.f32.xlu0 %v4144
  %v4146 = vpop.xlane.xlu0 %4145
  %v4147 = vsel %vm285, %v4142, 0.0
  %4148 = vadd.xlane.f32.xlu0 %v4147
  %v4149 = vpop.xlane.xlu0 %4148
  %v4150 = vsel %vm288, %v4143, 0.0
  %4151 = vadd.xlane.f32.xlu0 %v4150
  %v4152 = vpop.xlane.xlu0 %4151
  %v4153 = vmul.f32 %v4146, %v972
  %v4154 = vmul.f32 %v4149, %v972
  %v4155 = vmul.f32 %v4152, %v972
  %v4156 = vadd.f32 %v4153, 1e-05
  %v4157 = vadd.f32 %v4154, 1e-05
  %v4158 = vadd.f32 %v4155, 1e-05
  %v4159 = vrsqrt.pop %v4156
  %v4160 = vmul.f32 %v4159, %v4156
  %v4161 = vmul.f32 %v4160, %v4159
  %v4162 = vmul.f32 0.5, %v4161
  %v4163 = vsub.f32 1.5, %v4162
  %v4164 = vmul.f32 %v4159, %v4163
  %vm4165 = vweird.f32 %v4156
  %vm4166 = vweird.f32 %v4159
  %vm4167 = vmor %vm4165, %vm4166
  %v4168 = vsel %vm4167, %v4159, %v4164
  %v4169 = vrsqrt.pop %v4157
  %v4170 = vmul.f32 %v4169, %v4157
  %v4171 = vmul.f32 %v4170, %v4169
  %v4172 = vmul.f32 0.5, %v4171
  %v4173 = vsub.f32 1.5, %v4172
  %v4174 = vmul.f32 %v4169, %v4173
  %vm4175 = vweird.f32 %v4157
  %vm4176 = vweird.f32 %v4169
  %vm4177 = vmor %vm4175, %vm4176
  %v4178 = vsel %vm4177, %v4169, %v4174
  %v4179 = vrsqrt.pop %v4158
  %v4180 = vmul.f32 %v4179, %v4158
  %v4181 = vmul.f32 %v4180, %v4179
  %v4182 = vmul.f32 0.5, %v4181
  %v4183 = vsub.f32 1.5, %v4182
  %v4184 = vmul.f32 %v4179, %v4183
  %vm4185 = vweird.f32 %v4158
  %vm4186 = vweird.f32 %v4179
  %vm4187 = vmor %vm4185, %vm4186
  %v4188 = vsel %vm4187, %v4179, %v4184
  %v4189 = vmul.f32 %v4138, %v4168
  %v4190 = vmul.f32 %v4139, %v4178
  %v4191 = vmul.f32 %v4140, %v4188
  %v4193 = vperm.slane %v4124, 0
  %v4195 = vmul.f32 %v4189, %v4193
  %v4196 = vmul.f32 %v4190, %v4193
  %v4197 = vmul.f32 %v4191, %v4193
  %v4199 = vperm.slane %v4125, 0
  %v4201 = vadd.f32 %v4195, %v4199
  %v4202 = vadd.f32 %v4196, %v4199
  %v4203 = vadd.f32 %v4197, %v4199
  %s4204 = scalar_lea.vmem %s23, 24
  %4205 = vst.msk [vmem:[%s4204] sm:$0xff] %vm285, %v4201
  %4206 = vst.msk [vmem:[%s4204 + $0x8] sm:$0xff] %vm285, %v4202
  %4207 = vst.msk [vmem:[%s4204 + $0x10] sm:$0x7] %vm288, %v4203
  // Predicated region
  $region94: #{tpu_custom_call.1} parent=0 // pred_check
    _
  $region95: #{tpu_custom_call.1} parent=0 // pred_check_branch
    %4209 = sbr.rel (0) target = $region97
  $region96: #{tpu_custom_call.1} parent=0 // pred_region
    _
  $region97: #{tpu_custom_call.1} parent=0 // pred_fallthru
    _
  // Predicated region
  $region98: #{tpu_custom_call.1} parent=0 // pred_check
    _
  $region99: #{tpu_custom_call.1} parent=0 // pred_check_branch
    %4211 = sbr.rel (0) target = $region101
  $region100: #{tpu_custom_call.1} parent=0 // pred_region
    _
  $region101: #{tpu_custom_call.1} parent=0 // pred_fallthru
    _
  // Predicated region
  $region102: #{tpu_custom_call.1} parent=0 // pred_check
    _
  $region103: #{tpu_custom_call.1} parent=0 // pred_check_branch
    %4213 = sbr.rel (0) target = $region105
  $region104: #{tpu_custom_call.1} parent=0 // pred_region
    _
  $region105: #{tpu_custom_call.1} parent=0 // pred_fallthru
    _
  // Predicated region
  $region106: #{tpu_custom_call.1} parent=0 // pred_check
    _
  $region107: #{tpu_custom_call.1} parent=0 // pred_check_branch
    %4215 = sbr.rel (0) target = $region109
  $region108: #{tpu_custom_call.1} parent=0 // pred_region
    _
  $region109: #{tpu_custom_call.1} parent=0 // pred_fallthru
    _

</llo_original>
